<compile_context>
chip_gen: v7x
topology: tpu7x:2x2x1
jax: 0.10.0
libtpu: 0.0.40
codegen_flags: <defaults>
</compile_context>

<pallas_src>
import functools

import jax
import jax.numpy as jnp
from jax import lax
from jax.experimental import pallas as pl
from jax.experimental.pallas import tpu as pltpu


def _rup(x, m):
    return (x + m - 1) // m * m


# ---------------------------------------------------------------------------
# Fused kernel: one grid step == one batch sample == whole residual block
# ---------------------------------------------------------------------------

def _spade_resblock_kernel(*refs, learned_shortcut, H, W, nh, dim_in, dim_out, eps):
    if learned_shortcut:
        (seg_ref, x_ref, mask_ref,
         sh_w, sh_b, gb0_w, gb0_b, gb1_w, gb1_b, gbs_w, gbs_b,
         c0_w, c0_b, c1_w, c1_b, cs_w,
         o_ref, xpf_ref, slab_ref) = refs
    else:
        (seg_ref, x_ref, mask_ref,
         sh_w, sh_b, gb0_w, gb0_b, gb1_w, gb1_b,
         c0_w, c0_b, c1_w, c1_b,
         o_ref, xpf_ref, slab_ref) = refs

    HW = H * W
    PAD = (xpf_ref.shape[-1] - HW) // 2        # lane padding (multiple of 128)

    # Scratch must be finite everywhere the zero-weight / zero-pad trick relies
    # on it; zero once per grid step (cheap: <0.5 MiB of stores).
    xpf_ref[...] = jnp.zeros_like(xpf_ref)
    slab_ref[...] = jnp.zeros_like(slab_ref)

    ok_m1 = mask_ref[0:1, :]                   # 1.0 where the dw=-1 tap is valid
    ok_p1 = mask_ref[1:2, :]                   # 1.0 where the dw=+1 tap is valid

    def conv3x3(x, w_ref, b_ref, relu):
        # x: (Cin, HW) f32 value; w_ref: (Cout, 9*rup8(Cin)); b_ref: (Cout, 1)
        cin = x.shape[0]
        cpad = _rup(cin, 8)
        # Stage x into the flat zero-padded image (lane-aligned store).
        xpf_ref[0:cin, PAD:PAD + HW] = x
        # Transposed im2col: slab[t*cpad + c, i] = x[c, i + dh*W + dw] (masked).
        t = 0
        for dh in (-1, 0, 1):
            for dw in (-1, 0, 1):
                d = dh * W + dw
                tap = xpf_ref[0:cpad, PAD + d:PAD + d + HW]
                if dw == -1:
                    tap = tap * ok_m1
                elif dw == 1:
                    tap = tap * ok_p1
                slab_ref[t * cpad:(t + 1) * cpad, :] = tap
                t += 1
        y = jnp.dot(w_ref[...], slab_ref[0:9 * cpad, :],
                    preferred_element_type=jnp.float32) + b_ref[...]
        return jnp.maximum(y, 0.0) if relu else y

    def spade(x, gamma, beta, relu):
        # param-free InstanceNorm2d over H*W, then SPADE modulation (+ ReLU).
        mean = jnp.mean(x, axis=1, keepdims=True)
        var = jnp.mean(jnp.square(x - mean), axis=1, keepdims=True)
        y = (x - mean) * lax.rsqrt(var + eps)
        y = y * (1.0 + gamma) + beta
        return jnp.maximum(y, 0.0) if relu else y

    seg = seg_ref[0].astype(jnp.float32)       # (dim_c, HW)
    x = x_ref[0].astype(jnp.float32)           # (dim_in, HW)

    gpad_in = _rup(dim_in, 8)
    gpad_out = _rup(dim_out, 8)

    # All SPADE "shared" 3x3+ReLU convs see the same segmap -> one matmul.
    actv_all = conv3x3(seg, sh_w, sh_b, relu=True)                # (n_heads*nh, HW)

    # Main branch: SPADE(norm_0) -> ReLU -> conv_0
    gb0 = conv3x3(actv_all[0:nh], gb0_w, gb0_b, relu=False)       # (2*gpad_in, HW)
    h0 = spade(x, gb0[0:dim_in], gb0[gpad_in:gpad_in + dim_in], relu=True)
    dx = conv3x3(h0, c0_w, c0_b, relu=False)                      # (dim_out, HW)

    # SPADE(norm_1) -> ReLU -> conv_1
    gb1 = conv3x3(actv_all[nh:2 * nh], gb1_w, gb1_b, relu=False)  # (2*gpad_out, HW)
    h1 = spade(dx, gb1[0:dim_out], gb1[gpad_out:gpad_out + dim_out], relu=True)
    dx = conv3x3(h1, c1_w, c1_b, relu=False)                      # (dim_out, HW)

    # Shortcut branch; residual add fused into the epilogue.
    if learned_shortcut:
        gbs = conv3x3(actv_all[2 * nh:3 * nh], gbs_w, gbs_b, relu=False)
        hs = spade(x, gbs[0:dim_in], gbs[gpad_in:gpad_in + dim_in], relu=False)
        x_s = jnp.dot(cs_w[...], hs, preferred_element_type=jnp.float32)
    else:
        x_s = x

    o_ref[0] = (x_s + dx).astype(o_ref.dtype)


# ---------------------------------------------------------------------------
# Wrapper: weight re-packing + single pallas_call (NCHW in, NCHW out)
# ---------------------------------------------------------------------------

def _conv_w_mat(w_hwio):
    """(3,3,Cin,Cout) HWIO -> (Cout, 9*rup8(Cin)) matching the kernel's slab."""
    kh, kw, ci, co = w_hwio.shape
    cp = _rup(ci, 8)
    w = jnp.zeros((kh * kw, cp, co), w_hwio.dtype)
    w = w.at[:, :ci, :].set(w_hwio.reshape(kh * kw, ci, co))
    return w.reshape(kh * kw * cp, co).T


def _b_col(b):
    return b.reshape(-1, 1)


def _nearest_resize_nchw(seg, H, W):
    # F.interpolate(mode='nearest'): src = floor(dst * in / out)
    _, _, h, w = seg.shape
    if (h, w) == (H, W):
        return seg
    ridx = (jnp.arange(H) * h // H).astype(jnp.int32)
    cidx = (jnp.arange(W) * w // W).astype(jnp.int32)
    return seg[:, :, ridx][:, :, :, cidx]


def spade_residual_block(x_nchw, seg_nchw, params, *, learned_shortcut):
    N, dim_in, H, W = x_nchw.shape
    dim_c = seg_nchw.shape[1]
    dim_out = params["conv0_w"].shape[-1]
    nh = params["norm_0"]["shared_w"].shape[-1]
    HW = H * W

    x = x_nchw.reshape(N, dim_in, HW)
    seg_r = _nearest_resize_nchw(seg_nchw, H, W).reshape(N, dim_c, HW)

    # Column-validity masks for the dw = -1 / +1 taps (shared by every conv).
    col = jnp.arange(HW, dtype=jnp.int32) % W
    masks = jnp.stack([(col != 0), (col != W - 1)]).astype(jnp.float32)  # (2, HW)

    heads = ["norm_0", "norm_1"] + (["norm_s"] if learned_shortcut else [])
    sh_w = jnp.concatenate([_conv_w_mat(params[h]["shared_w"]) for h in heads], 0)
    sh_b = jnp.concatenate([_b_col(params[h]["shared_b"]) for h in heads], 0)

    def gb_head(h, dim):
        gpad = _rup(dim, 8)
        gw, bw = _conv_w_mat(params[h]["gamma_w"]), _conv_w_mat(params[h]["beta_w"])
        K = gw.shape[1]
        w = jnp.zeros((2 * gpad, K), gw.dtype)
        w = w.at[0:dim].set(gw).at[gpad:gpad + dim].set(bw)
        b = jnp.zeros((2 * gpad, 1), gw.dtype)
        b = b.at[0:dim].set(_b_col(params[h]["gamma_b"]))
        b = b.at[gpad:gpad + dim].set(_b_col(params[h]["beta_b"]))
        return w, b

    gb0_w, gb0_b = gb_head("norm_0", dim_in)
    gb1_w, gb1_b = gb_head("norm_1", dim_out)

    weights = [sh_w, sh_b, gb0_w, gb0_b, gb1_w, gb1_b]
    if learned_shortcut:
        gbs_w, gbs_b = gb_head("norm_s", dim_in)
        weights += [gbs_w, gbs_b]
    weights += [_conv_w_mat(params["conv0_w"]), _b_col(params["conv0_b"]),
                _conv_w_mat(params["conv1_w"]), _b_col(params["conv1_b"])]
    if learned_shortcut:
        weights += [params["conv_s_w"].T]                     # (dim_out, dim_in)

    kernel = functools.partial(
        _spade_resblock_kernel, learned_shortcut=learned_shortcut,
        H=H, W=W, nh=nh, dim_in=dim_in, dim_out=dim_out, eps=1e-5)

    lane_pad = _rup(W + 1, 128)
    c_work = _rup(max(dim_c, dim_in, dim_out, nh), 8)
    k_max = 9 * max(_rup(c, 8) for c in (dim_c, dim_in, dim_out, nh))

    out = pl.pallas_call(
        kernel,
        out_shape=jax.ShapeDtypeStruct((N, dim_out, HW), x_nchw.dtype),
        grid=(N,),
        in_specs=[
            pl.BlockSpec((1, dim_c, HW), lambda n: (n, 0, 0)),
            pl.BlockSpec((1, dim_in, HW), lambda n: (n, 0, 0)),
            pl.BlockSpec((2, HW), lambda n: (0, 0)),
        ] + [pl.BlockSpec(w.shape, lambda n: (0, 0)) for w in weights],
        out_specs=pl.BlockSpec((1, dim_out, HW), lambda n: (n, 0, 0)),
        scratch_shapes=[
            pltpu.VMEM((c_work, lane_pad + HW + lane_pad), jnp.float32),  # flat pad img
            pltpu.VMEM((k_max, HW), jnp.float32),                         # im2col slab
        ],
        compiler_params=pltpu.CompilerParams(
            dimension_semantics=("parallel",)),     # v7x: batch across 2 TCs
    )(seg_r, x, masks, *weights)

    return out.reshape(N, dim_out, H, W)


# ---------------------------------------------------------------------------
# Parameters + pure-JAX reference (for correctness check)
# ---------------------------------------------------------------------------

def init_params(key, dim_in, dim_out, dim_c, nhidden):
    keys = iter(jax.random.split(key, 64))

    def w(shape, scale=0.08):
        return (scale * jax.random.normal(next(keys), shape)).astype(jnp.float32)

    def spade_params(norm_nc):
        return dict(
            shared_w=w((3, 3, dim_c, nhidden)), shared_b=w((nhidden,)),
            gamma_w=w((3, 3, nhidden, norm_nc)), gamma_b=w((norm_nc,)),
            beta_w=w((3, 3, nhidden, norm_nc)), beta_b=w((norm_nc,)),
        )

    return dict(
        conv0_w=w((3, 3, dim_in, dim_out)), conv0_b=w((dim_out,)),
        conv1_w=w((3, 3, dim_out, dim_out)), conv1_b=w((dim_out,)),
        conv_s_w=w((dim_in, dim_out)),                    # 1x1, bias=False
        norm_0=spade_params(dim_in),
        norm_1=spade_params(dim_out),
        norm_s=spade_params(dim_in),
    )


def _ref_conv3x3(x, w, b, relu=False):
    y = lax.conv_general_dilated(x, w, (1, 1), "SAME",
                                 dimension_numbers=("NHWC", "HWIO", "NHWC"))
    y = y + b.reshape(1, 1, 1, -1)
    return jnp.maximum(y, 0.0) if relu else y


def _ref_spade(x, seg, p, relu):
    actv = _ref_conv3x3(seg, p["shared_w"], p["shared_b"], relu=True)
    gamma = _ref_conv3x3(actv, p["gamma_w"], p["gamma_b"])
    beta = _ref_conv3x3(actv, p["beta_w"], p["beta_b"])
    mean = jnp.mean(x, axis=(1, 2), keepdims=True)
    var = jnp.mean(jnp.square(x - mean), axis=(1, 2), keepdims=True)
    xn = (x - mean) * lax.rsqrt(var + 1e-5)
    out = xn * (1.0 + gamma) + beta
    return jnp.maximum(out, 0.0) if relu else out


def _ref_block(x_nchw, seg_nchw, params, learned_shortcut):
    _, _, H, W = x_nchw.shape
    x = jnp.transpose(x_nchw, (0, 2, 3, 1))
    seg = jnp.transpose(_nearest_resize_nchw(seg_nchw, H, W), (0, 2, 3, 1))
    if learned_shortcut:
        x_s = jnp.einsum("nhwi,io->nhwo",
                         _ref_spade(x, seg, params["norm_s"], relu=False),
                         params["conv_s_w"])
    else:
        x_s = x
    dx = _ref_conv3x3(_ref_spade(x, seg, params["norm_0"], relu=True),
                      params["conv0_w"], params["conv0_b"])
    dx = _ref_conv3x3(_ref_spade(dx, seg, params["norm_1"], relu=True),
                      params["conv1_w"], params["conv1_b"])
    return jnp.transpose(x_s + dx, (0, 3, 1, 2))


# ---------------------------------------------------------------------------

if __name__ == "__main__":
    N, H, W = 2, 16, 16
    dim_in, dim_out, dim_c = 4, 8, 3      # dim_in != dim_out -> learned shortcut
    nhidden = 32                          # SPADE hidden width (small for demo)

    key = jax.random.PRNGKey(0)
    kx, kseg, kp = jax.random.split(key, 3)
    x = jax.random.normal(kx, (N, dim_in, H, W), dtype=jnp.float32)                # NCHW
    seg = jax.random.normal(kseg, (N, dim_c, H // 2, W // 2), dtype=jnp.float32)   # NCHW

    params = init_params(kp, dim_in, dim_out, dim_c, nhidden)

    out = jax.block_until_ready(
        spade_residual_block(x, seg, params, learned_shortcut=True))
    ref = jax.block_until_ready(_ref_block(x, seg, params, True))

    assert out.shape == (N, dim_out, H, W)
    err = float(jnp.max(jnp.abs(out - ref)))
    assert jnp.allclose(out, ref, atol=1e-3, rtol=1e-3), f"max abs err {err}"

    print("KERNEL_OK")
</pallas_src>

<mosaic_0001>
module attributes {stable_mosaic.version = 11 : i64} {
  func.func @_spade_resblock_kernel(%arg0: i32, %arg1: memref<1x3x256xf32, #tpu.memory_space<vmem>>, %arg2: memref<1x4x256xf32, #tpu.memory_space<vmem>>, %arg3: memref<2x256xf32, #tpu.memory_space<vmem>>, %arg4: memref<96x72xf32, #tpu.memory_space<vmem>>, %arg5: memref<96x1xf32, #tpu.memory_space<vmem>>, %arg6: memref<16x288xf32, #tpu.memory_space<vmem>>, %arg7: memref<16x1xf32, #tpu.memory_space<vmem>>, %arg8: memref<16x288xf32, #tpu.memory_space<vmem>>, %arg9: memref<16x1xf32, #tpu.memory_space<vmem>>, %arg10: memref<16x288xf32, #tpu.memory_space<vmem>>, %arg11: memref<16x1xf32, #tpu.memory_space<vmem>>, %arg12: memref<8x72xf32, #tpu.memory_space<vmem>>, %arg13: memref<8x1xf32, #tpu.memory_space<vmem>>, %arg14: memref<8x72xf32, #tpu.memory_space<vmem>>, %arg15: memref<8x1xf32, #tpu.memory_space<vmem>>, %arg16: memref<8x4xf32, #tpu.memory_space<vmem>>, %arg17: memref<1x8x256xf32, #tpu.memory_space<vmem>>, %arg18: memref<32x512xf32, #tpu.memory_space<vmem>>, %arg19: memref<288x256xf32, #tpu.memory_space<vmem>>) attributes {dimension_semantics = [#tpu.dimension_semantics<parallel>], iteration_bounds = array<i64: 2>, scalar_prefetch = 0 : i64, scratch_operands = 2 : i64, tpu.core_type = #tpu.core_type<tc>, window_params = [{transform_indices = @transform_0, window_bounds = array<i64: 1, 3, 256>}, {transform_indices = @transform_1, window_bounds = array<i64: 1, 4, 256>}, {pipeline_mode = #tpu.pipeline_mode<synchronous>, transform_indices = @transform_2, window_bounds = array<i64: 2, 256>}, {pipeline_mode = #tpu.pipeline_mode<synchronous>, transform_indices = @transform_3, window_bounds = array<i64: 96, 72>}, {pipeline_mode = #tpu.pipeline_mode<synchronous>, transform_indices = @transform_4, window_bounds = array<i64: 96, 1>}, {pipeline_mode = #tpu.pipeline_mode<synchronous>, transform_indices = @transform_5, window_bounds = array<i64: 16, 288>}, {pipeline_mode = #tpu.pipeline_mode<synchronous>, transform_indices = @transform_6, window_bounds = array<i64: 16, 1>}, {pipeline_mode = #tpu.pipeline_mode<synchronous>, transform_indices = @transform_7, window_bounds = array<i64: 16, 288>}, {pipeline_mode = #tpu.pipeline_mode<synchronous>, transform_indices = @transform_8, window_bounds = array<i64: 16, 1>}, {pipeline_mode = #tpu.pipeline_mode<synchronous>, transform_indices = @transform_9, window_bounds = array<i64: 16, 288>}, {pipeline_mode = #tpu.pipeline_mode<synchronous>, transform_indices = @transform_10, window_bounds = array<i64: 16, 1>}, {pipeline_mode = #tpu.pipeline_mode<synchronous>, transform_indices = @transform_11, window_bounds = array<i64: 8, 72>}, {pipeline_mode = #tpu.pipeline_mode<synchronous>, transform_indices = @transform_12, window_bounds = array<i64: 8, 1>}, {pipeline_mode = #tpu.pipeline_mode<synchronous>, transform_indices = @transform_13, window_bounds = array<i64: 8, 72>}, {pipeline_mode = #tpu.pipeline_mode<synchronous>, transform_indices = @transform_14, window_bounds = array<i64: 8, 1>}, {pipeline_mode = #tpu.pipeline_mode<synchronous>, transform_indices = @transform_15, window_bounds = array<i64: 8, 4>}, {transform_indices = @transform_16, window_bounds = array<i64: 1, 8, 256>}]} {
    %cst = arith.constant 0.000000e+00 : f32
    %0 = vector.broadcast %cst : f32 to vector<32x512xf32>
    %c0 = arith.constant 0 : index
    %c0_0 = arith.constant 0 : index
    %1 = vector.load %arg18[%c0, %c0_0] : memref<32x512xf32, #tpu.memory_space<vmem>>, vector<32x512xf32>
    tpu.vector_store %arg18[%c0, %c0_0], %0 {strides = array<i32>} : memref<32x512xf32, #tpu.memory_space<vmem>>, vector<32x512xf32>,
    %cst_1 = arith.constant 0.000000e+00 : f32
    %2 = vector.broadcast %cst_1 : f32 to vector<288x256xf32>
    %c0_2 = arith.constant 0 : index
    %c0_3 = arith.constant 0 : index
    %3 = vector.load %arg19[%c0_2, %c0_3] : memref<288x256xf32, #tpu.memory_space<vmem>>, vector<288x256xf32>
    tpu.vector_store %arg19[%c0_2, %c0_3], %2 {strides = array<i32>} : memref<288x256xf32, #tpu.memory_space<vmem>>, vector<288x256xf32>,
    %c0_4 = arith.constant 0 : index
    %c0_5 = arith.constant 0 : index
    %4 = vector.load %arg3[%c0_4, %c0_5] : memref<2x256xf32, #tpu.memory_space<vmem>>, vector<1x256xf32>
    %c1 = arith.constant 1 : index
    %c0_6 = arith.constant 0 : index
    %5 = vector.load %arg3[%c1, %c0_6] : memref<2x256xf32, #tpu.memory_space<vmem>>, vector<1x256xf32>
    %c0_7 = arith.constant 0 : index
    %c0_8 = arith.constant 0 : index
    %c0_9 = arith.constant 0 : index
    %6 = vector.load %arg1[%c0_7, %c0_8, %c0_9] : memref<1x3x256xf32, #tpu.memory_space<vmem>>, vector<1x3x256xf32>
    %7 = vector.shape_cast %6 : vector<1x3x256xf32> to vector<3x256xf32>
    %c0_10 = arith.constant 0 : index
    %c0_11 = arith.constant 0 : index
    %c0_12 = arith.constant 0 : index
    %8 = vector.load %arg2[%c0_10, %c0_11, %c0_12] : memref<1x4x256xf32, #tpu.memory_space<vmem>>, vector<1x4x256xf32>
    %9 = vector.shape_cast %8 : vector<1x4x256xf32> to vector<4x256xf32>
    %c0_13 = arith.constant 0 : index
    %c128 = arith.constant 128 : index
    %10 = vector.load %arg18[%c0_13, %c128] : memref<32x512xf32, #tpu.memory_space<vmem>>, vector<3x256xf32>
    tpu.vector_store %arg18[%c0_13, %c128], %7 {strides = array<i32>} : memref<32x512xf32, #tpu.memory_space<vmem>>, vector<3x256xf32>,
    %c0_14 = arith.constant 0 : index
    %c111 = arith.constant 111 : index
    %11 = vector.load %arg18[%c0_14, %c111] : memref<32x512xf32, #tpu.memory_space<vmem>>, vector<8x256xf32>
    %12 = vector.broadcast %4 : vector<1x256xf32> to vector<8x256xf32>
    %13 = arith.mulf %11, %12 : vector<8x256xf32>
    %c0_15 = arith.constant 0 : index
    %c0_16 = arith.constant 0 : index
    %14 = vector.load %arg19[%c0_15, %c0_16] : memref<288x256xf32, #tpu.memory_space<vmem>>, vector<8x256xf32>
    tpu.vector_store %arg19[%c0_15, %c0_16], %13 {strides = array<i32>} : memref<288x256xf32, #tpu.memory_space<vmem>>, vector<8x256xf32>,
    %c0_17 = arith.constant 0 : index
    %c112 = arith.constant 112 : index
    %15 = vector.load %arg18[%c0_17, %c112] : memref<32x512xf32, #tpu.memory_space<vmem>>, vector<8x256xf32>
    %c8 = arith.constant 8 : index
    %c0_18 = arith.constant 0 : index
    %16 = vector.load %arg19[%c8, %c0_18] : memref<288x256xf32, #tpu.memory_space<vmem>>, vector<8x256xf32>
    tpu.vector_store %arg19[%c8, %c0_18], %15 {strides = array<i32>} : memref<288x256xf32, #tpu.memory_space<vmem>>, vector<8x256xf32>,
    %c0_19 = arith.constant 0 : index
    %c113 = arith.constant 113 : index
    %17 = vector.load %arg18[%c0_19, %c113] : memref<32x512xf32, #tpu.memory_space<vmem>>, vector<8x256xf32>
    %18 = vector.broadcast %5 : vector<1x256xf32> to vector<8x256xf32>
    %19 = arith.mulf %17, %18 : vector<8x256xf32>
    %c16 = arith.constant 16 : index
    %c0_20 = arith.constant 0 : index
    %20 = vector.load %arg19[%c16, %c0_20] : memref<288x256xf32, #tpu.memory_space<vmem>>, vector<8x256xf32>
    tpu.vector_store %arg19[%c16, %c0_20], %19 {strides = array<i32>} : memref<288x256xf32, #tpu.memory_space<vmem>>, vector<8x256xf32>,
    %c0_21 = arith.constant 0 : index
    %c127 = arith.constant 127 : index
    %21 = vector.load %arg18[%c0_21, %c127] : memref<32x512xf32, #tpu.memory_space<vmem>>, vector<8x256xf32>
    %22 = vector.broadcast %4 : vector<1x256xf32> to vector<8x256xf32>
    %23 = arith.mulf %21, %22 : vector<8x256xf32>
    %c24 = arith.constant 24 : index
    %c0_22 = arith.constant 0 : index
    %24 = vector.load %arg19[%c24, %c0_22] : memref<288x256xf32, #tpu.memory_space<vmem>>, vector<8x256xf32>
    tpu.vector_store %arg19[%c24, %c0_22], %23 {strides = array<i32>} : memref<288x256xf32, #tpu.memory_space<vmem>>, vector<8x256xf32>,
    %c0_23 = arith.constant 0 : index
    %c128_24 = arith.constant 128 : index
    %25 = vector.load %arg18[%c0_23, %c128_24] : memref<32x512xf32, #tpu.memory_space<vmem>>, vector<8x256xf32>
    %c32 = arith.constant 32 : index
    %c0_25 = arith.constant 0 : index
    %26 = vector.load %arg19[%c32, %c0_25] : memref<288x256xf32, #tpu.memory_space<vmem>>, vector<8x256xf32>
    tpu.vector_store %arg19[%c32, %c0_25], %25 {strides = array<i32>} : memref<288x256xf32, #tpu.memory_space<vmem>>, vector<8x256xf32>,
    %c0_26 = arith.constant 0 : index
    %c129 = arith.constant 129 : index
    %27 = vector.load %arg18[%c0_26, %c129] : memref<32x512xf32, #tpu.memory_space<vmem>>, vector<8x256xf32>
    %28 = vector.broadcast %5 : vector<1x256xf32> to vector<8x256xf32>
    %29 = arith.mulf %27, %28 : vector<8x256xf32>
    %c40 = arith.constant 40 : index
    %c0_27 = arith.constant 0 : index
    %30 = vector.load %arg19[%c40, %c0_27] : memref<288x256xf32, #tpu.memory_space<vmem>>, vector<8x256xf32>
    tpu.vector_store %arg19[%c40, %c0_27], %29 {strides = array<i32>} : memref<288x256xf32, #tpu.memory_space<vmem>>, vector<8x256xf32>,
    %c0_28 = arith.constant 0 : index
    %c143 = arith.constant 143 : index
    %31 = vector.load %arg18[%c0_28, %c143] : memref<32x512xf32, #tpu.memory_space<vmem>>, vector<8x256xf32>
    %32 = vector.broadcast %4 : vector<1x256xf32> to vector<8x256xf32>
    %33 = arith.mulf %31, %32 : vector<8x256xf32>
    %c48 = arith.constant 48 : index
    %c0_29 = arith.constant 0 : index
    %34 = vector.load %arg19[%c48, %c0_29] : memref<288x256xf32, #tpu.memory_space<vmem>>, vector<8x256xf32>
    tpu.vector_store %arg19[%c48, %c0_29], %33 {strides = array<i32>} : memref<288x256xf32, #tpu.memory_space<vmem>>, vector<8x256xf32>,
    %c0_30 = arith.constant 0 : index
    %c144 = arith.constant 144 : index
    %35 = vector.load %arg18[%c0_30, %c144] : memref<32x512xf32, #tpu.memory_space<vmem>>, vector<8x256xf32>
    %c56 = arith.constant 56 : index
    %c0_31 = arith.constant 0 : index
    %36 = vector.load %arg19[%c56, %c0_31] : memref<288x256xf32, #tpu.memory_space<vmem>>, vector<8x256xf32>
    tpu.vector_store %arg19[%c56, %c0_31], %35 {strides = array<i32>} : memref<288x256xf32, #tpu.memory_space<vmem>>, vector<8x256xf32>,
    %c0_32 = arith.constant 0 : index
    %c145 = arith.constant 145 : index
    %37 = vector.load %arg18[%c0_32, %c145] : memref<32x512xf32, #tpu.memory_space<vmem>>, vector<8x256xf32>
    %38 = vector.broadcast %5 : vector<1x256xf32> to vector<8x256xf32>
    %39 = arith.mulf %37, %38 : vector<8x256xf32>
    %c64 = arith.constant 64 : index
    %c0_33 = arith.constant 0 : index
    %40 = vector.load %arg19[%c64, %c0_33] : memref<288x256xf32, #tpu.memory_space<vmem>>, vector<8x256xf32>
    tpu.vector_store %arg19[%c64, %c0_33], %39 {strides = array<i32>} : memref<288x256xf32, #tpu.memory_space<vmem>>, vector<8x256xf32>,
    %c0_34 = arith.constant 0 : index
    %c0_35 = arith.constant 0 : index
    %41 = vector.load %arg4[%c0_34, %c0_35] : memref<96x72xf32, #tpu.memory_space<vmem>>, vector<96x72xf32>
    %c0_36 = arith.constant 0 : index
    %c0_37 = arith.constant 0 : index
    %42 = vector.load %arg19[%c0_36, %c0_37] : memref<288x256xf32, #tpu.memory_space<vmem>>, vector<72x256xf32>
    %cst_38 = arith.constant dense<0.000000e+00> : vector<96x256xf32>
    %43 = tpu.matmul %41, %42, %cst_38 {dimension_numbers = #tpu.dot_dimension_numbers<[1], [0], [0], [1], [0, 0, 1, 1], [], []>} : vector<96x72xf32>, vector<72x256xf32>, vector<96x256xf32> -> vector<96x256xf32>
    %c0_39 = arith.constant 0 : index
    %c0_40 = arith.constant 0 : index
    %44 = vector.load %arg5[%c0_39, %c0_40] : memref<96x1xf32, #tpu.memory_space<vmem>>, vector<96x1xf32>
    %45 = vector.broadcast %44 : vector<96x1xf32> to vector<96x256xf32>
    %46 = arith.addf %43, %45 : vector<96x256xf32>
    %cst_41 = arith.constant 0.000000e+00 : f32
    %47 = vector.broadcast %cst_41 : f32 to vector<96x256xf32>
    %48 = arith.maximumf %46, %47 : vector<96x256xf32>
    %49 = vector.extract_strided_slice %48 {offsets = [0, 0], sizes = [32, 256], strides = [1, 1]} : vector<96x256xf32> to vector<32x256xf32>
    %c0_42 = arith.constant 0 : index
    %c128_43 = arith.constant 128 : index
    %50 = vector.load %arg18[%c0_42, %c128_43] : memref<32x512xf32, #tpu.memory_space<vmem>>, vector<32x256xf32>
    tpu.vector_store %arg18[%c0_42, %c128_43], %49 {strides = array<i32>} : memref<32x512xf32, #tpu.memory_space<vmem>>, vector<32x256xf32>,
    %c0_44 = arith.constant 0 : index
    %c111_45 = arith.constant 111 : index
    %51 = vector.load %arg18[%c0_44, %c111_45] : memref<32x512xf32, #tpu.memory_space<vmem>>, vector<32x256xf32>
    %52 = vector.broadcast %4 : vector<1x256xf32> to vector<32x256xf32>
    %53 = arith.mulf %51, %52 : vector<32x256xf32>
    %c0_46 = arith.constant 0 : index
    %c0_47 = arith.constant 0 : index
    %54 = vector.load %arg19[%c0_46, %c0_47] : memref<288x256xf32, #tpu.memory_space<vmem>>, vector<32x256xf32>
    tpu.vector_store %arg19[%c0_46, %c0_47], %53 {strides = array<i32>} : memref<288x256xf32, #tpu.memory_space<vmem>>, vector<32x256xf32>,
    %c0_48 = arith.constant 0 : index
    %c112_49 = arith.constant 112 : index
    %55 = vector.load %arg18[%c0_48, %c112_49] : memref<32x512xf32, #tpu.memory_space<vmem>>, vector<32x256xf32>
    %c32_50 = arith.constant 32 : index
    %c0_51 = arith.constant 0 : index
    %56 = vector.load %arg19[%c32_50, %c0_51] : memref<288x256xf32, #tpu.memory_space<vmem>>, vector<32x256xf32>
    tpu.vector_store %arg19[%c32_50, %c0_51], %55 {strides = array<i32>} : memref<288x256xf32, #tpu.memory_space<vmem>>, vector<32x256xf32>,
    %c0_52 = arith.constant 0 : index
    %c113_53 = arith.constant 113 : index
    %57 = vector.load %arg18[%c0_52, %c113_53] : memref<32x512xf32, #tpu.memory_space<vmem>>, vector<32x256xf32>
    %58 = vector.broadcast %5 : vector<1x256xf32> to vector<32x256xf32>
    %59 = arith.mulf %57, %58 : vector<32x256xf32>
    %c64_54 = arith.constant 64 : index
    %c0_55 = arith.constant 0 : index
    %60 = vector.load %arg19[%c64_54, %c0_55] : memref<288x256xf32, #tpu.memory_space<vmem>>, vector<32x256xf32>
    tpu.vector_store %arg19[%c64_54, %c0_55], %59 {strides = array<i32>} : memref<288x256xf32, #tpu.memory_space<vmem>>, vector<32x256xf32>,
    %c0_56 = arith.constant 0 : index
    %c127_57 = arith.constant 127 : index
    %61 = vector.load %arg18[%c0_56, %c127_57] : memref<32x512xf32, #tpu.memory_space<vmem>>, vector<32x256xf32>
    %62 = vector.broadcast %4 : vector<1x256xf32> to vector<32x256xf32>
    %63 = arith.mulf %61, %62 : vector<32x256xf32>
    %c96 = arith.constant 96 : index
    %c0_58 = arith.constant 0 : index
    %64 = vector.load %arg19[%c96, %c0_58] : memref<288x256xf32, #tpu.memory_space<vmem>>, vector<32x256xf32>
    tpu.vector_store %arg19[%c96, %c0_58], %63 {strides = array<i32>} : memref<288x256xf32, #tpu.memory_space<vmem>>, vector<32x256xf32>,
    %c0_59 = arith.constant 0 : index
    %c128_60 = arith.constant 128 : index
    %65 = vector.load %arg18[%c0_59, %c128_60] : memref<32x512xf32, #tpu.memory_space<vmem>>, vector<32x256xf32>
    %c128_61 = arith.constant 128 : index
    %c0_62 = arith.constant 0 : index
    %66 = vector.load %arg19[%c128_61, %c0_62] : memref<288x256xf32, #tpu.memory_space<vmem>>, vector<32x256xf32>
    tpu.vector_store %arg19[%c128_61, %c0_62], %65 {strides = array<i32>} : memref<288x256xf32, #tpu.memory_space<vmem>>, vector<32x256xf32>,
    %c0_63 = arith.constant 0 : index
    %c129_64 = arith.constant 129 : index
    %67 = vector.load %arg18[%c0_63, %c129_64] : memref<32x512xf32, #tpu.memory_space<vmem>>, vector<32x256xf32>
    %68 = vector.broadcast %5 : vector<1x256xf32> to vector<32x256xf32>
    %69 = arith.mulf %67, %68 : vector<32x256xf32>
    %c160 = arith.constant 160 : index
    %c0_65 = arith.constant 0 : index
    %70 = vector.load %arg19[%c160, %c0_65] : memref<288x256xf32, #tpu.memory_space<vmem>>, vector<32x256xf32>
    tpu.vector_store %arg19[%c160, %c0_65], %69 {strides = array<i32>} : memref<288x256xf32, #tpu.memory_space<vmem>>, vector<32x256xf32>,
    %c0_66 = arith.constant 0 : index
    %c143_67 = arith.constant 143 : index
    %71 = vector.load %arg18[%c0_66, %c143_67] : memref<32x512xf32, #tpu.memory_space<vmem>>, vector<32x256xf32>
    %72 = vector.broadcast %4 : vector<1x256xf32> to vector<32x256xf32>
    %73 = arith.mulf %71, %72 : vector<32x256xf32>
    %c192 = arith.constant 192 : index
    %c0_68 = arith.constant 0 : index
    %74 = vector.load %arg19[%c192, %c0_68] : memref<288x256xf32, #tpu.memory_space<vmem>>, vector<32x256xf32>
    tpu.vector_store %arg19[%c192, %c0_68], %73 {strides = array<i32>} : memref<288x256xf32, #tpu.memory_space<vmem>>, vector<32x256xf32>,
    %c0_69 = arith.constant 0 : index
    %c144_70 = arith.constant 144 : index
    %75 = vector.load %arg18[%c0_69, %c144_70] : memref<32x512xf32, #tpu.memory_space<vmem>>, vector<32x256xf32>
    %c224 = arith.constant 224 : index
    %c0_71 = arith.constant 0 : index
    %76 = vector.load %arg19[%c224, %c0_71] : memref<288x256xf32, #tpu.memory_space<vmem>>, vector<32x256xf32>
    tpu.vector_store %arg19[%c224, %c0_71], %75 {strides = array<i32>} : memref<288x256xf32, #tpu.memory_space<vmem>>, vector<32x256xf32>,
    %c0_72 = arith.constant 0 : index
    %c145_73 = arith.constant 145 : index
    %77 = vector.load %arg18[%c0_72, %c145_73] : memref<32x512xf32, #tpu.memory_space<vmem>>, vector<32x256xf32>
    %78 = vector.broadcast %5 : vector<1x256xf32> to vector<32x256xf32>
    %79 = arith.mulf %77, %78 : vector<32x256xf32>
    %c256 = arith.constant 256 : index
    %c0_74 = arith.constant 0 : index
    %80 = vector.load %arg19[%c256, %c0_74] : memref<288x256xf32, #tpu.memory_space<vmem>>, vector<32x256xf32>
    tpu.vector_store %arg19[%c256, %c0_74], %79 {strides = array<i32>} : memref<288x256xf32, #tpu.memory_space<vmem>>, vector<32x256xf32>,
    %c0_75 = arith.constant 0 : index
    %c0_76 = arith.constant 0 : index
    %81 = vector.load %arg6[%c0_75, %c0_76] : memref<16x288xf32, #tpu.memory_space<vmem>>, vector<16x288xf32>
    %c0_77 = arith.constant 0 : index
    %c0_78 = arith.constant 0 : index
    %82 = vector.load %arg19[%c0_77, %c0_78] : memref<288x256xf32, #tpu.memory_space<vmem>>, vector<288x256xf32>
    %cst_79 = arith.constant dense<0.000000e+00> : vector<16x256xf32>
    %83 = tpu.matmul %81, %82, %cst_79 {dimension_numbers = #tpu.dot_dimension_numbers<[1], [0], [0], [1], [0, 0, 1, 1], [], []>} : vector<16x288xf32>, vector<288x256xf32>, vector<16x256xf32> -> vector<16x256xf32>
    %c0_80 = arith.constant 0 : index
    %c0_81 = arith.constant 0 : index
    %84 = vector.load %arg7[%c0_80, %c0_81] : memref<16x1xf32, #tpu.memory_space<vmem>>, vector<16x1xf32>
    %85 = vector.broadcast %84 : vector<16x1xf32> to vector<16x256xf32>
    %86 = arith.addf %83, %85 : vector<16x256xf32>
    %87 = vector.extract_strided_slice %86 {offsets = [0, 0], sizes = [4, 256], strides = [1, 1]} : vector<16x256xf32> to vector<4x256xf32>
    %88 = vector.extract_strided_slice %86 {offsets = [8, 0], sizes = [4, 256], strides = [1, 1]} : vector<16x256xf32> to vector<4x256xf32>
    %cst_82 = arith.constant dense<0.000000e+00> : vector<4xf32>
    %89 = vector.multi_reduction <add>, %9, %cst_82 [1] : vector<4x256xf32> to vector<4xf32>
    %90 = vector.shape_cast %89 : vector<4xf32> to vector<4x1xf32>
    %cst_83 = arith.constant 2.560000e+02 : f32
    %91 = vector.broadcast %cst_83 : f32 to vector<4x1xf32>
    %92 = arith.divf %90, %91 : vector<4x1xf32>
    %93 = vector.broadcast %92 : vector<4x1xf32> to vector<4x256xf32>
    %94 = arith.subf %9, %93 : vector<4x256xf32>
    %95 = arith.mulf %94, %94 : vector<4x256xf32>
    %cst_84 = arith.constant dense<0.000000e+00> : vector<4xf32>
    %96 = vector.multi_reduction <add>, %95, %cst_84 [1] : vector<4x256xf32> to vector<4xf32>
    %97 = vector.shape_cast %96 : vector<4xf32> to vector<4x1xf32>
    %cst_85 = arith.constant 2.560000e+02 : f32
    %98 = vector.broadcast %cst_85 : f32 to vector<4x1xf32>
    %99 = arith.divf %97, %98 : vector<4x1xf32>
    %100 = vector.broadcast %92 : vector<4x1xf32> to vector<4x256xf32>
    %101 = arith.subf %9, %100 : vector<4x256xf32>
    %cst_86 = arith.constant 9.99999974E-6 : f32
    %102 = vector.broadcast %cst_86 : f32 to vector<4x1xf32>
    %103 = arith.addf %99, %102 : vector<4x1xf32>
    %104 = math.rsqrt %103 : vector<4x1xf32>
    %105 = vector.broadcast %104 : vector<4x1xf32> to vector<4x256xf32>
    %106 = arith.mulf %101, %105 : vector<4x256xf32>
    %cst_87 = arith.constant 1.000000e+00 : f32
    %107 = vector.broadcast %cst_87 : f32 to vector<4x256xf32>
    %108 = arith.addf %107, %87 : vector<4x256xf32>
    %109 = arith.mulf %106, %108 : vector<4x256xf32>
    %110 = arith.addf %109, %88 : vector<4x256xf32>
    %cst_88 = arith.constant 0.000000e+00 : f32
    %111 = vector.broadcast %cst_88 : f32 to vector<4x256xf32>
    %112 = arith.maximumf %110, %111 : vector<4x256xf32>
    %c0_89 = arith.constant 0 : index
    %c128_90 = arith.constant 128 : index
    %113 = vector.load %arg18[%c0_89, %c128_90] : memref<32x512xf32, #tpu.memory_space<vmem>>, vector<4x256xf32>
    tpu.vector_store %arg18[%c0_89, %c128_90], %112 {strides = array<i32>} : memref<32x512xf32, #tpu.memory_space<vmem>>, vector<4x256xf32>,
    %c0_91 = arith.constant 0 : index
    %c111_92 = arith.constant 111 : index
    %114 = vector.load %arg18[%c0_91, %c111_92] : memref<32x512xf32, #tpu.memory_space<vmem>>, vector<8x256xf32>
    %115 = vector.broadcast %4 : vector<1x256xf32> to vector<8x256xf32>
    %116 = arith.mulf %114, %115 : vector<8x256xf32>
    %c0_93 = arith.constant 0 : index
    %c0_94 = arith.constant 0 : index
    %117 = vector.load %arg19[%c0_93, %c0_94] : memref<288x256xf32, #tpu.memory_space<vmem>>, vector<8x256xf32>
    tpu.vector_store %arg19[%c0_93, %c0_94], %116 {strides = array<i32>} : memref<288x256xf32, #tpu.memory_space<vmem>>, vector<8x256xf32>,
    %c0_95 = arith.constant 0 : index
    %c112_96 = arith.constant 112 : index
    %118 = vector.load %arg18[%c0_95, %c112_96] : memref<32x512xf32, #tpu.memory_space<vmem>>, vector<8x256xf32>
    %c8_97 = arith.constant 8 : index
    %c0_98 = arith.constant 0 : index
    %119 = vector.load %arg19[%c8_97, %c0_98] : memref<288x256xf32, #tpu.memory_space<vmem>>, vector<8x256xf32>
    tpu.vector_store %arg19[%c8_97, %c0_98], %118 {strides = array<i32>} : memref<288x256xf32, #tpu.memory_space<vmem>>, vector<8x256xf32>,
    %c0_99 = arith.constant 0 : index
    %c113_100 = arith.constant 113 : index
    %120 = vector.load %arg18[%c0_99, %c113_100] : memref<32x512xf32, #tpu.memory_space<vmem>>, vector<8x256xf32>
    %121 = vector.broadcast %5 : vector<1x256xf32> to vector<8x256xf32>
    %122 = arith.mulf %120, %121 : vector<8x256xf32>
    %c16_101 = arith.constant 16 : index
    %c0_102 = arith.constant 0 : index
    %123 = vector.load %arg19[%c16_101, %c0_102] : memref<288x256xf32, #tpu.memory_space<vmem>>, vector<8x256xf32>
    tpu.vector_store %arg19[%c16_101, %c0_102], %122 {strides = array<i32>} : memref<288x256xf32, #tpu.memory_space<vmem>>, vector<8x256xf32>,
    %c0_103 = arith.constant 0 : index
    %c127_104 = arith.constant 127 : index
    %124 = vector.load %arg18[%c0_103, %c127_104] : memref<32x512xf32, #tpu.memory_space<vmem>>, vector<8x256xf32>
    %125 = vector.broadcast %4 : vector<1x256xf32> to vector<8x256xf32>
    %126 = arith.mulf %124, %125 : vector<8x256xf32>
    %c24_105 = arith.constant 24 : index
    %c0_106 = arith.constant 0 : index
    %127 = vector.load %arg19[%c24_105, %c0_106] : memref<288x256xf32, #tpu.memory_space<vmem>>, vector<8x256xf32>
    tpu.vector_store %arg19[%c24_105, %c0_106], %126 {strides = array<i32>} : memref<288x256xf32, #tpu.memory_space<vmem>>, vector<8x256xf32>,
    %c0_107 = arith.constant 0 : index
    %c128_108 = arith.constant 128 : index
    %128 = vector.load %arg18[%c0_107, %c128_108] : memref<32x512xf32, #tpu.memory_space<vmem>>, vector<8x256xf32>
    %c32_109 = arith.constant 32 : index
    %c0_110 = arith.constant 0 : index
    %129 = vector.load %arg19[%c32_109, %c0_110] : memref<288x256xf32, #tpu.memory_space<vmem>>, vector<8x256xf32>
    tpu.vector_store %arg19[%c32_109, %c0_110], %128 {strides = array<i32>} : memref<288x256xf32, #tpu.memory_space<vmem>>, vector<8x256xf32>,
    %c0_111 = arith.constant 0 : index
    %c129_112 = arith.constant 129 : index
    %130 = vector.load %arg18[%c0_111, %c129_112] : memref<32x512xf32, #tpu.memory_space<vmem>>, vector<8x256xf32>
    %131 = vector.broadcast %5 : vector<1x256xf32> to vector<8x256xf32>
    %132 = arith.mulf %130, %131 : vector<8x256xf32>
    %c40_113 = arith.constant 40 : index
    %c0_114 = arith.constant 0 : index
    %133 = vector.load %arg19[%c40_113, %c0_114] : memref<288x256xf32, #tpu.memory_space<vmem>>, vector<8x256xf32>
    tpu.vector_store %arg19[%c40_113, %c0_114], %132 {strides = array<i32>} : memref<288x256xf32, #tpu.memory_space<vmem>>, vector<8x256xf32>,
    %c0_115 = arith.constant 0 : index
    %c143_116 = arith.constant 143 : index
    %134 = vector.load %arg18[%c0_115, %c143_116] : memref<32x512xf32, #tpu.memory_space<vmem>>, vector<8x256xf32>
    %135 = vector.broadcast %4 : vector<1x256xf32> to vector<8x256xf32>
    %136 = arith.mulf %134, %135 : vector<8x256xf32>
    %c48_117 = arith.constant 48 : index
    %c0_118 = arith.constant 0 : index
    %137 = vector.load %arg19[%c48_117, %c0_118] : memref<288x256xf32, #tpu.memory_space<vmem>>, vector<8x256xf32>
    tpu.vector_store %arg19[%c48_117, %c0_118], %136 {strides = array<i32>} : memref<288x256xf32, #tpu.memory_space<vmem>>, vector<8x256xf32>,
    %c0_119 = arith.constant 0 : index
    %c144_120 = arith.constant 144 : index
    %138 = vector.load %arg18[%c0_119, %c144_120] : memref<32x512xf32, #tpu.memory_space<vmem>>, vector<8x256xf32>
    %c56_121 = arith.constant 56 : index
    %c0_122 = arith.constant 0 : index
    %139 = vector.load %arg19[%c56_121, %c0_122] : memref<288x256xf32, #tpu.memory_space<vmem>>, vector<8x256xf32>
    tpu.vector_store %arg19[%c56_121, %c0_122], %138 {strides = array<i32>} : memref<288x256xf32, #tpu.memory_space<vmem>>, vector<8x256xf32>,
    %c0_123 = arith.constant 0 : index
    %c145_124 = arith.constant 145 : index
    %140 = vector.load %arg18[%c0_123, %c145_124] : memref<32x512xf32, #tpu.memory_space<vmem>>, vector<8x256xf32>
    %141 = vector.broadcast %5 : vector<1x256xf32> to vector<8x256xf32>
    %142 = arith.mulf %140, %141 : vector<8x256xf32>
    %c64_125 = arith.constant 64 : index
    %c0_126 = arith.constant 0 : index
    %143 = vector.load %arg19[%c64_125, %c0_126] : memref<288x256xf32, #tpu.memory_space<vmem>>, vector<8x256xf32>
    tpu.vector_store %arg19[%c64_125, %c0_126], %142 {strides = array<i32>} : memref<288x256xf32, #tpu.memory_space<vmem>>, vector<8x256xf32>,
    %c0_127 = arith.constant 0 : index
    %c0_128 = arith.constant 0 : index
    %144 = vector.load %arg12[%c0_127, %c0_128] : memref<8x72xf32, #tpu.memory_space<vmem>>, vector<8x72xf32>
    %c0_129 = arith.constant 0 : index
    %c0_130 = arith.constant 0 : index
    %145 = vector.load %arg19[%c0_129, %c0_130] : memref<288x256xf32, #tpu.memory_space<vmem>>, vector<72x256xf32>
    %cst_131 = arith.constant dense<0.000000e+00> : vector<8x256xf32>
    %146 = tpu.matmul %144, %145, %cst_131 {dimension_numbers = #tpu.dot_dimension_numbers<[1], [0], [0], [1], [0, 0, 1, 1], [], []>} : vector<8x72xf32>, vector<72x256xf32>, vector<8x256xf32> -> vector<8x256xf32>
    %c0_132 = arith.constant 0 : index
    %c0_133 = arith.constant 0 : index
    %147 = vector.load %arg13[%c0_132, %c0_133] : memref<8x1xf32, #tpu.memory_space<vmem>>, vector<8x1xf32>
    %148 = vector.broadcast %147 : vector<8x1xf32> to vector<8x256xf32>
    %149 = arith.addf %146, %148 : vector<8x256xf32>
    %150 = vector.extract_strided_slice %48 {offsets = [32, 0], sizes = [32, 256], strides = [1, 1]} : vector<96x256xf32> to vector<32x256xf32>
    %c0_134 = arith.constant 0 : index
    %c128_135 = arith.constant 128 : index
    %151 = vector.load %arg18[%c0_134, %c128_135] : memref<32x512xf32, #tpu.memory_space<vmem>>, vector<32x256xf32>
    tpu.vector_store %arg18[%c0_134, %c128_135], %150 {strides = array<i32>} : memref<32x512xf32, #tpu.memory_space<vmem>>, vector<32x256xf32>,
    %c0_136 = arith.constant 0 : index
    %c111_137 = arith.constant 111 : index
    %152 = vector.load %arg18[%c0_136, %c111_137] : memref<32x512xf32, #tpu.memory_space<vmem>>, vector<32x256xf32>
    %153 = vector.broadcast %4 : vector<1x256xf32> to vector<32x256xf32>
    %154 = arith.mulf %152, %153 : vector<32x256xf32>
    %c0_138 = arith.constant 0 : index
    %c0_139 = arith.constant 0 : index
    %155 = vector.load %arg19[%c0_138, %c0_139] : memref<288x256xf32, #tpu.memory_space<vmem>>, vector<32x256xf32>
    tpu.vector_store %arg19[%c0_138, %c0_139], %154 {strides = array<i32>} : memref<288x256xf32, #tpu.memory_space<vmem>>, vector<32x256xf32>,
    %c0_140 = arith.constant 0 : index
    %c112_141 = arith.constant 112 : index
    %156 = vector.load %arg18[%c0_140, %c112_141] : memref<32x512xf32, #tpu.memory_space<vmem>>, vector<32x256xf32>
    %c32_142 = arith.constant 32 : index
    %c0_143 = arith.constant 0 : index
    %157 = vector.load %arg19[%c32_142, %c0_143] : memref<288x256xf32, #tpu.memory_space<vmem>>, vector<32x256xf32>
    tpu.vector_store %arg19[%c32_142, %c0_143], %156 {strides = array<i32>} : memref<288x256xf32, #tpu.memory_space<vmem>>, vector<32x256xf32>,
    %c0_144 = arith.constant 0 : index
    %c113_145 = arith.constant 113 : index
    %158 = vector.load %arg18[%c0_144, %c113_145] : memref<32x512xf32, #tpu.memory_space<vmem>>, vector<32x256xf32>
    %159 = vector.broadcast %5 : vector<1x256xf32> to vector<32x256xf32>
    %160 = arith.mulf %158, %159 : vector<32x256xf32>
    %c64_146 = arith.constant 64 : index
    %c0_147 = arith.constant 0 : index
    %161 = vector.load %arg19[%c64_146, %c0_147] : memref<288x256xf32, #tpu.memory_space<vmem>>, vector<32x256xf32>
    tpu.vector_store %arg19[%c64_146, %c0_147], %160 {strides = array<i32>} : memref<288x256xf32, #tpu.memory_space<vmem>>, vector<32x256xf32>,
    %c0_148 = arith.constant 0 : index
    %c127_149 = arith.constant 127 : index
    %162 = vector.load %arg18[%c0_148, %c127_149] : memref<32x512xf32, #tpu.memory_space<vmem>>, vector<32x256xf32>
    %163 = vector.broadcast %4 : vector<1x256xf32> to vector<32x256xf32>
    %164 = arith.mulf %162, %163 : vector<32x256xf32>
    %c96_150 = arith.constant 96 : index
    %c0_151 = arith.constant 0 : index
    %165 = vector.load %arg19[%c96_150, %c0_151] : memref<288x256xf32, #tpu.memory_space<vmem>>, vector<32x256xf32>
    tpu.vector_store %arg19[%c96_150, %c0_151], %164 {strides = array<i32>} : memref<288x256xf32, #tpu.memory_space<vmem>>, vector<32x256xf32>,
    %c0_152 = arith.constant 0 : index
    %c128_153 = arith.constant 128 : index
    %166 = vector.load %arg18[%c0_152, %c128_153] : memref<32x512xf32, #tpu.memory_space<vmem>>, vector<32x256xf32>
    %c128_154 = arith.constant 128 : index
    %c0_155 = arith.constant 0 : index
    %167 = vector.load %arg19[%c128_154, %c0_155] : memref<288x256xf32, #tpu.memory_space<vmem>>, vector<32x256xf32>
    tpu.vector_store %arg19[%c128_154, %c0_155], %166 {strides = array<i32>} : memref<288x256xf32, #tpu.memory_space<vmem>>, vector<32x256xf32>,
    %c0_156 = arith.constant 0 : index
    %c129_157 = arith.constant 129 : index
    %168 = vector.load %arg18[%c0_156, %c129_157] : memref<32x512xf32, #tpu.memory_space<vmem>>, vector<32x256xf32>
    %169 = vector.broadcast %5 : vector<1x256xf32> to vector<32x256xf32>
    %170 = arith.mulf %168, %169 : vector<32x256xf32>
    %c160_158 = arith.constant 160 : index
    %c0_159 = arith.constant 0 : index
    %171 = vector.load %arg19[%c160_158, %c0_159] : memref<288x256xf32, #tpu.memory_space<vmem>>, vector<32x256xf32>
    tpu.vector_store %arg19[%c160_158, %c0_159], %170 {strides = array<i32>} : memref<288x256xf32, #tpu.memory_space<vmem>>, vector<32x256xf32>,
    %c0_160 = arith.constant 0 : index
    %c143_161 = arith.constant 143 : index
    %172 = vector.load %arg18[%c0_160, %c143_161] : memref<32x512xf32, #tpu.memory_space<vmem>>, vector<32x256xf32>
    %173 = vector.broadcast %4 : vector<1x256xf32> to vector<32x256xf32>
    %174 = arith.mulf %172, %173 : vector<32x256xf32>
    %c192_162 = arith.constant 192 : index
    %c0_163 = arith.constant 0 : index
    %175 = vector.load %arg19[%c192_162, %c0_163] : memref<288x256xf32, #tpu.memory_space<vmem>>, vector<32x256xf32>
    tpu.vector_store %arg19[%c192_162, %c0_163], %174 {strides = array<i32>} : memref<288x256xf32, #tpu.memory_space<vmem>>, vector<32x256xf32>,
    %c0_164 = arith.constant 0 : index
    %c144_165 = arith.constant 144 : index
    %176 = vector.load %arg18[%c0_164, %c144_165] : memref<32x512xf32, #tpu.memory_space<vmem>>, vector<32x256xf32>
    %c224_166 = arith.constant 224 : index
    %c0_167 = arith.constant 0 : index
    %177 = vector.load %arg19[%c224_166, %c0_167] : memref<288x256xf32, #tpu.memory_space<vmem>>, vector<32x256xf32>
    tpu.vector_store %arg19[%c224_166, %c0_167], %176 {strides = array<i32>} : memref<288x256xf32, #tpu.memory_space<vmem>>, vector<32x256xf32>,
    %c0_168 = arith.constant 0 : index
    %c145_169 = arith.constant 145 : index
    %178 = vector.load %arg18[%c0_168, %c145_169] : memref<32x512xf32, #tpu.memory_space<vmem>>, vector<32x256xf32>
    %179 = vector.broadcast %5 : vector<1x256xf32> to vector<32x256xf32>
    %180 = arith.mulf %178, %179 : vector<32x256xf32>
    %c256_170 = arith.constant 256 : index
    %c0_171 = arith.constant 0 : index
    %181 = vector.load %arg19[%c256_170, %c0_171] : memref<288x256xf32, #tpu.memory_space<vmem>>, vector<32x256xf32>
    tpu.vector_store %arg19[%c256_170, %c0_171], %180 {strides = array<i32>} : memref<288x256xf32, #tpu.memory_space<vmem>>, vector<32x256xf32>,
    %c0_172 = arith.constant 0 : index
    %c0_173 = arith.constant 0 : index
    %182 = vector.load %arg8[%c0_172, %c0_173] : memref<16x288xf32, #tpu.memory_space<vmem>>, vector<16x288xf32>
    %c0_174 = arith.constant 0 : index
    %c0_175 = arith.constant 0 : index
    %183 = vector.load %arg19[%c0_174, %c0_175] : memref<288x256xf32, #tpu.memory_space<vmem>>, vector<288x256xf32>
    %cst_176 = arith.constant dense<0.000000e+00> : vector<16x256xf32>
    %184 = tpu.matmul %182, %183, %cst_176 {dimension_numbers = #tpu.dot_dimension_numbers<[1], [0], [0], [1], [0, 0, 1, 1], [], []>} : vector<16x288xf32>, vector<288x256xf32>, vector<16x256xf32> -> vector<16x256xf32>
    %c0_177 = arith.constant 0 : index
    %c0_178 = arith.constant 0 : index
    %185 = vector.load %arg9[%c0_177, %c0_178] : memref<16x1xf32, #tpu.memory_space<vmem>>, vector<16x1xf32>
    %186 = vector.broadcast %185 : vector<16x1xf32> to vector<16x256xf32>
    %187 = arith.addf %184, %186 : vector<16x256xf32>
    %188 = vector.extract_strided_slice %187 {offsets = [0, 0], sizes = [8, 256], strides = [1, 1]} : vector<16x256xf32> to vector<8x256xf32>
    %189 = vector.extract_strided_slice %187 {offsets = [8, 0], sizes = [8, 256], strides = [1, 1]} : vector<16x256xf32> to vector<8x256xf32>
    %cst_179 = arith.constant dense<0.000000e+00> : vector<8xf32>
    %190 = vector.multi_reduction <add>, %149, %cst_179 [1] : vector<8x256xf32> to vector<8xf32>
    %191 = vector.shape_cast %190 : vector<8xf32> to vector<8x1xf32>
    %cst_180 = arith.constant 2.560000e+02 : f32
    %192 = vector.broadcast %cst_180 : f32 to vector<8x1xf32>
    %193 = arith.divf %191, %192 : vector<8x1xf32>
    %194 = vector.broadcast %193 : vector<8x1xf32> to vector<8x256xf32>
    %195 = arith.subf %149, %194 : vector<8x256xf32>
    %196 = arith.mulf %195, %195 : vector<8x256xf32>
    %cst_181 = arith.constant dense<0.000000e+00> : vector<8xf32>
    %197 = vector.multi_reduction <add>, %196, %cst_181 [1] : vector<8x256xf32> to vector<8xf32>
    %198 = vector.shape_cast %197 : vector<8xf32> to vector<8x1xf32>
    %cst_182 = arith.constant 2.560000e+02 : f32
    %199 = vector.broadcast %cst_182 : f32 to vector<8x1xf32>
    %200 = arith.divf %198, %199 : vector<8x1xf32>
    %201 = vector.broadcast %193 : vector<8x1xf32> to vector<8x256xf32>
    %202 = arith.subf %149, %201 : vector<8x256xf32>
    %cst_183 = arith.constant 9.99999974E-6 : f32
    %203 = vector.broadcast %cst_183 : f32 to vector<8x1xf32>
    %204 = arith.addf %200, %203 : vector<8x1xf32>
    %205 = math.rsqrt %204 : vector<8x1xf32>
    %206 = vector.broadcast %205 : vector<8x1xf32> to vector<8x256xf32>
    %207 = arith.mulf %202, %206 : vector<8x256xf32>
    %cst_184 = arith.constant 1.000000e+00 : f32
    %208 = vector.broadcast %cst_184 : f32 to vector<8x256xf32>
    %209 = arith.addf %208, %188 : vector<8x256xf32>
    %210 = arith.mulf %207, %209 : vector<8x256xf32>
    %211 = arith.addf %210, %189 : vector<8x256xf32>
    %cst_185 = arith.constant 0.000000e+00 : f32
    %212 = vector.broadcast %cst_185 : f32 to vector<8x256xf32>
    %213 = arith.maximumf %211, %212 : vector<8x256xf32>
    %c0_186 = arith.constant 0 : index
    %c128_187 = arith.constant 128 : index
    %214 = vector.load %arg18[%c0_186, %c128_187] : memref<32x512xf32, #tpu.memory_space<vmem>>, vector<8x256xf32>
    tpu.vector_store %arg18[%c0_186, %c128_187], %213 {strides = array<i32>} : memref<32x512xf32, #tpu.memory_space<vmem>>, vector<8x256xf32>,
    %c0_188 = arith.constant 0 : index
    %c111_189 = arith.constant 111 : index
    %215 = vector.load %arg18[%c0_188, %c111_189] : memref<32x512xf32, #tpu.memory_space<vmem>>, vector<8x256xf32>
    %216 = vector.broadcast %4 : vector<1x256xf32> to vector<8x256xf32>
    %217 = arith.mulf %215, %216 : vector<8x256xf32>
    %c0_190 = arith.constant 0 : index
    %c0_191 = arith.constant 0 : index
    %218 = vector.load %arg19[%c0_190, %c0_191] : memref<288x256xf32, #tpu.memory_space<vmem>>, vector<8x256xf32>
    tpu.vector_store %arg19[%c0_190, %c0_191], %217 {strides = array<i32>} : memref<288x256xf32, #tpu.memory_space<vmem>>, vector<8x256xf32>,
    %c0_192 = arith.constant 0 : index
    %c112_193 = arith.constant 112 : index
    %219 = vector.load %arg18[%c0_192, %c112_193] : memref<32x512xf32, #tpu.memory_space<vmem>>, vector<8x256xf32>
    %c8_194 = arith.constant 8 : index
    %c0_195 = arith.constant 0 : index
    %220 = vector.load %arg19[%c8_194, %c0_195] : memref<288x256xf32, #tpu.memory_space<vmem>>, vector<8x256xf32>
    tpu.vector_store %arg19[%c8_194, %c0_195], %219 {strides = array<i32>} : memref<288x256xf32, #tpu.memory_space<vmem>>, vector<8x256xf32>,
    %c0_196 = arith.constant 0 : index
    %c113_197 = arith.constant 113 : index
    %221 = vector.load %arg18[%c0_196, %c113_197] : memref<32x512xf32, #tpu.memory_space<vmem>>, vector<8x256xf32>
    %222 = vector.broadcast %5 : vector<1x256xf32> to vector<8x256xf32>
    %223 = arith.mulf %221, %222 : vector<8x256xf32>
    %c16_198 = arith.constant 16 : index
    %c0_199 = arith.constant 0 : index
    %224 = vector.load %arg19[%c16_198, %c0_199] : memref<288x256xf32, #tpu.memory_space<vmem>>, vector<8x256xf32>
    tpu.vector_store %arg19[%c16_198, %c0_199], %223 {strides = array<i32>} : memref<288x256xf32, #tpu.memory_space<vmem>>, vector<8x256xf32>,
    %c0_200 = arith.constant 0 : index
    %c127_201 = arith.constant 127 : index
    %225 = vector.load %arg18[%c0_200, %c127_201] : memref<32x512xf32, #tpu.memory_space<vmem>>, vector<8x256xf32>
    %226 = vector.broadcast %4 : vector<1x256xf32> to vector<8x256xf32>
    %227 = arith.mulf %225, %226 : vector<8x256xf32>
    %c24_202 = arith.constant 24 : index
    %c0_203 = arith.constant 0 : index
    %228 = vector.load %arg19[%c24_202, %c0_203] : memref<288x256xf32, #tpu.memory_space<vmem>>, vector<8x256xf32>
    tpu.vector_store %arg19[%c24_202, %c0_203], %227 {strides = array<i32>} : memref<288x256xf32, #tpu.memory_space<vmem>>, vector<8x256xf32>,
    %c0_204 = arith.constant 0 : index
    %c128_205 = arith.constant 128 : index
    %229 = vector.load %arg18[%c0_204, %c128_205] : memref<32x512xf32, #tpu.memory_space<vmem>>, vector<8x256xf32>
    %c32_206 = arith.constant 32 : index
    %c0_207 = arith.constant 0 : index
    %230 = vector.load %arg19[%c32_206, %c0_207] : memref<288x256xf32, #tpu.memory_space<vmem>>, vector<8x256xf32>
    tpu.vector_store %arg19[%c32_206, %c0_207], %229 {strides = array<i32>} : memref<288x256xf32, #tpu.memory_space<vmem>>, vector<8x256xf32>,
    %c0_208 = arith.constant 0 : index
    %c129_209 = arith.constant 129 : index
    %231 = vector.load %arg18[%c0_208, %c129_209] : memref<32x512xf32, #tpu.memory_space<vmem>>, vector<8x256xf32>
    %232 = vector.broadcast %5 : vector<1x256xf32> to vector<8x256xf32>
    %233 = arith.mulf %231, %232 : vector<8x256xf32>
    %c40_210 = arith.constant 40 : index
    %c0_211 = arith.constant 0 : index
    %234 = vector.load %arg19[%c40_210, %c0_211] : memref<288x256xf32, #tpu.memory_space<vmem>>, vector<8x256xf32>
    tpu.vector_store %arg19[%c40_210, %c0_211], %233 {strides = array<i32>} : memref<288x256xf32, #tpu.memory_space<vmem>>, vector<8x256xf32>,
    %c0_212 = arith.constant 0 : index
    %c143_213 = arith.constant 143 : index
    %235 = vector.load %arg18[%c0_212, %c143_213] : memref<32x512xf32, #tpu.memory_space<vmem>>, vector<8x256xf32>
    %236 = vector.broadcast %4 : vector<1x256xf32> to vector<8x256xf32>
    %237 = arith.mulf %235, %236 : vector<8x256xf32>
    %c48_214 = arith.constant 48 : index
    %c0_215 = arith.constant 0 : index
    %238 = vector.load %arg19[%c48_214, %c0_215] : memref<288x256xf32, #tpu.memory_space<vmem>>, vector<8x256xf32>
    tpu.vector_store %arg19[%c48_214, %c0_215], %237 {strides = array<i32>} : memref<288x256xf32, #tpu.memory_space<vmem>>, vector<8x256xf32>,
    %c0_216 = arith.constant 0 : index
    %c144_217 = arith.constant 144 : index
    %239 = vector.load %arg18[%c0_216, %c144_217] : memref<32x512xf32, #tpu.memory_space<vmem>>, vector<8x256xf32>
    %c56_218 = arith.constant 56 : index
    %c0_219 = arith.constant 0 : index
    %240 = vector.load %arg19[%c56_218, %c0_219] : memref<288x256xf32, #tpu.memory_space<vmem>>, vector<8x256xf32>
    tpu.vector_store %arg19[%c56_218, %c0_219], %239 {strides = array<i32>} : memref<288x256xf32, #tpu.memory_space<vmem>>, vector<8x256xf32>,
    %c0_220 = arith.constant 0 : index
    %c145_221 = arith.constant 145 : index
    %241 = vector.load %arg18[%c0_220, %c145_221] : memref<32x512xf32, #tpu.memory_space<vmem>>, vector<8x256xf32>
    %242 = vector.broadcast %5 : vector<1x256xf32> to vector<8x256xf32>
    %243 = arith.mulf %241, %242 : vector<8x256xf32>
    %c64_222 = arith.constant 64 : index
    %c0_223 = arith.constant 0 : index
    %244 = vector.load %arg19[%c64_222, %c0_223] : memref<288x256xf32, #tpu.memory_space<vmem>>, vector<8x256xf32>
    tpu.vector_store %arg19[%c64_222, %c0_223], %243 {strides = array<i32>} : memref<288x256xf32, #tpu.memory_space<vmem>>, vector<8x256xf32>,
    %c0_224 = arith.constant 0 : index
    %c0_225 = arith.constant 0 : index
    %245 = vector.load %arg14[%c0_224, %c0_225] : memref<8x72xf32, #tpu.memory_space<vmem>>, vector<8x72xf32>
    %c0_226 = arith.constant 0 : index
    %c0_227 = arith.constant 0 : index
    %246 = vector.load %arg19[%c0_226, %c0_227] : memref<288x256xf32, #tpu.memory_space<vmem>>, vector<72x256xf32>
    %cst_228 = arith.constant dense<0.000000e+00> : vector<8x256xf32>
    %247 = tpu.matmul %245, %246, %cst_228 {dimension_numbers = #tpu.dot_dimension_numbers<[1], [0], [0], [1], [0, 0, 1, 1], [], []>} : vector<8x72xf32>, vector<72x256xf32>, vector<8x256xf32> -> vector<8x256xf32>
    %c0_229 = arith.constant 0 : index
    %c0_230 = arith.constant 0 : index
    %248 = vector.load %arg15[%c0_229, %c0_230] : memref<8x1xf32, #tpu.memory_space<vmem>>, vector<8x1xf32>
    %249 = vector.broadcast %248 : vector<8x1xf32> to vector<8x256xf32>
    %250 = arith.addf %247, %249 : vector<8x256xf32>
    %251 = vector.extract_strided_slice %48 {offsets = [64, 0], sizes = [32, 256], strides = [1, 1]} : vector<96x256xf32> to vector<32x256xf32>
    %c0_231 = arith.constant 0 : index
    %c128_232 = arith.constant 128 : index
    %252 = vector.load %arg18[%c0_231, %c128_232] : memref<32x512xf32, #tpu.memory_space<vmem>>, vector<32x256xf32>
    tpu.vector_store %arg18[%c0_231, %c128_232], %251 {strides = array<i32>} : memref<32x512xf32, #tpu.memory_space<vmem>>, vector<32x256xf32>,
    %c0_233 = arith.constant 0 : index
    %c111_234 = arith.constant 111 : index
    %253 = vector.load %arg18[%c0_233, %c111_234] : memref<32x512xf32, #tpu.memory_space<vmem>>, vector<32x256xf32>
    %254 = vector.broadcast %4 : vector<1x256xf32> to vector<32x256xf32>
    %255 = arith.mulf %253, %254 : vector<32x256xf32>
    %c0_235 = arith.constant 0 : index
    %c0_236 = arith.constant 0 : index
    %256 = vector.load %arg19[%c0_235, %c0_236] : memref<288x256xf32, #tpu.memory_space<vmem>>, vector<32x256xf32>
    tpu.vector_store %arg19[%c0_235, %c0_236], %255 {strides = array<i32>} : memref<288x256xf32, #tpu.memory_space<vmem>>, vector<32x256xf32>,
    %c0_237 = arith.constant 0 : index
    %c112_238 = arith.constant 112 : index
    %257 = vector.load %arg18[%c0_237, %c112_238] : memref<32x512xf32, #tpu.memory_space<vmem>>, vector<32x256xf32>
    %c32_239 = arith.constant 32 : index
    %c0_240 = arith.constant 0 : index
    %258 = vector.load %arg19[%c32_239, %c0_240] : memref<288x256xf32, #tpu.memory_space<vmem>>, vector<32x256xf32>
    tpu.vector_store %arg19[%c32_239, %c0_240], %257 {strides = array<i32>} : memref<288x256xf32, #tpu.memory_space<vmem>>, vector<32x256xf32>,
    %c0_241 = arith.constant 0 : index
    %c113_242 = arith.constant 113 : index
    %259 = vector.load %arg18[%c0_241, %c113_242] : memref<32x512xf32, #tpu.memory_space<vmem>>, vector<32x256xf32>
    %260 = vector.broadcast %5 : vector<1x256xf32> to vector<32x256xf32>
    %261 = arith.mulf %259, %260 : vector<32x256xf32>
    %c64_243 = arith.constant 64 : index
    %c0_244 = arith.constant 0 : index
    %262 = vector.load %arg19[%c64_243, %c0_244] : memref<288x256xf32, #tpu.memory_space<vmem>>, vector<32x256xf32>
    tpu.vector_store %arg19[%c64_243, %c0_244], %261 {strides = array<i32>} : memref<288x256xf32, #tpu.memory_space<vmem>>, vector<32x256xf32>,
    %c0_245 = arith.constant 0 : index
    %c127_246 = arith.constant 127 : index
    %263 = vector.load %arg18[%c0_245, %c127_246] : memref<32x512xf32, #tpu.memory_space<vmem>>, vector<32x256xf32>
    %264 = vector.broadcast %4 : vector<1x256xf32> to vector<32x256xf32>
    %265 = arith.mulf %263, %264 : vector<32x256xf32>
    %c96_247 = arith.constant 96 : index
    %c0_248 = arith.constant 0 : index
    %266 = vector.load %arg19[%c96_247, %c0_248] : memref<288x256xf32, #tpu.memory_space<vmem>>, vector<32x256xf32>
    tpu.vector_store %arg19[%c96_247, %c0_248], %265 {strides = array<i32>} : memref<288x256xf32, #tpu.memory_space<vmem>>, vector<32x256xf32>,
    %c0_249 = arith.constant 0 : index
    %c128_250 = arith.constant 128 : index
    %267 = vector.load %arg18[%c0_249, %c128_250] : memref<32x512xf32, #tpu.memory_space<vmem>>, vector<32x256xf32>
    %c128_251 = arith.constant 128 : index
    %c0_252 = arith.constant 0 : index
    %268 = vector.load %arg19[%c128_251, %c0_252] : memref<288x256xf32, #tpu.memory_space<vmem>>, vector<32x256xf32>
    tpu.vector_store %arg19[%c128_251, %c0_252], %267 {strides = array<i32>} : memref<288x256xf32, #tpu.memory_space<vmem>>, vector<32x256xf32>,
    %c0_253 = arith.constant 0 : index
    %c129_254 = arith.constant 129 : index
    %269 = vector.load %arg18[%c0_253, %c129_254] : memref<32x512xf32, #tpu.memory_space<vmem>>, vector<32x256xf32>
    %270 = vector.broadcast %5 : vector<1x256xf32> to vector<32x256xf32>
    %271 = arith.mulf %269, %270 : vector<32x256xf32>
    %c160_255 = arith.constant 160 : index
    %c0_256 = arith.constant 0 : index
    %272 = vector.load %arg19[%c160_255, %c0_256] : memref<288x256xf32, #tpu.memory_space<vmem>>, vector<32x256xf32>
    tpu.vector_store %arg19[%c160_255, %c0_256], %271 {strides = array<i32>} : memref<288x256xf32, #tpu.memory_space<vmem>>, vector<32x256xf32>,
    %c0_257 = arith.constant 0 : index
    %c143_258 = arith.constant 143 : index
    %273 = vector.load %arg18[%c0_257, %c143_258] : memref<32x512xf32, #tpu.memory_space<vmem>>, vector<32x256xf32>
    %274 = vector.broadcast %4 : vector<1x256xf32> to vector<32x256xf32>
    %275 = arith.mulf %273, %274 : vector<32x256xf32>
    %c192_259 = arith.constant 192 : index
    %c0_260 = arith.constant 0 : index
    %276 = vector.load %arg19[%c192_259, %c0_260] : memref<288x256xf32, #tpu.memory_space<vmem>>, vector<32x256xf32>
    tpu.vector_store %arg19[%c192_259, %c0_260], %275 {strides = array<i32>} : memref<288x256xf32, #tpu.memory_space<vmem>>, vector<32x256xf32>,
    %c0_261 = arith.constant 0 : index
    %c144_262 = arith.constant 144 : index
    %277 = vector.load %arg18[%c0_261, %c144_262] : memref<32x512xf32, #tpu.memory_space<vmem>>, vector<32x256xf32>
    %c224_263 = arith.constant 224 : index
    %c0_264 = arith.constant 0 : index
    %278 = vector.load %arg19[%c224_263, %c0_264] : memref<288x256xf32, #tpu.memory_space<vmem>>, vector<32x256xf32>
    tpu.vector_store %arg19[%c224_263, %c0_264], %277 {strides = array<i32>} : memref<288x256xf32, #tpu.memory_space<vmem>>, vector<32x256xf32>,
    %c0_265 = arith.constant 0 : index
    %c145_266 = arith.constant 145 : index
    %279 = vector.load %arg18[%c0_265, %c145_266] : memref<32x512xf32, #tpu.memory_space<vmem>>, vector<32x256xf32>
    %280 = vector.broadcast %5 : vector<1x256xf32> to vector<32x256xf32>
    %281 = arith.mulf %279, %280 : vector<32x256xf32>
    %c256_267 = arith.constant 256 : index
    %c0_268 = arith.constant 0 : index
    %282 = vector.load %arg19[%c256_267, %c0_268] : memref<288x256xf32, #tpu.memory_space<vmem>>, vector<32x256xf32>
    tpu.vector_store %arg19[%c256_267, %c0_268], %281 {strides = array<i32>} : memref<288x256xf32, #tpu.memory_space<vmem>>, vector<32x256xf32>,
    %c0_269 = arith.constant 0 : index
    %c0_270 = arith.constant 0 : index
    %283 = vector.load %arg10[%c0_269, %c0_270] : memref<16x288xf32, #tpu.memory_space<vmem>>, vector<16x288xf32>
    %c0_271 = arith.constant 0 : index
    %c0_272 = arith.constant 0 : index
    %284 = vector.load %arg19[%c0_271, %c0_272] : memref<288x256xf32, #tpu.memory_space<vmem>>, vector<288x256xf32>
    %cst_273 = arith.constant dense<0.000000e+00> : vector<16x256xf32>
    %285 = tpu.matmul %283, %284, %cst_273 {dimension_numbers = #tpu.dot_dimension_numbers<[1], [0], [0], [1], [0, 0, 1, 1], [], []>} : vector<16x288xf32>, vector<288x256xf32>, vector<16x256xf32> -> vector<16x256xf32>
    %c0_274 = arith.constant 0 : index
    %c0_275 = arith.constant 0 : index
    %286 = vector.load %arg11[%c0_274, %c0_275] : memref<16x1xf32, #tpu.memory_space<vmem>>, vector<16x1xf32>
    %287 = vector.broadcast %286 : vector<16x1xf32> to vector<16x256xf32>
    %288 = arith.addf %285, %287 : vector<16x256xf32>
    %289 = vector.extract_strided_slice %288 {offsets = [0, 0], sizes = [4, 256], strides = [1, 1]} : vector<16x256xf32> to vector<4x256xf32>
    %290 = vector.extract_strided_slice %288 {offsets = [8, 0], sizes = [4, 256], strides = [1, 1]} : vector<16x256xf32> to vector<4x256xf32>
    %cst_276 = arith.constant dense<0.000000e+00> : vector<4xf32>
    %291 = vector.multi_reduction <add>, %9, %cst_276 [1] : vector<4x256xf32> to vector<4xf32>
    %292 = vector.shape_cast %291 : vector<4xf32> to vector<4x1xf32>
    %cst_277 = arith.constant 2.560000e+02 : f32
    %293 = vector.broadcast %cst_277 : f32 to vector<4x1xf32>
    %294 = arith.divf %292, %293 : vector<4x1xf32>
    %295 = vector.broadcast %294 : vector<4x1xf32> to vector<4x256xf32>
    %296 = arith.subf %9, %295 : vector<4x256xf32>
    %297 = arith.mulf %296, %296 : vector<4x256xf32>
    %cst_278 = arith.constant dense<0.000000e+00> : vector<4xf32>
    %298 = vector.multi_reduction <add>, %297, %cst_278 [1] : vector<4x256xf32> to vector<4xf32>
    %299 = vector.shape_cast %298 : vector<4xf32> to vector<4x1xf32>
    %cst_279 = arith.constant 2.560000e+02 : f32
    %300 = vector.broadcast %cst_279 : f32 to vector<4x1xf32>
    %301 = arith.divf %299, %300 : vector<4x1xf32>
    %302 = vector.broadcast %294 : vector<4x1xf32> to vector<4x256xf32>
    %303 = arith.subf %9, %302 : vector<4x256xf32>
    %cst_280 = arith.constant 9.99999974E-6 : f32
    %304 = vector.broadcast %cst_280 : f32 to vector<4x1xf32>
    %305 = arith.addf %301, %304 : vector<4x1xf32>
    %306 = math.rsqrt %305 : vector<4x1xf32>
    %307 = vector.broadcast %306 : vector<4x1xf32> to vector<4x256xf32>
    %308 = arith.mulf %303, %307 : vector<4x256xf32>
    %cst_281 = arith.constant 1.000000e+00 : f32
    %309 = vector.broadcast %cst_281 : f32 to vector<4x256xf32>
    %310 = arith.addf %309, %289 : vector<4x256xf32>
    %311 = arith.mulf %308, %310 : vector<4x256xf32>
    %312 = arith.addf %311, %290 : vector<4x256xf32>
    %c0_282 = arith.constant 0 : index
    %c0_283 = arith.constant 0 : index
    %313 = vector.load %arg16[%c0_282, %c0_283] : memref<8x4xf32, #tpu.memory_space<vmem>>, vector<8x4xf32>
    %cst_284 = arith.constant dense<0.000000e+00> : vector<8x256xf32>
    %314 = tpu.matmul %313, %312, %cst_284 {dimension_numbers = #tpu.dot_dimension_numbers<[1], [0], [0], [1], [0, 0, 1, 1], [], []>} : vector<8x4xf32>, vector<4x256xf32>, vector<8x256xf32> -> vector<8x256xf32>
    %315 = arith.addf %314, %250 : vector<8x256xf32>
    %c0_285 = arith.constant 0 : index
    %c0_286 = arith.constant 0 : index
    %c0_287 = arith.constant 0 : index
    %316 = vector.load %arg17[%c0_285, %c0_286, %c0_287] : memref<1x8x256xf32, #tpu.memory_space<vmem>>, vector<1x8x256xf32>
    %317 = vector.shape_cast %316 : vector<1x8x256xf32> to vector<8x256xf32>
    %318 = vector.shape_cast %315 : vector<8x256xf32> to vector<1x8x256xf32>
    tpu.vector_store %arg17[%c0_285, %c0_286, %c0_287], %318 {strides = array<i32>} : memref<1x8x256xf32, #tpu.memory_space<vmem>>, vector<1x8x256xf32>,
    return
  }
  func.func @transform_0(%arg0: i32) -> (i32, i32, i32) {
    %c0_i32 = arith.constant 0 : i32
    %c0_i32_0 = arith.constant 0 : i32
    %c0_i32_1 = arith.constant 0 : i32
    return %arg0, %c0_i32, %c0_i32_0 : i32, i32, i32
  }
  func.func @transform_1(%arg0: i32) -> (i32, i32, i32) {
    %c0_i32 = arith.constant 0 : i32
    %c0_i32_0 = arith.constant 0 : i32
    %c0_i32_1 = arith.constant 0 : i32
    return %arg0, %c0_i32, %c0_i32_0 : i32, i32, i32
  }
  func.func @transform_2(%arg0: i32) -> (i32, i32) {
    %c0_i32 = arith.constant 0 : i32
    %c0_i32_0 = arith.constant 0 : i32
    %c0_i32_1 = arith.constant 0 : i32
    return %c0_i32, %c0_i32_0 : i32, i32
  }
  func.func @transform_3(%arg0: i32) -> (i32, i32) {
    %c0_i32 = arith.constant 0 : i32
    %c0_i32_0 = arith.constant 0 : i32
    %c0_i32_1 = arith.constant 0 : i32
    return %c0_i32, %c0_i32_0 : i32, i32
  }
  func.func @transform_4(%arg0: i32) -> (i32, i32) {
    %c0_i32 = arith.constant 0 : i32
    %c0_i32_0 = arith.constant 0 : i32
    %c0_i32_1 = arith.constant 0 : i32
    return %c0_i32, %c0_i32_0 : i32, i32
  }
  func.func @transform_5(%arg0: i32) -> (i32, i32) {
    %c0_i32 = arith.constant 0 : i32
    %c0_i32_0 = arith.constant 0 : i32
    %c0_i32_1 = arith.constant 0 : i32
    return %c0_i32, %c0_i32_0 : i32, i32
  }
  func.func @transform_6(%arg0: i32) -> (i32, i32) {
    %c0_i32 = arith.constant 0 : i32
    %c0_i32_0 = arith.constant 0 : i32
    %c0_i32_1 = arith.constant 0 : i32
    return %c0_i32, %c0_i32_0 : i32, i32
  }
  func.func @transform_7(%arg0: i32) -> (i32, i32) {
    %c0_i32 = arith.constant 0 : i32
    %c0_i32_0 = arith.constant 0 : i32
    %c0_i32_1 = arith.constant 0 : i32
    return %c0_i32, %c0_i32_0 : i32, i32
  }
  func.func @transform_8(%arg0: i32) -> (i32, i32) {
    %c0_i32 = arith.constant 0 : i32
    %c0_i32_0 = arith.constant 0 : i32
    %c0_i32_1 = arith.constant 0 : i32
    return %c0_i32, %c0_i32_0 : i32, i32
  }
  func.func @transform_9(%arg0: i32) -> (i32, i32) {
    %c0_i32 = arith.constant 0 : i32
    %c0_i32_0 = arith.constant 0 : i32
    %c0_i32_1 = arith.constant 0 : i32
    return %c0_i32, %c0_i32_0 : i32, i32
  }
  func.func @transform_10(%arg0: i32) -> (i32, i32) {
    %c0_i32 = arith.constant 0 : i32
    %c0_i32_0 = arith.constant 0 : i32
    %c0_i32_1 = arith.constant 0 : i32
    return %c0_i32, %c0_i32_0 : i32, i32
  }
  func.func @transform_11(%arg0: i32) -> (i32, i32) {
    %c0_i32 = arith.constant 0 : i32
    %c0_i32_0 = arith.constant 0 : i32
    %c0_i32_1 = arith.constant 0 : i32
    return %c0_i32, %c0_i32_0 : i32, i32
  }
  func.func @transform_12(%arg0: i32) -> (i32, i32) {
    %c0_i32 = arith.constant 0 : i32
    %c0_i32_0 = arith.constant 0 : i32
    %c0_i32_1 = arith.constant 0 : i32
    return %c0_i32, %c0_i32_0 : i32, i32
  }
  func.func @transform_13(%arg0: i32) -> (i32, i32) {
    %c0_i32 = arith.constant 0 : i32
    %c0_i32_0 = arith.constant 0 : i32
    %c0_i32_1 = arith.constant 0 : i32
    return %c0_i32, %c0_i32_0 : i32, i32
  }
  func.func @transform_14(%arg0: i32) -> (i32, i32) {
    %c0_i32 = arith.constant 0 : i32
    %c0_i32_0 = arith.constant 0 : i32
    %c0_i32_1 = arith.constant 0 : i32
    return %c0_i32, %c0_i32_0 : i32, i32
  }
  func.func @transform_15(%arg0: i32) -> (i32, i32) {
    %c0_i32 = arith.constant 0 : i32
    %c0_i32_0 = arith.constant 0 : i32
    %c0_i32_1 = arith.constant 0 : i32
    return %c0_i32, %c0_i32_0 : i32, i32
  }
  func.func @transform_16(%arg0: i32) -> (i32, i32, i32) {
    %c0_i32 = arith.constant 0 : i32
    %c0_i32_0 = arith.constant 0 : i32
    %c0_i32_1 = arith.constant 0 : i32
    return %arg0, %c0_i32, %c0_i32_0 : i32, i32, i32
  }
}

</mosaic_0001>

<llo_original>
// kernel: tpu_custom_call.1
$region0: #{tpu_custom_call.1}
  #allocation0 [shape = 'u32[]', space=smem, size = 0x4, offset = 0x4, fixed_abs, tag = 'smem constant byte address 0x4 - core index']
  #allocation1 [shape = 'u32[144,128]{1,0:T(1,128)}', space=vmem, size = 0x12000, scoped, tag = 'internal scratch']
  #allocation2 [shape = 'f32[32,512]{1,0:T(8,128)}', space=vmem, size = 0x10000, scoped, tag = 'scratch operand']
  #allocation3 [shape = 'f32[288,256]{1,0:T(8,128)}', space=vmem, size = 0x48000, scoped, tag = 'scratch operand']
  %s0 = inlined_call_operand.vmem [shape: f32[2,3,256], index: 0, kind: input, shape index: {}]
  %s1 = inlined_call_operand.vmem [shape: f32[2,4,256], index: 1, kind: input, shape index: {}]
  %s2 = inlined_call_operand.vmem [shape: f32[2,256], index: 2, kind: input, shape index: {}]
  %s3 = inlined_call_operand.vmem [shape: f32[96,72], index: 3, kind: input, shape index: {}]
  %s4 = inlined_call_operand.vmem [shape: f32[96,1], index: 4, kind: input, shape index: {}]
  %s5 = inlined_call_operand.vmem [shape: f32[16,288], index: 5, kind: input, shape index: {}]
  %s6 = inlined_call_operand.vmem [shape: f32[16,1], index: 6, kind: input, shape index: {}]
  %s7 = inlined_call_operand.vmem [shape: f32[16,288], index: 7, kind: input, shape index: {}]
  %s8 = inlined_call_operand.vmem [shape: f32[16,1], index: 8, kind: input, shape index: {}]
  %s9 = inlined_call_operand.vmem [shape: f32[16,288], index: 9, kind: input, shape index: {}]
  %s10 = inlined_call_operand.vmem [shape: f32[16,1], index: 10, kind: input, shape index: {}]
  %s11 = inlined_call_operand.vmem [shape: f32[8,72], index: 11, kind: input, shape index: {}]
  %s12 = inlined_call_operand.vmem [shape: f32[8,1], index: 12, kind: input, shape index: {}]
  %s13 = inlined_call_operand.vmem [shape: f32[8,72], index: 13, kind: input, shape index: {}]
  %s14 = inlined_call_operand.vmem [shape: f32[8,1], index: 14, kind: input, shape index: {}]
  %s15 = inlined_call_operand.vmem [shape: f32[8,4], index: 15, kind: input, shape index: {}]
  %s16 = inlined_call_operand.hbm [shape: f32[2,8,256], index: 16, kind: output, shape index: {}]
  %s17 = sld [smem:[#allocation0]]
  $region97: #{tpu_custom_call.1} parent=0
    _
  %s19 = ssub.s32 1, %s17
  %s20 = scalar_select 0, %s19, %s17
  $region1: #{tpu_custom_call.1} parent=0
    #allocation4 [shape = 'u8[16384]{0}', space=vmem, size = 0x4000, scoped, tag = 'output window, operand 0']
    #allocation5 [shape = 's32[2]{0}', space=sflag, size = 0x8, scoped, tag = 'scoped memory for tpu_custom_call.1']
    %21 = vsyncpa [#allocation5], 0
    %s22 = scalar_lea.sflag [#allocation5], 1
    %23 = vsyncpa %s22, 0
    loop: start=0, step=1, limit=4
    $region2: #{tpu_custom_call.1} parent=1 // loop_pre_header
      _
    $region3: #{tpu_custom_call.1} parent=1 // loop_header
      %s25 = sphi 0, %s29
      %p26 = scmp.ge.s32.totalorder %s25, 4
      %s35 = sphi 0, %s37
      %s38 = sphi 0, %s35
      %s39 = sphi 0, %s38
      %s55 = sphi 0, %s39
      %s61 = sphi 0, %s63
      %s64 = sphi 0, %s61
      %s65 = sphi 0, %s64
      %s81 = sphi 0, %s65
      %s85 = sphi 0, %s85
      %s87 = sphi 0, %s85
      %s88 = sphi 0, %s87
      %s102 = sphi 0, %s88
      %s106 = sphi 0, %s106
      %s108 = sphi 0, %s106
      %s109 = sphi 0, %s108
      %s123 = sphi 0, %s109
      %s127 = sphi 0, %s127
      %s129 = sphi 0, %s127
      %s130 = sphi 0, %s129
      %s144 = sphi 0, %s130
      %s148 = sphi 0, %s148
      %s150 = sphi 0, %s148
      %s151 = sphi 0, %s150
      %s165 = sphi 0, %s151
      %s169 = sphi 0, %s169
      %s171 = sphi 0, %s169
      %s172 = sphi 0, %s171
      %s186 = sphi 0, %s172
      %s190 = sphi 0, %s190
      %s192 = sphi 0, %s190
      %s193 = sphi 0, %s192
      %s207 = sphi 0, %s193
      %s211 = sphi 0, %s211
      %s213 = sphi 0, %s211
      %s214 = sphi 0, %s213
      %s228 = sphi 0, %s214
      %s232 = sphi 0, %s232
      %s234 = sphi 0, %s232
      %s235 = sphi 0, %s234
      %s249 = sphi 0, %s235
      %s253 = sphi 0, %s253
      %s255 = sphi 0, %s253
      %s256 = sphi 0, %s255
      %s270 = sphi 0, %s256
      %s274 = sphi 0, %s274
      %s276 = sphi 0, %s274
      %s277 = sphi 0, %s276
      %s291 = sphi 0, %s277
      %s295 = sphi 0, %s295
      %s297 = sphi 0, %s295
      %s298 = sphi 0, %s297
      %s312 = sphi 0, %s298
      %s316 = sphi 0, %s316
      %s318 = sphi 0, %s316
      %s319 = sphi 0, %s318
      %s333 = sphi 0, %s319
      %s337 = sphi 0, %s337
      %s339 = sphi 0, %s337
      %s340 = sphi 0, %s339
      %s354 = sphi 0, %s340
      %s358 = sphi 0, %s358
      %s360 = sphi 0, %s358
      %s361 = sphi 0, %s360
      %s375 = sphi 0, %s361
      %s381 = sphi 0, %s383
      %s384 = sphi 0, %s381
      %s385 = sphi 0, %s384
      %s401 = sphi 0, %s385
    $region4: #{tpu_custom_call.1} parent=1 // loop_header_branch
      %28 = sbr.rel (%p26) target = $region8
    $region5: #{tpu_custom_call.1} parent=1 // loop_body
      %s30 = ssub.s32 %s25, 1
      %s31 = ssub.s32 %s25, 2
      %s32 = sadd.s32 %s25, 1
      %s33 = ssub.s32 %s25, %s32
      %p34 = scmp.eq.s32.totalorder %s33, 0
      %s36 = sadd.s32 %s35, 1
      %s37 = scalar_select %p34, %s35, %s36
      %p40 = pneg %p34
      %p41 = scmp.eq.s32.totalorder %s25, 1
      %p42 = por %p40, %p41
      %p43 = scmp.ne.s32.totalorder %s35, %s38
      %p44 = scmp.eq.s32.totalorder %s25, 0
      %p45 = por %p43, %p44
      %p46 = scmp.ne.s32.totalorder %s35, %s38
      %p47 = scmp.eq.s32.totalorder %s30, 1
      %p48 = por %p46, %p47
      %p49 = scmp.ne.s32.totalorder %s38, %s39
      %p50 = scmp.eq.s32.totalorder %s30, 0
      %p51 = por %p49, %p50
      %p52 = scmp.ne.s32.totalorder %s38, %s39
      %p53 = scmp.eq.s32.totalorder %s31, 1
      %p54 = por %p52, %p53
      %p56 = scmp.ne.s32.totalorder %s39, %s55
      %p57 = scmp.eq.s32.totalorder %s31, 0
      %p58 = por %p56, %p57
      %s59 = ssub.s32 %s25, %s32
      %p60 = scmp.eq.s32.totalorder %s59, 0
      %s62 = sadd.s32 %s61, 1
      %s63 = scalar_select %p60, %s61, %s62
      %p66 = pneg %p60
      %p67 = scmp.eq.s32.totalorder %s25, 1
      %p68 = por %p66, %p67
      %p69 = scmp.ne.s32.totalorder %s61, %s64
      %p70 = scmp.eq.s32.totalorder %s25, 0
      %p71 = por %p69, %p70
      %p72 = scmp.ne.s32.totalorder %s61, %s64
      %p73 = scmp.eq.s32.totalorder %s30, 1
      %p74 = por %p72, %p73
      %p75 = scmp.ne.s32.totalorder %s64, %s65
      %p76 = scmp.eq.s32.totalorder %s30, 0
      %p77 = por %p75, %p76
      %p78 = scmp.ne.s32.totalorder %s64, %s65
      %p79 = scmp.eq.s32.totalorder %s31, 1
      %p80 = por %p78, %p79
      %p82 = scmp.ne.s32.totalorder %s65, %s81
      %p83 = scmp.eq.s32.totalorder %s31, 0
      %p84 = por %p82, %p83
      %s86 = sadd.s32 %s85, 1
      %p89 = scmp.eq.s32.totalorder %s25, 1
      %p90 = scmp.ne.s32.totalorder %s85, %s87
      %p91 = scmp.eq.s32.totalorder %s25, 0
      %p92 = por %p90, %p91
      %p93 = scmp.ne.s32.totalorder %s85, %s87
      %p94 = scmp.eq.s32.totalorder %s30, 1
      %p95 = por %p93, %p94
      %p96 = scmp.ne.s32.totalorder %s87, %s88
      %p97 = scmp.eq.s32.totalorder %s30, 0
      %p98 = por %p96, %p97
      %p99 = scmp.ne.s32.totalorder %s87, %s88
      %p100 = scmp.eq.s32.totalorder %s31, 1
      %p101 = por %p99, %p100
      %p103 = scmp.ne.s32.totalorder %s88, %s102
      %p104 = scmp.eq.s32.totalorder %s31, 0
      %p105 = por %p103, %p104
      %s107 = sadd.s32 %s106, 1
      %p110 = scmp.eq.s32.totalorder %s25, 1
      %p111 = scmp.ne.s32.totalorder %s106, %s108
      %p112 = scmp.eq.s32.totalorder %s25, 0
      %p113 = por %p111, %p112
      %p114 = scmp.ne.s32.totalorder %s106, %s108
      %p115 = scmp.eq.s32.totalorder %s30, 1
      %p116 = por %p114, %p115
      %p117 = scmp.ne.s32.totalorder %s108, %s109
      %p118 = scmp.eq.s32.totalorder %s30, 0
      %p119 = por %p117, %p118
      %p120 = scmp.ne.s32.totalorder %s108, %s109
      %p121 = scmp.eq.s32.totalorder %s31, 1
      %p122 = por %p120, %p121
      %p124 = scmp.ne.s32.totalorder %s109, %s123
      %p125 = scmp.eq.s32.totalorder %s31, 0
      %p126 = por %p124, %p125
      %s128 = sadd.s32 %s127, 1
      %p131 = scmp.eq.s32.totalorder %s25, 1
      %p132 = scmp.ne.s32.totalorder %s127, %s129
      %p133 = scmp.eq.s32.totalorder %s25, 0
      %p134 = por %p132, %p133
      %p135 = scmp.ne.s32.totalorder %s127, %s129
      %p136 = scmp.eq.s32.totalorder %s30, 1
      %p137 = por %p135, %p136
      %p138 = scmp.ne.s32.totalorder %s129, %s130
      %p139 = scmp.eq.s32.totalorder %s30, 0
      %p140 = por %p138, %p139
      %p141 = scmp.ne.s32.totalorder %s129, %s130
      %p142 = scmp.eq.s32.totalorder %s31, 1
      %p143 = por %p141, %p142
      %p145 = scmp.ne.s32.totalorder %s130, %s144
      %p146 = scmp.eq.s32.totalorder %s31, 0
      %p147 = por %p145, %p146
      %s149 = sadd.s32 %s148, 1
      %p152 = scmp.eq.s32.totalorder %s25, 1
      %p153 = scmp.ne.s32.totalorder %s148, %s150
      %p154 = scmp.eq.s32.totalorder %s25, 0
      %p155 = por %p153, %p154
      %p156 = scmp.ne.s32.totalorder %s148, %s150
      %p157 = scmp.eq.s32.totalorder %s30, 1
      %p158 = por %p156, %p157
      %p159 = scmp.ne.s32.totalorder %s150, %s151
      %p160 = scmp.eq.s32.totalorder %s30, 0
      %p161 = por %p159, %p160
      %p162 = scmp.ne.s32.totalorder %s150, %s151
      %p163 = scmp.eq.s32.totalorder %s31, 1
      %p164 = por %p162, %p163
      %p166 = scmp.ne.s32.totalorder %s151, %s165
      %p167 = scmp.eq.s32.totalorder %s31, 0
      %p168 = por %p166, %p167
      %s170 = sadd.s32 %s169, 1
      %p173 = scmp.eq.s32.totalorder %s25, 1
      %p174 = scmp.ne.s32.totalorder %s169, %s171
      %p175 = scmp.eq.s32.totalorder %s25, 0
      %p176 = por %p174, %p175
      %p177 = scmp.ne.s32.totalorder %s169, %s171
      %p178 = scmp.eq.s32.totalorder %s30, 1
      %p179 = por %p177, %p178
      %p180 = scmp.ne.s32.totalorder %s171, %s172
      %p181 = scmp.eq.s32.totalorder %s30, 0
      %p182 = por %p180, %p181
      %p183 = scmp.ne.s32.totalorder %s171, %s172
      %p184 = scmp.eq.s32.totalorder %s31, 1
      %p185 = por %p183, %p184
      %p187 = scmp.ne.s32.totalorder %s172, %s186
      %p188 = scmp.eq.s32.totalorder %s31, 0
      %p189 = por %p187, %p188
      %s191 = sadd.s32 %s190, 1
      %p194 = scmp.eq.s32.totalorder %s25, 1
      %p195 = scmp.ne.s32.totalorder %s190, %s192
      %p196 = scmp.eq.s32.totalorder %s25, 0
      %p197 = por %p195, %p196
      %p198 = scmp.ne.s32.totalorder %s190, %s192
      %p199 = scmp.eq.s32.totalorder %s30, 1
      %p200 = por %p198, %p199
      %p201 = scmp.ne.s32.totalorder %s192, %s193
      %p202 = scmp.eq.s32.totalorder %s30, 0
      %p203 = por %p201, %p202
      %p204 = scmp.ne.s32.totalorder %s192, %s193
      %p205 = scmp.eq.s32.totalorder %s31, 1
      %p206 = por %p204, %p205
      %p208 = scmp.ne.s32.totalorder %s193, %s207
      %p209 = scmp.eq.s32.totalorder %s31, 0
      %p210 = por %p208, %p209
      %s212 = sadd.s32 %s211, 1
      %p215 = scmp.eq.s32.totalorder %s25, 1
      %p216 = scmp.ne.s32.totalorder %s211, %s213
      %p217 = scmp.eq.s32.totalorder %s25, 0
      %p218 = por %p216, %p217
      %p219 = scmp.ne.s32.totalorder %s211, %s213
      %p220 = scmp.eq.s32.totalorder %s30, 1
      %p221 = por %p219, %p220
      %p222 = scmp.ne.s32.totalorder %s213, %s214
      %p223 = scmp.eq.s32.totalorder %s30, 0
      %p224 = por %p222, %p223
      %p225 = scmp.ne.s32.totalorder %s213, %s214
      %p226 = scmp.eq.s32.totalorder %s31, 1
      %p227 = por %p225, %p226
      %p229 = scmp.ne.s32.totalorder %s214, %s228
      %p230 = scmp.eq.s32.totalorder %s31, 0
      %p231 = por %p229, %p230
      %s233 = sadd.s32 %s232, 1
      %p236 = scmp.eq.s32.totalorder %s25, 1
      %p237 = scmp.ne.s32.totalorder %s232, %s234
      %p238 = scmp.eq.s32.totalorder %s25, 0
      %p239 = por %p237, %p238
      %p240 = scmp.ne.s32.totalorder %s232, %s234
      %p241 = scmp.eq.s32.totalorder %s30, 1
      %p242 = por %p240, %p241
      %p243 = scmp.ne.s32.totalorder %s234, %s235
      %p244 = scmp.eq.s32.totalorder %s30, 0
      %p245 = por %p243, %p244
      %p246 = scmp.ne.s32.totalorder %s234, %s235
      %p247 = scmp.eq.s32.totalorder %s31, 1
      %p248 = por %p246, %p247
      %p250 = scmp.ne.s32.totalorder %s235, %s249
      %p251 = scmp.eq.s32.totalorder %s31, 0
      %p252 = por %p250, %p251
      %s254 = sadd.s32 %s253, 1
      %p257 = scmp.eq.s32.totalorder %s25, 1
      %p258 = scmp.ne.s32.totalorder %s253, %s255
      %p259 = scmp.eq.s32.totalorder %s25, 0
      %p260 = por %p258, %p259
      %p261 = scmp.ne.s32.totalorder %s253, %s255
      %p262 = scmp.eq.s32.totalorder %s30, 1
      %p263 = por %p261, %p262
      %p264 = scmp.ne.s32.totalorder %s255, %s256
      %p265 = scmp.eq.s32.totalorder %s30, 0
      %p266 = por %p264, %p265
      %p267 = scmp.ne.s32.totalorder %s255, %s256
      %p268 = scmp.eq.s32.totalorder %s31, 1
      %p269 = por %p267, %p268
      %p271 = scmp.ne.s32.totalorder %s256, %s270
      %p272 = scmp.eq.s32.totalorder %s31, 0
      %p273 = por %p271, %p272
      %s275 = sadd.s32 %s274, 1
      %p278 = scmp.eq.s32.totalorder %s25, 1
      %p279 = scmp.ne.s32.totalorder %s274, %s276
      %p280 = scmp.eq.s32.totalorder %s25, 0
      %p281 = por %p279, %p280
      %p282 = scmp.ne.s32.totalorder %s274, %s276
      %p283 = scmp.eq.s32.totalorder %s30, 1
      %p284 = por %p282, %p283
      %p285 = scmp.ne.s32.totalorder %s276, %s277
      %p286 = scmp.eq.s32.totalorder %s30, 0
      %p287 = por %p285, %p286
      %p288 = scmp.ne.s32.totalorder %s276, %s277
      %p289 = scmp.eq.s32.totalorder %s31, 1
      %p290 = por %p288, %p289
      %p292 = scmp.ne.s32.totalorder %s277, %s291
      %p293 = scmp.eq.s32.totalorder %s31, 0
      %p294 = por %p292, %p293
      %s296 = sadd.s32 %s295, 1
      %p299 = scmp.eq.s32.totalorder %s25, 1
      %p300 = scmp.ne.s32.totalorder %s295, %s297
      %p301 = scmp.eq.s32.totalorder %s25, 0
      %p302 = por %p300, %p301
      %p303 = scmp.ne.s32.totalorder %s295, %s297
      %p304 = scmp.eq.s32.totalorder %s30, 1
      %p305 = por %p303, %p304
      %p306 = scmp.ne.s32.totalorder %s297, %s298
      %p307 = scmp.eq.s32.totalorder %s30, 0
      %p308 = por %p306, %p307
      %p309 = scmp.ne.s32.totalorder %s297, %s298
      %p310 = scmp.eq.s32.totalorder %s31, 1
      %p311 = por %p309, %p310
      %p313 = scmp.ne.s32.totalorder %s298, %s312
      %p314 = scmp.eq.s32.totalorder %s31, 0
      %p315 = por %p313, %p314
      %s317 = sadd.s32 %s316, 1
      %p320 = scmp.eq.s32.totalorder %s25, 1
      %p321 = scmp.ne.s32.totalorder %s316, %s318
      %p322 = scmp.eq.s32.totalorder %s25, 0
      %p323 = por %p321, %p322
      %p324 = scmp.ne.s32.totalorder %s316, %s318
      %p325 = scmp.eq.s32.totalorder %s30, 1
      %p326 = por %p324, %p325
      %p327 = scmp.ne.s32.totalorder %s318, %s319
      %p328 = scmp.eq.s32.totalorder %s30, 0
      %p329 = por %p327, %p328
      %p330 = scmp.ne.s32.totalorder %s318, %s319
      %p331 = scmp.eq.s32.totalorder %s31, 1
      %p332 = por %p330, %p331
      %p334 = scmp.ne.s32.totalorder %s319, %s333
      %p335 = scmp.eq.s32.totalorder %s31, 0
      %p336 = por %p334, %p335
      %s338 = sadd.s32 %s337, 1
      %p341 = scmp.eq.s32.totalorder %s25, 1
      %p342 = scmp.ne.s32.totalorder %s337, %s339
      %p343 = scmp.eq.s32.totalorder %s25, 0
      %p344 = por %p342, %p343
      %p345 = scmp.ne.s32.totalorder %s337, %s339
      %p346 = scmp.eq.s32.totalorder %s30, 1
      %p347 = por %p345, %p346
      %p348 = scmp.ne.s32.totalorder %s339, %s340
      %p349 = scmp.eq.s32.totalorder %s30, 0
      %p350 = por %p348, %p349
      %p351 = scmp.ne.s32.totalorder %s339, %s340
      %p352 = scmp.eq.s32.totalorder %s31, 1
      %p353 = por %p351, %p352
      %p355 = scmp.ne.s32.totalorder %s340, %s354
      %p356 = scmp.eq.s32.totalorder %s31, 0
      %p357 = por %p355, %p356
      %s359 = sadd.s32 %s358, 1
      %p362 = scmp.eq.s32.totalorder %s25, 1
      %p363 = scmp.ne.s32.totalorder %s358, %s360
      %p364 = scmp.eq.s32.totalorder %s25, 0
      %p365 = por %p363, %p364
      %p366 = scmp.ne.s32.totalorder %s358, %s360
      %p367 = scmp.eq.s32.totalorder %s30, 1
      %p368 = por %p366, %p367
      %p369 = scmp.ne.s32.totalorder %s360, %s361
      %p370 = scmp.eq.s32.totalorder %s30, 0
      %p371 = por %p369, %p370
      %p372 = scmp.ne.s32.totalorder %s360, %s361
      %p373 = scmp.eq.s32.totalorder %s31, 1
      %p374 = por %p372, %p373
      %p376 = scmp.ne.s32.totalorder %s361, %s375
      %p377 = scmp.eq.s32.totalorder %s31, 0
      %p378 = por %p376, %p377
      %s379 = ssub.s32 %s25, %s32
      %p380 = scmp.eq.s32.totalorder %s379, 0
      %s382 = sadd.s32 %s381, 1
      %s383 = scalar_select %p380, %s381, %s382
      %p386 = pneg %p380
      %p387 = scmp.eq.s32.totalorder %s25, 1
      %p388 = por %p386, %p387
      %p389 = scmp.ne.s32.totalorder %s381, %s384
      %p390 = scmp.eq.s32.totalorder %s25, 0
      %p391 = por %p389, %p390
      %p392 = scmp.ne.s32.totalorder %s381, %s384
      %p393 = scmp.eq.s32.totalorder %s30, 1
      %p394 = por %p392, %p393
      %p395 = scmp.ne.s32.totalorder %s384, %s385
      %p396 = scmp.eq.s32.totalorder %s30, 0
      %p397 = por %p395, %p396
      %p398 = scmp.ne.s32.totalorder %s384, %s385
      %p399 = scmp.eq.s32.totalorder %s31, 1
      %p400 = por %p398, %p399
      %p402 = scmp.ne.s32.totalorder %s385, %s401
      %p403 = scmp.eq.s32.totalorder %s31, 0
      %p404 = por %p402, %p403
      %p405 = scmp.le.s32.totalorder 1, %s25
      %p406 = scmp.lt.s32.totalorder %s25, 3
      %p407 = pnand %p405, %p406
      %p408 = pneg %p407
      // Predicated region
      $region9: #{tpu_custom_call.1} parent=5 // pred_check
        _
      $region10: #{tpu_custom_call.1} parent=5 // pred_check_branch
        %410 = sbr.rel (%p407) target = $region12
      $region11: #{tpu_custom_call.1} parent=5 // pred_region
        %s411 = ssub.s32 %s25, 1
        // Predicated region
        $region13: #{tpu_custom_call.1} parent=11 // pred_check
          %p412 = pneg %p98
        $region14: #{tpu_custom_call.1} parent=11 // pred_check_branch
          %414 = sbr.rel (%p412) target = $region16
        $region15: #{tpu_custom_call.1} parent=11 // pred_region
          _
        $region16: #{tpu_custom_call.1} parent=11 // pred_fallthru
          _
        // Predicated region
        $region17: #{tpu_custom_call.1} parent=11 // pred_check
          %p415 = pneg %p119
        $region18: #{tpu_custom_call.1} parent=11 // pred_check_branch
          %417 = sbr.rel (%p415) target = $region20
        $region19: #{tpu_custom_call.1} parent=11 // pred_region
          _
        $region20: #{tpu_custom_call.1} parent=11 // pred_fallthru
          _
        // Predicated region
        $region21: #{tpu_custom_call.1} parent=11 // pred_check
          %p418 = pneg %p140
        $region22: #{tpu_custom_call.1} parent=11 // pred_check_branch
          %420 = sbr.rel (%p418) target = $region24
        $region23: #{tpu_custom_call.1} parent=11 // pred_region
          _
        $region24: #{tpu_custom_call.1} parent=11 // pred_fallthru
          _
        // Predicated region
        $region25: #{tpu_custom_call.1} parent=11 // pred_check
          %p421 = pneg %p161
        $region26: #{tpu_custom_call.1} parent=11 // pred_check_branch
          %423 = sbr.rel (%p421) target = $region28
        $region27: #{tpu_custom_call.1} parent=11 // pred_region
          _
        $region28: #{tpu_custom_call.1} parent=11 // pred_fallthru
          _
        // Predicated region
        $region29: #{tpu_custom_call.1} parent=11 // pred_check
          %p424 = pneg %p182
        $region30: #{tpu_custom_call.1} parent=11 // pred_check_branch
          %426 = sbr.rel (%p424) target = $region32
        $region31: #{tpu_custom_call.1} parent=11 // pred_region
          _
        $region32: #{tpu_custom_call.1} parent=11 // pred_fallthru
          _
        // Predicated region
        $region33: #{tpu_custom_call.1} parent=11 // pred_check
          %p427 = pneg %p203
        $region34: #{tpu_custom_call.1} parent=11 // pred_check_branch
          %429 = sbr.rel (%p427) target = $region36
        $region35: #{tpu_custom_call.1} parent=11 // pred_region
          _
        $region36: #{tpu_custom_call.1} parent=11 // pred_fallthru
          _
        // Predicated region
        $region37: #{tpu_custom_call.1} parent=11 // pred_check
          %p430 = pneg %p224
        $region38: #{tpu_custom_call.1} parent=11 // pred_check_branch
          %432 = sbr.rel (%p430) target = $region40
        $region39: #{tpu_custom_call.1} parent=11 // pred_region
          _
        $region40: #{tpu_custom_call.1} parent=11 // pred_fallthru
          _
        // Predicated region
        $region41: #{tpu_custom_call.1} parent=11 // pred_check
          %p433 = pneg %p245
        $region42: #{tpu_custom_call.1} parent=11 // pred_check_branch
          %435 = sbr.rel (%p433) target = $region44
        $region43: #{tpu_custom_call.1} parent=11 // pred_region
          _
        $region44: #{tpu_custom_call.1} parent=11 // pred_fallthru
          _
        // Predicated region
        $region45: #{tpu_custom_call.1} parent=11 // pred_check
          %p436 = pneg %p266
        $region46: #{tpu_custom_call.1} parent=11 // pred_check_branch
          %438 = sbr.rel (%p436) target = $region48
        $region47: #{tpu_custom_call.1} parent=11 // pred_region
          _
        $region48: #{tpu_custom_call.1} parent=11 // pred_fallthru
          _
        // Predicated region
        $region49: #{tpu_custom_call.1} parent=11 // pred_check
          %p439 = pneg %p287
        $region50: #{tpu_custom_call.1} parent=11 // pred_check_branch
          %441 = sbr.rel (%p439) target = $region52
        $region51: #{tpu_custom_call.1} parent=11 // pred_region
          _
        $region52: #{tpu_custom_call.1} parent=11 // pred_fallthru
          _
        // Predicated region
        $region53: #{tpu_custom_call.1} parent=11 // pred_check
          %p442 = pneg %p308
        $region54: #{tpu_custom_call.1} parent=11 // pred_check_branch
          %444 = sbr.rel (%p442) target = $region56
        $region55: #{tpu_custom_call.1} parent=11 // pred_region
          _
        $region56: #{tpu_custom_call.1} parent=11 // pred_fallthru
          _
        // Predicated region
        $region57: #{tpu_custom_call.1} parent=11 // pred_check
          %p445 = pneg %p329
        $region58: #{tpu_custom_call.1} parent=11 // pred_check_branch
          %447 = sbr.rel (%p445) target = $region60
        $region59: #{tpu_custom_call.1} parent=11 // pred_region
          _
        $region60: #{tpu_custom_call.1} parent=11 // pred_fallthru
          _
        // Predicated region
        $region61: #{tpu_custom_call.1} parent=11 // pred_check
          %p448 = pneg %p350
        $region62: #{tpu_custom_call.1} parent=11 // pred_check_branch
          %450 = sbr.rel (%p448) target = $region64
        $region63: #{tpu_custom_call.1} parent=11 // pred_region
          _
        $region64: #{tpu_custom_call.1} parent=11 // pred_fallthru
          _
        // Predicated region
        $region65: #{tpu_custom_call.1} parent=11 // pred_check
          %p451 = pneg %p371
        $region66: #{tpu_custom_call.1} parent=11 // pred_check_branch
          %453 = sbr.rel (%p451) target = $region68
        $region67: #{tpu_custom_call.1} parent=11 // pred_region
          _
        $region68: #{tpu_custom_call.1} parent=11 // pred_fallthru
          _
      $region12: #{tpu_custom_call.1} parent=5 // pred_fallthru
        _
      %p454 = scmp.lt.s32.totalorder %s25, 2
      // Predicated region
      $region69: #{tpu_custom_call.1} parent=5 // pred_check
        %p455 = pneg %p454
      $region70: #{tpu_custom_call.1} parent=5 // pred_check_branch
        %457 = sbr.rel (%p455) target = $region72
      $region71: #{tpu_custom_call.1} parent=5 // pred_region
        // Predicated region
        $region73: #{tpu_custom_call.1} parent=71 // pred_check
          %p458 = pneg %p45
        $region74: #{tpu_custom_call.1} parent=71 // pred_check_branch
          %460 = sbr.rel (%p458) target = $region76
        $region75: #{tpu_custom_call.1} parent=71 // pred_region
          %p461 = scmp.lt.s32.totalorder %s25, 1
          %s462 = scalar_select %p461, %s25, 1
          %s463 = smul.addr %s462, 2
          %s464 = smul.addr %s463, 4
          %s465 = scalar_lea.vmem %s0, %s464
        $region76: #{tpu_custom_call.1} parent=71 // pred_fallthru
          _
        // Predicated region
        $region77: #{tpu_custom_call.1} parent=71 // pred_check
          %p466 = pneg %p71
        $region78: #{tpu_custom_call.1} parent=71 // pred_check_branch
          %468 = sbr.rel (%p466) target = $region80
        $region79: #{tpu_custom_call.1} parent=71 // pred_region
          %p469 = scmp.lt.s32.totalorder %s25, 1
          %s470 = scalar_select %p469, %s25, 1
          %s471 = smul.addr %s470, 2
          %s472 = smul.addr %s471, 4
          %s473 = scalar_lea.vmem %s1, %s472
        $region80: #{tpu_custom_call.1} parent=71 // pred_fallthru
          _
      $region72: #{tpu_custom_call.1} parent=5 // pred_fallthru
        _
      %p474 = scmp.le.s32.totalorder 1, %s25
      %p475 = scmp.lt.s32.totalorder %s25, 3
      %p476 = pnand %p474, %p475
      %p477 = pneg %p476
      // Predicated region
      $region81: #{tpu_custom_call.1} parent=5 // pred_check
        _
      $region82: #{tpu_custom_call.1} parent=5 // pred_check_branch
        %479 = sbr.rel (%p476) target = $region84
      $region83: #{tpu_custom_call.1} parent=5 // pred_region
        %s480 = ssub.s32 %s25, 1
        %p481 = scmp.lt.s32.totalorder %s30, 1
        %s482 = scalar_select %p481, %s30, 1
        %s483 = smul.addr %s482, 2
        %s484 = smul.addr %s483, 4
        %s485 = scalar_lea.vmem %s0, %s484
        %p486 = pneg %p51
        %p487 = pneg %p48
        %p488 = scmp.lt.s32.totalorder %s30, 1
        %s489 = scalar_select %p488, %s30, 1
        %s490 = smul.addr %s489, 2
        %s491 = smul.addr %s490, 4
        %s492 = scalar_lea.vmem %s1, %s491
        %p493 = pneg %p77
        %p494 = pneg %p74
        %p495 = pneg %p98
        %p496 = pneg %p95
        %p497 = pneg %p119
        %p498 = pneg %p116
        %p499 = pneg %p140
        %p500 = pneg %p137
        %p501 = pneg %p161
        %p502 = pneg %p158
        %p503 = pneg %p182
        %p504 = pneg %p179
        %p505 = pneg %p203
        %p506 = pneg %p200
        %p507 = pneg %p224
        %p508 = pneg %p221
        %p509 = pneg %p245
        %p510 = pneg %p242
        %p511 = pneg %p266
        %p512 = pneg %p263
        %p513 = pneg %p287
        %p514 = pneg %p284
        %p515 = pneg %p308
        %p516 = pneg %p305
        %p517 = pneg %p329
        %p518 = pneg %p326
        %p519 = pneg %p350
        %p520 = pneg %p347
        %p521 = pneg %p371
        %p522 = pneg %p368
        %p523 = pneg %p397
        %p524 = pneg %p394
        %s525 = sand.u32 %s384, 1
        %s526 = scalar_lea.sflag [#allocation5], %s525
        %s527 = sand.u32 %s384, 1
        %s528 = smul.addr %s527, 16
        %s529 = scalar_lea.vmem [#allocation4], %s528
        %p530 = scmp.lt.s32.totalorder %s30, 1
        %s531 = scalar_select %p530, %s30, 1
        %s532 = smul.addr %s531, 2
        %s533 = smul.addr %s532, 4
        %s534 = scalar_lea.vmem %s0, %s533
        %p535 = scmp.lt.s32.totalorder %s30, 1
        %s536 = scalar_select %p535, %s30, 1
        %s537 = smul.addr %s536, 2
        %s538 = smul.addr %s537, 4
        %s539 = scalar_lea.vmem %s1, %s538
        %540 = vst [vmem:[#allocation2] sm:$0xff] 0.0
        %541 = vst [vmem:[#allocation2 + $0x8] sm:$0xff] 0.0
        %542 = vst [vmem:[#allocation2 + $0x10] sm:$0xff] 0.0
        %543 = vst [vmem:[#allocation2 + $0x18] sm:$0xff] 0.0
        %544 = vst [vmem:[#allocation2 + $0x20] sm:$0xff] 0.0
        %545 = vst [vmem:[#allocation2 + $0x28] sm:$0xff] 0.0
        %546 = vst [vmem:[#allocation2 + $0x30] sm:$0xff] 0.0
        %547 = vst [vmem:[#allocation2 + $0x38] sm:$0xff] 0.0
        %548 = vst [vmem:[#allocation2 + $0x40] sm:$0xff] 0.0
        %549 = vst [vmem:[#allocation2 + $0x48] sm:$0xff] 0.0
        %550 = vst [vmem:[#allocation2 + $0x50] sm:$0xff] 0.0
        %551 = vst [vmem:[#allocation2 + $0x58] sm:$0xff] 0.0
        %552 = vst [vmem:[#allocation2 + $0x60] sm:$0xff] 0.0
        %553 = vst [vmem:[#allocation2 + $0x68] sm:$0xff] 0.0
        %554 = vst [vmem:[#allocation2 + $0x70] sm:$0xff] 0.0
        %555 = vst [vmem:[#allocation2 + $0x78] sm:$0xff] 0.0
        %556 = vst [vmem:[#allocation3] sm:$0xff] 0.0
        %557 = vst [vmem:[#allocation3 + $0x8] sm:$0xff] 0.0
        %558 = vst [vmem:[#allocation3 + $0x10] sm:$0xff] 0.0
        %559 = vst [vmem:[#allocation3 + $0x18] sm:$0xff] 0.0
        %560 = vst [vmem:[#allocation3 + $0x20] sm:$0xff] 0.0
        %561 = vst [vmem:[#allocation3 + $0x28] sm:$0xff] 0.0
        %562 = vst [vmem:[#allocation3 + $0x30] sm:$0xff] 0.0
        %563 = vst [vmem:[#allocation3 + $0x38] sm:$0xff] 0.0
        %564 = vst [vmem:[#allocation3 + $0x40] sm:$0xff] 0.0
        %565 = vst [vmem:[#allocation3 + $0x48] sm:$0xff] 0.0
        %566 = vst [vmem:[#allocation3 + $0x50] sm:$0xff] 0.0
        %567 = vst [vmem:[#allocation3 + $0x58] sm:$0xff] 0.0
        %568 = vst [vmem:[#allocation3 + $0x60] sm:$0xff] 0.0
        %569 = vst [vmem:[#allocation3 + $0x68] sm:$0xff] 0.0
        %570 = vst [vmem:[#allocation3 + $0x70] sm:$0xff] 0.0
        %571 = vst [vmem:[#allocation3 + $0x78] sm:$0xff] 0.0
        %572 = vst [vmem:[#allocation3 + $0x80] sm:$0xff] 0.0
        %573 = vst [vmem:[#allocation3 + $0x88] sm:$0xff] 0.0
        %574 = vst [vmem:[#allocation3 + $0x90] sm:$0xff] 0.0
        %575 = vst [vmem:[#allocation3 + $0x98] sm:$0xff] 0.0
        %576 = vst [vmem:[#allocation3 + $0xa0] sm:$0xff] 0.0
        %577 = vst [vmem:[#allocation3 + $0xa8] sm:$0xff] 0.0
        %578 = vst [vmem:[#allocation3 + $0xb0] sm:$0xff] 0.0
        %579 = vst [vmem:[#allocation3 + $0xb8] sm:$0xff] 0.0
        %580 = vst [vmem:[#allocation3 + $0xc0] sm:$0xff] 0.0
        %581 = vst [vmem:[#allocation3 + $0xc8] sm:$0xff] 0.0
        %582 = vst [vmem:[#allocation3 + $0xd0] sm:$0xff] 0.0
        %583 = vst [vmem:[#allocation3 + $0xd8] sm:$0xff] 0.0
        %584 = vst [vmem:[#allocation3 + $0xe0] sm:$0xff] 0.0
        %585 = vst [vmem:[#allocation3 + $0xe8] sm:$0xff] 0.0
        %586 = vst [vmem:[#allocation3 + $0xf0] sm:$0xff] 0.0
        %587 = vst [vmem:[#allocation3 + $0xf8] sm:$0xff] 0.0
        %588 = vst [vmem:[#allocation3 + $0x100] sm:$0xff] 0.0
        %589 = vst [vmem:[#allocation3 + $0x108] sm:$0xff] 0.0
        %590 = vst [vmem:[#allocation3 + $0x110] sm:$0xff] 0.0
        %591 = vst [vmem:[#allocation3 + $0x118] sm:$0xff] 0.0
        %592 = vst [vmem:[#allocation3 + $0x120] sm:$0xff] 0.0
        %593 = vst [vmem:[#allocation3 + $0x128] sm:$0xff] 0.0
        %594 = vst [vmem:[#allocation3 + $0x130] sm:$0xff] 0.0
        %595 = vst [vmem:[#allocation3 + $0x138] sm:$0xff] 0.0
        %596 = vst [vmem:[#allocation3 + $0x140] sm:$0xff] 0.0
        %597 = vst [vmem:[#allocation3 + $0x148] sm:$0xff] 0.0
        %598 = vst [vmem:[#allocation3 + $0x150] sm:$0xff] 0.0
        %599 = vst [vmem:[#allocation3 + $0x158] sm:$0xff] 0.0
        %600 = vst [vmem:[#allocation3 + $0x160] sm:$0xff] 0.0
        %601 = vst [vmem:[#allocation3 + $0x168] sm:$0xff] 0.0
        %602 = vst [vmem:[#allocation3 + $0x170] sm:$0xff] 0.0
        %603 = vst [vmem:[#allocation3 + $0x178] sm:$0xff] 0.0
        %604 = vst [vmem:[#allocation3 + $0x180] sm:$0xff] 0.0
        %605 = vst [vmem:[#allocation3 + $0x188] sm:$0xff] 0.0
        %606 = vst [vmem:[#allocation3 + $0x190] sm:$0xff] 0.0
        %607 = vst [vmem:[#allocation3 + $0x198] sm:$0xff] 0.0
        %608 = vst [vmem:[#allocation3 + $0x1a0] sm:$0xff] 0.0
        %609 = vst [vmem:[#allocation3 + $0x1a8] sm:$0xff] 0.0
        %610 = vst [vmem:[#allocation3 + $0x1b0] sm:$0xff] 0.0
        %611 = vst [vmem:[#allocation3 + $0x1b8] sm:$0xff] 0.0
        %612 = vst [vmem:[#allocation3 + $0x1c0] sm:$0xff] 0.0
        %613 = vst [vmem:[#allocation3 + $0x1c8] sm:$0xff] 0.0
        %614 = vst [vmem:[#allocation3 + $0x1d0] sm:$0xff] 0.0
        %615 = vst [vmem:[#allocation3 + $0x1d8] sm:$0xff] 0.0
        %616 = vst [vmem:[#allocation3 + $0x1e0] sm:$0xff] 0.0
        %617 = vst [vmem:[#allocation3 + $0x1e8] sm:$0xff] 0.0
        %618 = vst [vmem:[#allocation3 + $0x1f0] sm:$0xff] 0.0
        %619 = vst [vmem:[#allocation3 + $0x1f8] sm:$0xff] 0.0
        %620 = vst [vmem:[#allocation3 + $0x200] sm:$0xff] 0.0
        %621 = vst [vmem:[#allocation3 + $0x208] sm:$0xff] 0.0
        %622 = vst [vmem:[#allocation3 + $0x210] sm:$0xff] 0.0
        %623 = vst [vmem:[#allocation3 + $0x218] sm:$0xff] 0.0
        %624 = vst [vmem:[#allocation3 + $0x220] sm:$0xff] 0.0
        %625 = vst [vmem:[#allocation3 + $0x228] sm:$0xff] 0.0
        %626 = vst [vmem:[#allocation3 + $0x230] sm:$0xff] 0.0
        %627 = vst [vmem:[#allocation3 + $0x238] sm:$0xff] 0.0
        %v628 = vld [vmem:[%s2] ss:$2 sm:$0x3]
        %s629 = scalar_lea.vmem %s2, 1
        %v630 = vld [vmem:[%s629] ss:$2 sm:$0x3]
        %v631 = vld [vmem:[%s534] sm:$0x77]
        %v632 = vld [vmem:[%s539] sm:$0xff]
        %v634 = vcombine.high %v631, %v631
        %636 = vst [vmem:[#allocation2 + $0x8] sm:$0x7] %v631
        %637 = vst [vmem:[#allocation2 + $0x10] sm:$0x7] %v634
        %v638 = vld [vmem:[#allocation2] sm:$0xff]
        %v639 = vld [vmem:[#allocation2 + $0x8] sm:$0xff]
        %v640 = vld [vmem:[#allocation2 + $0x10] sm:$0xff]
        %v642 = vlaneseq
        %v643 = vshrl.u32 %v642, 7
        %v644 = vsub.s32 0, %v643
        %v645 = vrot.slane %v628, %v644
        %v646 = vlaneseq
        %v647 = vshrl.u32 %v646, 7
        %v648 = vsub.s32 1, %v647
        %v649 = vrot.slane %v628, %v648
        %650 = vrot.lane.b32.xlu0 %v645, 111
        %v651 = vpop.permute.xlu0 %650
        %652 = vrot.lane.b32.xlu0 %v649, 111
        %v653 = vpop.permute.xlu0 %652
        %vm654 = vcmask 908288
        %v655 = vsel %vm654, %v651, %v653
        %v659 = vmul.f32 %v638, %v651
        %v660 = vmul.f32 %v639, %v655
        %v661 = vmul.f32 %v640, %v653
        %665 = vrot.lane.b32.xlu0 %v659, 17
        %v666 = vpop.permute.xlu0 %665
        %667 = vrot.lane.b32.xlu0 %v660, 17
        %v668 = vpop.permute.xlu0 %667
        %669 = vrot.lane.b32.xlu0 %v661, 17
        %v670 = vpop.permute.xlu0 %669
        %vm671 = vcmask 138240
        %v672 = vsel %vm671, %v666, %v668
        %v673 = vsel %vm671, %v668, %v670
        %676 = vst [vmem:[#allocation3] sm:$0xff] %v672
        %677 = vst [vmem:[#allocation3 + $0x8] sm:$0xff] %v673
        %v678 = vld [vmem:[#allocation2] sm:$0xff]
        %v679 = vld [vmem:[#allocation2 + $0x8] sm:$0xff]
        %v680 = vld [vmem:[#allocation2 + $0x10] sm:$0xff]
        %684 = vrot.lane.b32.xlu0 %v678, 16
        %v685 = vpop.permute.xlu0 %684
        %686 = vrot.lane.b32.xlu0 %v679, 16
        %v687 = vpop.permute.xlu0 %686
        %688 = vrot.lane.b32.xlu0 %v680, 16
        %v689 = vpop.permute.xlu0 %688
        %vm690 = vcmask 130048
        %v691 = vsel %vm690, %v685, %v687
        %v692 = vsel %vm690, %v687, %v689
        %695 = vst [vmem:[#allocation3 + $0x10] sm:$0xff] %v691
        %696 = vst [vmem:[#allocation3 + $0x18] sm:$0xff] %v692
        %v697 = vld [vmem:[#allocation2] sm:$0xff]
        %v698 = vld [vmem:[#allocation2 + $0x8] sm:$0xff]
        %v699 = vld [vmem:[#allocation2 + $0x10] sm:$0xff]
        %v701 = vlaneseq
        %v702 = vshrl.u32 %v701, 7
        %v703 = vsub.s32 0, %v702
        %v704 = vrot.slane %v630, %v703
        %v705 = vlaneseq
        %v706 = vshrl.u32 %v705, 7
        %v707 = vsub.s32 1, %v706
        %v708 = vrot.slane %v630, %v707
        %709 = vrot.lane.b32.xlu0 %v704, 113
        %v710 = vpop.permute.xlu0 %709
        %711 = vrot.lane.b32.xlu0 %v708, 113
        %v712 = vpop.permute.xlu0 %711
        %vm713 = vcmask 924672
        %v714 = vsel %vm713, %v710, %v712
        %v718 = vmul.f32 %v697, %v710
        %v719 = vmul.f32 %v698, %v714
        %v720 = vmul.f32 %v699, %v712
        %724 = vrot.lane.b32.xlu0 %v718, 15
        %v725 = vpop.permute.xlu0 %724
        %726 = vrot.lane.b32.xlu0 %v719, 15
        %v727 = vpop.permute.xlu0 %726
        %728 = vrot.lane.b32.xlu0 %v720, 15
        %v729 = vpop.permute.xlu0 %728
        %vm730 = vcmask 121856
        %v731 = vsel %vm730, %v725, %v727
        %v732 = vsel %vm730, %v727, %v729
        %735 = vst [vmem:[#allocation3 + $0x20] sm:$0xff] %v731
        %736 = vst [vmem:[#allocation3 + $0x28] sm:$0xff] %v732
        %v737 = vld [vmem:[#allocation2] sm:$0xff]
        %v738 = vld [vmem:[#allocation2 + $0x8] sm:$0xff]
        %v739 = vld [vmem:[#allocation2 + $0x10] sm:$0xff]
        %740 = vrot.lane.b32.xlu0 %v645, 127
        %v741 = vpop.permute.xlu0 %740
        %742 = vrot.lane.b32.xlu0 %v649, 127
        %v743 = vpop.permute.xlu0 %742
        %vm744 = vcmask 1039360
        %v745 = vsel %vm744, %v741, %v743
        %v749 = vmul.f32 %v737, %v741
        %v750 = vmul.f32 %v738, %v745
        %v751 = vmul.f32 %v739, %v743
        %755 = vrot.lane.b32.xlu0 %v749, 1
        %v756 = vpop.permute.xlu0 %755
        %757 = vrot.lane.b32.xlu0 %v750, 1
        %v758 = vpop.permute.xlu0 %757
        %759 = vrot.lane.b32.xlu0 %v751, 1
        %v760 = vpop.permute.xlu0 %759
        %vm761 = vcmask 7168
        %v762 = vsel %vm761, %v756, %v758
        %v763 = vsel %vm761, %v758, %v760
        %766 = vst [vmem:[#allocation3 + $0x30] sm:$0xff] %v762
        %767 = vst [vmem:[#allocation3 + $0x38] sm:$0xff] %v763
        %v768 = vld [vmem:[#allocation2 + $0x8] sm:$0xff]
        %v769 = vld [vmem:[#allocation2 + $0x10] sm:$0xff]
        %770 = vst [vmem:[#allocation3 + $0x40] sm:$0xff] %v768
        %771 = vst [vmem:[#allocation3 + $0x48] sm:$0xff] %v769
        %v772 = vld [vmem:[#allocation2 + $0x8] sm:$0xff]
        %v773 = vld [vmem:[#allocation2 + $0x10] sm:$0xff]
        %v774 = vld [vmem:[#allocation2 + $0x18] sm:$0xff]
        %775 = vrot.lane.b32.xlu0 %v704, 1
        %v776 = vpop.permute.xlu0 %775
        %777 = vrot.lane.b32.xlu0 %v708, 1
        %v778 = vpop.permute.xlu0 %777
        %v779 = vsel %vm761, %v776, %v778
        %v783 = vmul.f32 %v772, %v776
        %v784 = vmul.f32 %v773, %v779
        %v785 = vmul.f32 %v774, %v778
        %789 = vrot.lane.b32.xlu0 %v783, 127
        %v790 = vpop.permute.xlu0 %789
        %791 = vrot.lane.b32.xlu0 %v784, 127
        %v792 = vpop.permute.xlu0 %791
        %793 = vrot.lane.b32.xlu0 %v785, 127
        %v794 = vpop.permute.xlu0 %793
        %v795 = vsel %vm744, %v790, %v792
        %v796 = vsel %vm744, %v792, %v794
        %799 = vst [vmem:[#allocation3 + $0x50] sm:$0xff] %v795
        %800 = vst [vmem:[#allocation3 + $0x58] sm:$0xff] %v796
        %v801 = vld [vmem:[#allocation2 + $0x8] sm:$0xff]
        %v802 = vld [vmem:[#allocation2 + $0x10] sm:$0xff]
        %v803 = vld [vmem:[#allocation2 + $0x18] sm:$0xff]
        %804 = vrot.lane.b32.xlu0 %v645, 15
        %v805 = vpop.permute.xlu0 %804
        %806 = vrot.lane.b32.xlu0 %v649, 15
        %v807 = vpop.permute.xlu0 %806
        %v808 = vsel %vm730, %v805, %v807
        %v812 = vmul.f32 %v801, %v805
        %v813 = vmul.f32 %v802, %v808
        %v814 = vmul.f32 %v803, %v807
        %818 = vrot.lane.b32.xlu0 %v812, 113
        %v819 = vpop.permute.xlu0 %818
        %820 = vrot.lane.b32.xlu0 %v813, 113
        %v821 = vpop.permute.xlu0 %820
        %822 = vrot.lane.b32.xlu0 %v814, 113
        %v823 = vpop.permute.xlu0 %822
        %v824 = vsel %vm713, %v819, %v821
        %v825 = vsel %vm713, %v821, %v823
        %828 = vst [vmem:[#allocation3 + $0x60] sm:$0xff] %v824
        %829 = vst [vmem:[#allocation3 + $0x68] sm:$0xff] %v825
        %v830 = vld [vmem:[#allocation2 + $0x8] sm:$0xff]
        %v831 = vld [vmem:[#allocation2 + $0x10] sm:$0xff]
        %v832 = vld [vmem:[#allocation2 + $0x18] sm:$0xff]
        %836 = vrot.lane.b32.xlu0 %v830, 112
        %v837 = vpop.permute.xlu0 %836
        %838 = vrot.lane.b32.xlu0 %v831, 112
        %v839 = vpop.permute.xlu0 %838
        %840 = vrot.lane.b32.xlu0 %v832, 112
        %v841 = vpop.permute.xlu0 %840
        %vm842 = vcmask 916480
        %v843 = vsel %vm842, %v837, %v839
        %v844 = vsel %vm842, %v839, %v841
        %847 = vst [vmem:[#allocation3 + $0x70] sm:$0xff] %v843
        %848 = vst [vmem:[#allocation3 + $0x78] sm:$0xff] %v844
        %v849 = vld [vmem:[#allocation2 + $0x8] sm:$0xff]
        %v850 = vld [vmem:[#allocation2 + $0x10] sm:$0xff]
        %v851 = vld [vmem:[#allocation2 + $0x18] sm:$0xff]
        %852 = vrot.lane.b32.xlu0 %v704, 17
        %v853 = vpop.permute.xlu0 %852
        %854 = vrot.lane.b32.xlu0 %v708, 17
        %v855 = vpop.permute.xlu0 %854
        %v856 = vsel %vm671, %v853, %v855
        %v860 = vmul.f32 %v849, %v853
        %v861 = vmul.f32 %v850, %v856
        %v862 = vmul.f32 %v851, %v855
        %866 = vrot.lane.b32.xlu0 %v860, 111
        %v867 = vpop.permute.xlu0 %866
        %868 = vrot.lane.b32.xlu0 %v861, 111
        %v869 = vpop.permute.xlu0 %868
        %870 = vrot.lane.b32.xlu0 %v862, 111
        %v871 = vpop.permute.xlu0 %870
        %v872 = vsel %vm654, %v867, %v869
        %v873 = vsel %vm654, %v869, %v871
        %876 = vst [vmem:[#allocation3 + $0x80] sm:$0xff] %v872
        %877 = vst [vmem:[#allocation3 + $0x88] sm:$0xff] %v873
        %v878 = vld [vmem:[%s3] sm:$0xff]
        %v879 = vld [vmem:[%s3 + $0x8] sm:$0xff]
        %v880 = vld [vmem:[%s3 + $0x10] sm:$0xff]
        %v881 = vld [vmem:[%s3 + $0x18] sm:$0xff]
        %v882 = vld [vmem:[%s3 + $0x20] sm:$0xff]
        %v883 = vld [vmem:[%s3 + $0x28] sm:$0xff]
        %v884 = vld [vmem:[%s3 + $0x30] sm:$0xff]
        %v885 = vld [vmem:[%s3 + $0x38] sm:$0xff]
        %v886 = vld [vmem:[%s3 + $0x40] sm:$0xff]
        %v887 = vld [vmem:[%s3 + $0x48] sm:$0xff]
        %v888 = vld [vmem:[%s3 + $0x50] sm:$0xff]
        %v889 = vld [vmem:[%s3 + $0x58] sm:$0xff]
        %v890 = vld [vmem:[#allocation3] sm:$0xff]
        %v891 = vld [vmem:[#allocation3 + $0x8] sm:$0xff]
        %v892 = vld [vmem:[#allocation3 + $0x10] sm:$0xff]
        %v893 = vld [vmem:[#allocation3 + $0x18] sm:$0xff]
        %v894 = vld [vmem:[#allocation3 + $0x20] sm:$0xff]
        %v895 = vld [vmem:[#allocation3 + $0x28] sm:$0xff]
        %v896 = vld [vmem:[#allocation3 + $0x30] sm:$0xff]
        %v897 = vld [vmem:[#allocation3 + $0x38] sm:$0xff]
        %v898 = vld [vmem:[#allocation3 + $0x40] sm:$0xff]
        %v899 = vld [vmem:[#allocation3 + $0x48] sm:$0xff]
        %v900 = vld [vmem:[#allocation3 + $0x50] sm:$0xff]
        %v901 = vld [vmem:[#allocation3 + $0x58] sm:$0xff]
        %v902 = vld [vmem:[#allocation3 + $0x60] sm:$0xff]
        %v903 = vld [vmem:[#allocation3 + $0x68] sm:$0xff]
        %v904 = vld [vmem:[#allocation3 + $0x70] sm:$0xff]
        %v905 = vld [vmem:[#allocation3 + $0x78] sm:$0xff]
        %v906 = vld [vmem:[#allocation3 + $0x80] sm:$0xff]
        %v907 = vld [vmem:[#allocation3 + $0x88] sm:$0xff]
        %v908 = vld [vmem:[%s4] sm:$0xff]
        %v909 = vld [vmem:[%s4 + $0x8] sm:$0xff]
        %v910 = vld [vmem:[%s4 + $0x10] sm:$0xff]
        %v911 = vld [vmem:[%s4 + $0x18] sm:$0xff]
        %v912 = vld [vmem:[%s4 + $0x20] sm:$0xff]
        %v913 = vld [vmem:[%s4 + $0x28] sm:$0xff]
        %v914 = vld [vmem:[%s4 + $0x30] sm:$0xff]
        %v915 = vld [vmem:[%s4 + $0x38] sm:$0xff]
        %v916 = vld [vmem:[%s4 + $0x40] sm:$0xff]
        %v917 = vld [vmem:[%s4 + $0x48] sm:$0xff]
        %v918 = vld [vmem:[%s4 + $0x50] sm:$0xff]
        %v919 = vld [vmem:[%s4 + $0x58] sm:$0xff]
        %921 = vset.pattern.permute.xlu0 0
        %922 = vperm.xlu0 %921, %v908
        %v923 = vpop.permute.xlu0 %922
        %926 = vset.pattern.permute.xlu0 0
        %927 = vperm.xlu0 %926, %v909
        %v928 = vpop.permute.xlu0 %927
        %931 = vset.pattern.permute.xlu0 0
        %932 = vperm.xlu0 %931, %v910
        %v933 = vpop.permute.xlu0 %932
        %936 = vset.pattern.permute.xlu0 0
        %937 = vperm.xlu0 %936, %v911
        %v938 = vpop.permute.xlu0 %937
        %941 = vset.pattern.permute.xlu0 0
        %942 = vperm.xlu0 %941, %v912
        %v943 = vpop.permute.xlu0 %942
        %946 = vset.pattern.permute.xlu0 0
        %947 = vperm.xlu0 %946, %v913
        %v948 = vpop.permute.xlu0 %947
        %951 = vset.pattern.permute.xlu0 0
        %952 = vperm.xlu0 %951, %v914
        %v953 = vpop.permute.xlu0 %952
        %956 = vset.pattern.permute.xlu0 0
        %957 = vperm.xlu0 %956, %v915
        %v958 = vpop.permute.xlu0 %957
        %961 = vset.pattern.permute.xlu0 0
        %962 = vperm.xlu0 %961, %v916
        %v963 = vpop.permute.xlu0 %962
        %966 = vset.pattern.permute.xlu0 0
        %967 = vperm.xlu0 %966, %v917
        %v968 = vpop.permute.xlu0 %967
        %971 = vset.pattern.permute.xlu0 0
        %972 = vperm.xlu0 %971, %v918
        %v973 = vpop.permute.xlu0 %972
        %976 = vset.pattern.permute.xlu0 0
        %977 = vperm.xlu0 %976, %v919
        %v978 = vpop.permute.xlu0 %977
        %vm980 = vcmask 588800
        %v982 = vsel %vm980, %v878, 0
        %v985 = vsel %vm980, %v879, 0
        %v988 = vsel %vm980, %v880, 0
        %v991 = vsel %vm980, %v881, 0
        %v994 = vsel %vm980, %v882, 0
        %v997 = vsel %vm980, %v883, 0
        %v1000 = vsel %vm980, %v884, 0
        %v1003 = vsel %vm980, %v885, 0
        %v1006 = vsel %vm980, %v886, 0
        %v1009 = vsel %vm980, %v887, 0
        %v1012 = vsel %vm980, %v888, 0
        %v1015 = vsel %vm980, %v889, 0
        %1017 = vmatprep.subr.mxu0 %v891
        %1018 = vmatpush1.msra.mxu0 %v890
        %1019 = vmatprep.subr.mxu0 %v893
        %1020 = vmatpush1.msra.mxu0 %v892
        %1021 = vmatprep.subr.mxu0 %v895
        %1022 = vmatpush1.msra.mxu0 %v894
        %1023 = vmatprep.subr.mxu0 %v897
        %1024 = vmatpush1.msra.mxu0 %v896
        %1025 = vmatprep.subr.mxu0 %v899
        %1026 = vmatpush1.msra.mxu0 %v898
        %1027 = vmatprep.subr.mxu0 %v901
        %1028 = vmatpush1.msra.mxu0 %v900
        %1029 = vmatprep.subr.mxu0 %v903
        %1030 = vmatpush1.msra.mxu0 %v902
        %1031 = vmatprep.subr.mxu0 %v905
        %1032 = vmatpush1.msra.mxu0 %v904
        %1033 = vmatprep.subr.mxu0 %v907
        %1034 = vmatpush1.msra.mxu0 %v906
        %1035 = vmatprep.subr.mxu0 0.0
        %1036 = vmatpush1.msra.mxu0 0.0
        %1037 = vmatprep.subr.mxu0 0.0
        %1038 = vmatpush1.msra.mxu0 0.0
        %1039 = vmatprep.subr.mxu0 0.0
        %1040 = vmatpush1.msra.mxu0 0.0
        %1041 = vmatprep.subr.mxu0 0.0
        %1042 = vmatpush1.msra.mxu0 0.0
        %1043 = vmatprep.subr.mxu0 0.0
        %1044 = vmatpush1.msra.mxu0 0.0
        %1045 = vmatprep.subr.mxu0 0.0
        %1046 = vmatpush1.msra.mxu0 0.0
        %1047 = vmatprep.subr.mxu0 0.0
        %1048 = vmatpush1.msra.mxu0 0.0
        %1049 = vmatprep.subr.mxu0 0.0
        %1050 = vmatpush1.msra.mxu0 0.0
        %1051 = vmatprep.subr.mxu0 0.0
        %1052 = vmatpush1.msra.mxu0 0.0
        %1053 = vmatprep.subr.mxu0 0.0
        %1054 = vmatpush1.msra.mxu0 0.0
        %1055 = vmatprep.subr.mxu0 0.0
        %1056 = vmatpush1.msra.mxu0 0.0
        %1057 = vmatprep.subr.mxu0 0.0
        %1058 = vmatpush1.msra.mxu0 0.0
        %1059 = vmatprep.subr.mxu0 0.0
        %1060 = vmatpush1.msra.mxu0 0.0
        %1061 = vmatprep.subr.mxu0 0.0
        %1062 = vmatpush1.msra.mxu0 0.0
        %1063 = vmatprep.subr.mxu0 0.0
        %1064 = vmatpush1.msra.mxu0 0.0
        %1065 = vmatprep.subr.mxu0 0.0
        %1066 = vmatpush1.msra.mxu0 0.0
        %1067 = vmatprep.subr.mxu0 0.0
        %1068 = vmatpush1.msra.mxu0 0.0
        %1069 = vmatprep.subr.mxu0 0.0
        %1070 = vmatpush1.msra.mxu0 0.0
        %1071 = vmatprep.subr.mxu0 0.0
        %1072 = vmatpush1.msra.mxu0 0.0
        %1073 = vmatprep.subr.mxu0 0.0
        %1074 = vmatpush1.msra.mxu0 0.0
        %1075 = vmatprep.subr.mxu0 0.0
        %1076 = vmatpush1.msra.mxu0 0.0
        %1077 = vmatprep.subr.mxu0 0.0
        %1078 = vmatpush1.msra.mxu0 0.0
        %1079 = vmatprep.subr.mxu0 0.0
        %1080 = vmatpush1.msra.mxu0 0.0
        %1081 = vmatprep.mubr.f32.mxu0 0.0
        %1082 = vmatmul.mubr.f32.gmra.mrb[0].mxu0 %v982
        %v1083 = vpop.f32.mrb[0].mxu0
        %v1084 = vadd.f32 %v923, %v1083
        %v1085 = vpop.f32.mrb[0].mxu0
        %v1086 = vadd.f32 %v923, %v1085
        %1087 = vmatprep.mubr.f32.mxu0 0.0
        %1088 = vmatmul.mubr.f32.gmra.mrb[0].mxu0 %v985
        %v1089 = vpop.f32.mrb[0].mxu0
        %v1090 = vadd.f32 %v928, %v1089
        %v1091 = vpop.f32.mrb[0].mxu0
        %v1092 = vadd.f32 %v928, %v1091
        %1093 = vmatprep.mubr.f32.mxu0 0.0
        %1094 = vmatmul.mubr.f32.gmra.mrb[0].mxu0 %v988
        %v1095 = vpop.f32.mrb[0].mxu0
        %v1096 = vadd.f32 %v933, %v1095
        %v1097 = vpop.f32.mrb[0].mxu0
        %v1098 = vadd.f32 %v933, %v1097
        %1099 = vmatprep.mubr.f32.mxu0 0.0
        %1100 = vmatmul.mubr.f32.gmra.mrb[0].mxu0 %v991
        %v1101 = vpop.f32.mrb[0].mxu0
        %v1102 = vadd.f32 %v938, %v1101
        %v1103 = vpop.f32.mrb[0].mxu0
        %v1104 = vadd.f32 %v938, %v1103
        %1105 = vmatprep.mubr.f32.mxu0 0.0
        %1106 = vmatmul.mubr.f32.gmra.mrb[0].mxu0 %v994
        %v1107 = vpop.f32.mrb[0].mxu0
        %v1108 = vadd.f32 %v943, %v1107
        %v1109 = vpop.f32.mrb[0].mxu0
        %v1110 = vadd.f32 %v943, %v1109
        %1111 = vmatprep.mubr.f32.mxu0 0.0
        %1112 = vmatmul.mubr.f32.gmra.mrb[0].mxu0 %v997
        %v1113 = vpop.f32.mrb[0].mxu0
        %v1114 = vadd.f32 %v948, %v1113
        %v1115 = vpop.f32.mrb[0].mxu0
        %v1116 = vadd.f32 %v948, %v1115
        %1117 = vmatprep.mubr.f32.mxu0 0.0
        %1118 = vmatmul.mubr.f32.gmra.mrb[0].mxu0 %v1000
        %v1119 = vpop.f32.mrb[0].mxu0
        %v1120 = vadd.f32 %v953, %v1119
        %v1121 = vpop.f32.mrb[0].mxu0
        %v1122 = vadd.f32 %v953, %v1121
        %1123 = vmatprep.mubr.f32.mxu0 0.0
        %1124 = vmatmul.mubr.f32.gmra.mrb[0].mxu0 %v1003
        %v1125 = vpop.f32.mrb[0].mxu0
        %v1126 = vadd.f32 %v958, %v1125
        %v1127 = vpop.f32.mrb[0].mxu0
        %v1128 = vadd.f32 %v958, %v1127
        %1129 = vmatprep.mubr.f32.mxu0 0.0
        %1130 = vmatmul.mubr.f32.gmra.mrb[0].mxu0 %v1006
        %v1131 = vpop.f32.mrb[0].mxu0
        %v1132 = vadd.f32 %v963, %v1131
        %v1133 = vpop.f32.mrb[0].mxu0
        %v1134 = vadd.f32 %v963, %v1133
        %1135 = vmatprep.mubr.f32.mxu0 0.0
        %1136 = vmatmul.mubr.f32.gmra.mrb[0].mxu0 %v1009
        %v1137 = vpop.f32.mrb[0].mxu0
        %v1138 = vadd.f32 %v968, %v1137
        %v1139 = vpop.f32.mrb[0].mxu0
        %v1140 = vadd.f32 %v968, %v1139
        %1141 = vmatprep.mubr.f32.mxu0 0.0
        %1142 = vmatmul.mubr.f32.gmra.mrb[0].mxu0 %v1012
        %v1143 = vpop.f32.mrb[0].mxu0
        %v1144 = vadd.f32 %v973, %v1143
        %v1145 = vpop.f32.mrb[0].mxu0
        %v1146 = vadd.f32 %v973, %v1145
        %1147 = vmatprep.mubr.f32.mxu0 0.0
        %1148 = vmatmul.mubr.f32.gmra.mrb[0].mxu0 %v1015
        %v1149 = vpop.f32.mrb[0].mxu0
        %v1150 = vadd.f32 %v978, %v1149
        %v1151 = vpop.f32.mrb[0].mxu0
        %v1152 = vadd.f32 %v978, %v1151
        %1153 = vdwg.mxu0
        %v1154 = vmax.f32 %v1084, 0.0
        %v1155 = vmax.f32 %v1086, 0.0
        %v1156 = vmax.f32 %v1090, 0.0
        %v1157 = vmax.f32 %v1092, 0.0
        %v1158 = vmax.f32 %v1096, 0.0
        %v1159 = vmax.f32 %v1098, 0.0
        %v1160 = vmax.f32 %v1102, 0.0
        %v1161 = vmax.f32 %v1104, 0.0
        %v1162 = vmax.f32 %v1108, 0.0
        %v1163 = vmax.f32 %v1110, 0.0
        %v1164 = vmax.f32 %v1114, 0.0
        %v1165 = vmax.f32 %v1116, 0.0
        %v1166 = vmax.f32 %v1120, 0.0
        %v1167 = vmax.f32 %v1122, 0.0
        %v1168 = vmax.f32 %v1126, 0.0
        %v1169 = vmax.f32 %v1128, 0.0
        %v1170 = vmax.f32 %v1132, 0.0
        %v1171 = vmax.f32 %v1134, 0.0
        %v1172 = vmax.f32 %v1138, 0.0
        %v1173 = vmax.f32 %v1140, 0.0
        %v1174 = vmax.f32 %v1144, 0.0
        %v1175 = vmax.f32 %v1146, 0.0
        %v1176 = vmax.f32 %v1150, 0.0
        %v1177 = vmax.f32 %v1152, 0.0
        %1178 = vst [vmem:[#allocation2 + $0x8] sm:$0xff] %v1154
        %1179 = vst [vmem:[#allocation2 + $0x10] sm:$0xff] %v1155
        %1180 = vst [vmem:[#allocation2 + $0x28] sm:$0xff] %v1156
        %1181 = vst [vmem:[#allocation2 + $0x30] sm:$0xff] %v1157
        %1182 = vst [vmem:[#allocation2 + $0x48] sm:$0xff] %v1158
        %1183 = vst [vmem:[#allocation2 + $0x50] sm:$0xff] %v1159
        %1184 = vst [vmem:[#allocation2 + $0x68] sm:$0xff] %v1160
        %1185 = vst [vmem:[#allocation2 + $0x70] sm:$0xff] %v1161
        %v1186 = vld [vmem:[#allocation2] sm:$0xff]
        %v1187 = vld [vmem:[#allocation2 + $0x8] sm:$0xff]
        %v1188 = vld [vmem:[#allocation2 + $0x10] sm:$0xff]
        %v1189 = vld [vmem:[#allocation2 + $0x20] sm:$0xff]
        %v1190 = vld [vmem:[#allocation2 + $0x28] sm:$0xff]
        %v1191 = vld [vmem:[#allocation2 + $0x30] sm:$0xff]
        %v1192 = vld [vmem:[#allocation2 + $0x40] sm:$0xff]
        %v1193 = vld [vmem:[#allocation2 + $0x48] sm:$0xff]
        %v1194 = vld [vmem:[#allocation2 + $0x50] sm:$0xff]
        %v1195 = vld [vmem:[#allocation2 + $0x60] sm:$0xff]
        %v1196 = vld [vmem:[#allocation2 + $0x68] sm:$0xff]
        %v1197 = vld [vmem:[#allocation2 + $0x70] sm:$0xff]
        %v1198 = vmul.f32 %v1186, %v651
        %v1199 = vmul.f32 %v1187, %v655
        %v1200 = vmul.f32 %v1188, %v653
        %v1201 = vmul.f32 %v1189, %v651
        %v1202 = vmul.f32 %v1190, %v655
        %v1203 = vmul.f32 %v1191, %v653
        %v1204 = vmul.f32 %v1192, %v651
        %v1205 = vmul.f32 %v1193, %v655
        %v1206 = vmul.f32 %v1194, %v653
        %v1207 = vmul.f32 %v1195, %v651
        %v1208 = vmul.f32 %v1196, %v655
        %v1209 = vmul.f32 %v1197, %v653
        %1222 = vrot.lane.b32.xlu0 %v1198, 17
        %v1223 = vpop.permute.xlu0 %1222
        %1224 = vrot.lane.b32.xlu0 %v1199, 17
        %v1225 = vpop.permute.xlu0 %1224
        %1226 = vrot.lane.b32.xlu0 %v1200, 17
        %v1227 = vpop.permute.xlu0 %1226
        %1228 = vrot.lane.b32.xlu0 %v1201, 17
        %v1229 = vpop.permute.xlu0 %1228
        %1230 = vrot.lane.b32.xlu0 %v1202, 17
        %v1231 = vpop.permute.xlu0 %1230
        %1232 = vrot.lane.b32.xlu0 %v1203, 17
        %v1233 = vpop.permute.xlu0 %1232
        %1234 = vrot.lane.b32.xlu0 %v1204, 17
        %v1235 = vpop.permute.xlu0 %1234
        %1236 = vrot.lane.b32.xlu0 %v1205, 17
        %v1237 = vpop.permute.xlu0 %1236
        %1238 = vrot.lane.b32.xlu0 %v1206, 17
        %v1239 = vpop.permute.xlu0 %1238
        %1240 = vrot.lane.b32.xlu0 %v1207, 17
        %v1241 = vpop.permute.xlu0 %1240
        %1242 = vrot.lane.b32.xlu0 %v1208, 17
        %v1243 = vpop.permute.xlu0 %1242
        %1244 = vrot.lane.b32.xlu0 %v1209, 17
        %v1245 = vpop.permute.xlu0 %1244
        %v1246 = vsel %vm671, %v1223, %v1225
        %v1247 = vsel %vm671, %v1225, %v1227
        %v1248 = vsel %vm671, %v1229, %v1231
        %v1249 = vsel %vm671, %v1231, %v1233
        %v1250 = vsel %vm671, %v1235, %v1237
        %v1251 = vsel %vm671, %v1237, %v1239
        %v1252 = vsel %vm671, %v1241, %v1243
        %v1253 = vsel %vm671, %v1243, %v1245
        %1262 = vst [vmem:[#allocation3] sm:$0xff] %v1246
        %1263 = vst [vmem:[#allocation3 + $0x8] sm:$0xff] %v1247
        %1264 = vst [vmem:[#allocation3 + $0x10] sm:$0xff] %v1248
        %1265 = vst [vmem:[#allocation3 + $0x18] sm:$0xff] %v1249
        %1266 = vst [vmem:[#allocation3 + $0x20] sm:$0xff] %v1250
        %1267 = vst [vmem:[#allocation3 + $0x28] sm:$0xff] %v1251
        %1268 = vst [vmem:[#allocation3 + $0x30] sm:$0xff] %v1252
        %1269 = vst [vmem:[#allocation3 + $0x38] sm:$0xff] %v1253
        %v1270 = vld [vmem:[#allocation2] sm:$0xff]
        %v1271 = vld [vmem:[#allocation2 + $0x8] sm:$0xff]
        %v1272 = vld [vmem:[#allocation2 + $0x10] sm:$0xff]
        %v1273 = vld [vmem:[#allocation2 + $0x20] sm:$0xff]
        %v1274 = vld [vmem:[#allocation2 + $0x28] sm:$0xff]
        %v1275 = vld [vmem:[#allocation2 + $0x30] sm:$0xff]
        %v1276 = vld [vmem:[#allocation2 + $0x40] sm:$0xff]
        %v1277 = vld [vmem:[#allocation2 + $0x48] sm:$0xff]
        %v1278 = vld [vmem:[#allocation2 + $0x50] sm:$0xff]
        %v1279 = vld [vmem:[#allocation2 + $0x60] sm:$0xff]
        %v1280 = vld [vmem:[#allocation2 + $0x68] sm:$0xff]
        %v1281 = vld [vmem:[#allocation2 + $0x70] sm:$0xff]
        %1294 = vrot.lane.b32.xlu0 %v1270, 16
        %v1295 = vpop.permute.xlu0 %1294
        %1296 = vrot.lane.b32.xlu0 %v1271, 16
        %v1297 = vpop.permute.xlu0 %1296
        %1298 = vrot.lane.b32.xlu0 %v1272, 16
        %v1299 = vpop.permute.xlu0 %1298
        %1300 = vrot.lane.b32.xlu0 %v1273, 16
        %v1301 = vpop.permute.xlu0 %1300
        %1302 = vrot.lane.b32.xlu0 %v1274, 16
        %v1303 = vpop.permute.xlu0 %1302
        %1304 = vrot.lane.b32.xlu0 %v1275, 16
        %v1305 = vpop.permute.xlu0 %1304
        %1306 = vrot.lane.b32.xlu0 %v1276, 16
        %v1307 = vpop.permute.xlu0 %1306
        %1308 = vrot.lane.b32.xlu0 %v1277, 16
        %v1309 = vpop.permute.xlu0 %1308
        %1310 = vrot.lane.b32.xlu0 %v1278, 16
        %v1311 = vpop.permute.xlu0 %1310
        %1312 = vrot.lane.b32.xlu0 %v1279, 16
        %v1313 = vpop.permute.xlu0 %1312
        %1314 = vrot.lane.b32.xlu0 %v1280, 16
        %v1315 = vpop.permute.xlu0 %1314
        %1316 = vrot.lane.b32.xlu0 %v1281, 16
        %v1317 = vpop.permute.xlu0 %1316
        %v1318 = vsel %vm690, %v1295, %v1297
        %v1319 = vsel %vm690, %v1297, %v1299
        %v1320 = vsel %vm690, %v1301, %v1303
        %v1321 = vsel %vm690, %v1303, %v1305
        %v1322 = vsel %vm690, %v1307, %v1309
        %v1323 = vsel %vm690, %v1309, %v1311
        %v1324 = vsel %vm690, %v1313, %v1315
        %v1325 = vsel %vm690, %v1315, %v1317
        %1334 = vst [vmem:[#allocation3 + $0x40] sm:$0xff] %v1318
        %1335 = vst [vmem:[#allocation3 + $0x48] sm:$0xff] %v1319
        %1336 = vst [vmem:[#allocation3 + $0x50] sm:$0xff] %v1320
        %1337 = vst [vmem:[#allocation3 + $0x58] sm:$0xff] %v1321
        %1338 = vst [vmem:[#allocation3 + $0x60] sm:$0xff] %v1322
        %1339 = vst [vmem:[#allocation3 + $0x68] sm:$0xff] %v1323
        %1340 = vst [vmem:[#allocation3 + $0x70] sm:$0xff] %v1324
        %1341 = vst [vmem:[#allocation3 + $0x78] sm:$0xff] %v1325
        %v1342 = vld [vmem:[#allocation2] sm:$0xff]
        %v1343 = vld [vmem:[#allocation2 + $0x8] sm:$0xff]
        %v1344 = vld [vmem:[#allocation2 + $0x10] sm:$0xff]
        %v1345 = vld [vmem:[#allocation2 + $0x20] sm:$0xff]
        %v1346 = vld [vmem:[#allocation2 + $0x28] sm:$0xff]
        %v1347 = vld [vmem:[#allocation2 + $0x30] sm:$0xff]
        %v1348 = vld [vmem:[#allocation2 + $0x40] sm:$0xff]
        %v1349 = vld [vmem:[#allocation2 + $0x48] sm:$0xff]
        %v1350 = vld [vmem:[#allocation2 + $0x50] sm:$0xff]
        %v1351 = vld [vmem:[#allocation2 + $0x60] sm:$0xff]
        %v1352 = vld [vmem:[#allocation2 + $0x68] sm:$0xff]
        %v1353 = vld [vmem:[#allocation2 + $0x70] sm:$0xff]
        %v1354 = vmul.f32 %v1342, %v710
        %v1355 = vmul.f32 %v1343, %v714
        %v1356 = vmul.f32 %v1344, %v712
        %v1357 = vmul.f32 %v1345, %v710
        %v1358 = vmul.f32 %v1346, %v714
        %v1359 = vmul.f32 %v1347, %v712
        %v1360 = vmul.f32 %v1348, %v710
        %v1361 = vmul.f32 %v1349, %v714
        %v1362 = vmul.f32 %v1350, %v712
        %v1363 = vmul.f32 %v1351, %v710
        %v1364 = vmul.f32 %v1352, %v714
        %v1365 = vmul.f32 %v1353, %v712
        %1378 = vrot.lane.b32.xlu0 %v1354, 15
        %v1379 = vpop.permute.xlu0 %1378
        %1380 = vrot.lane.b32.xlu0 %v1355, 15
        %v1381 = vpop.permute.xlu0 %1380
        %1382 = vrot.lane.b32.xlu0 %v1356, 15
        %v1383 = vpop.permute.xlu0 %1382
        %1384 = vrot.lane.b32.xlu0 %v1357, 15
        %v1385 = vpop.permute.xlu0 %1384
        %1386 = vrot.lane.b32.xlu0 %v1358, 15
        %v1387 = vpop.permute.xlu0 %1386
        %1388 = vrot.lane.b32.xlu0 %v1359, 15
        %v1389 = vpop.permute.xlu0 %1388
        %1390 = vrot.lane.b32.xlu0 %v1360, 15
        %v1391 = vpop.permute.xlu0 %1390
        %1392 = vrot.lane.b32.xlu0 %v1361, 15
        %v1393 = vpop.permute.xlu0 %1392
        %1394 = vrot.lane.b32.xlu0 %v1362, 15
        %v1395 = vpop.permute.xlu0 %1394
        %1396 = vrot.lane.b32.xlu0 %v1363, 15
        %v1397 = vpop.permute.xlu0 %1396
        %1398 = vrot.lane.b32.xlu0 %v1364, 15
        %v1399 = vpop.permute.xlu0 %1398
        %1400 = vrot.lane.b32.xlu0 %v1365, 15
        %v1401 = vpop.permute.xlu0 %1400
        %v1402 = vsel %vm730, %v1379, %v1381
        %v1403 = vsel %vm730, %v1381, %v1383
        %v1404 = vsel %vm730, %v1385, %v1387
        %v1405 = vsel %vm730, %v1387, %v1389
        %v1406 = vsel %vm730, %v1391, %v1393
        %v1407 = vsel %vm730, %v1393, %v1395
        %v1408 = vsel %vm730, %v1397, %v1399
        %v1409 = vsel %vm730, %v1399, %v1401
        %1418 = vst [vmem:[#allocation3 + $0x80] sm:$0xff] %v1402
        %1419 = vst [vmem:[#allocation3 + $0x88] sm:$0xff] %v1403
        %1420 = vst [vmem:[#allocation3 + $0x90] sm:$0xff] %v1404
        %1421 = vst [vmem:[#allocation3 + $0x98] sm:$0xff] %v1405
        %1422 = vst [vmem:[#allocation3 + $0xa0] sm:$0xff] %v1406
        %1423 = vst [vmem:[#allocation3 + $0xa8] sm:$0xff] %v1407
        %1424 = vst [vmem:[#allocation3 + $0xb0] sm:$0xff] %v1408
        %1425 = vst [vmem:[#allocation3 + $0xb8] sm:$0xff] %v1409
        %v1426 = vld [vmem:[#allocation2] sm:$0xff]
        %v1427 = vld [vmem:[#allocation2 + $0x8] sm:$0xff]
        %v1428 = vld [vmem:[#allocation2 + $0x10] sm:$0xff]
        %v1429 = vld [vmem:[#allocation2 + $0x20] sm:$0xff]
        %v1430 = vld [vmem:[#allocation2 + $0x28] sm:$0xff]
        %v1431 = vld [vmem:[#allocation2 + $0x30] sm:$0xff]
        %v1432 = vld [vmem:[#allocation2 + $0x40] sm:$0xff]
        %v1433 = vld [vmem:[#allocation2 + $0x48] sm:$0xff]
        %v1434 = vld [vmem:[#allocation2 + $0x50] sm:$0xff]
        %v1435 = vld [vmem:[#allocation2 + $0x60] sm:$0xff]
        %v1436 = vld [vmem:[#allocation2 + $0x68] sm:$0xff]
        %v1437 = vld [vmem:[#allocation2 + $0x70] sm:$0xff]
        %v1438 = vmul.f32 %v1426, %v741
        %v1439 = vmul.f32 %v1427, %v745
        %v1440 = vmul.f32 %v1428, %v743
        %v1441 = vmul.f32 %v1429, %v741
        %v1442 = vmul.f32 %v1430, %v745
        %v1443 = vmul.f32 %v1431, %v743
        %v1444 = vmul.f32 %v1432, %v741
        %v1445 = vmul.f32 %v1433, %v745
        %v1446 = vmul.f32 %v1434, %v743
        %v1447 = vmul.f32 %v1435, %v741
        %v1448 = vmul.f32 %v1436, %v745
        %v1449 = vmul.f32 %v1437, %v743
        %1462 = vrot.lane.b32.xlu0 %v1438, 1
        %v1463 = vpop.permute.xlu0 %1462
        %1464 = vrot.lane.b32.xlu0 %v1439, 1
        %v1465 = vpop.permute.xlu0 %1464
        %1466 = vrot.lane.b32.xlu0 %v1440, 1
        %v1467 = vpop.permute.xlu0 %1466
        %1468 = vrot.lane.b32.xlu0 %v1441, 1
        %v1469 = vpop.permute.xlu0 %1468
        %1470 = vrot.lane.b32.xlu0 %v1442, 1
        %v1471 = vpop.permute.xlu0 %1470
        %1472 = vrot.lane.b32.xlu0 %v1443, 1
        %v1473 = vpop.permute.xlu0 %1472
        %1474 = vrot.lane.b32.xlu0 %v1444, 1
        %v1475 = vpop.permute.xlu0 %1474
        %1476 = vrot.lane.b32.xlu0 %v1445, 1
        %v1477 = vpop.permute.xlu0 %1476
        %1478 = vrot.lane.b32.xlu0 %v1446, 1
        %v1479 = vpop.permute.xlu0 %1478
        %1480 = vrot.lane.b32.xlu0 %v1447, 1
        %v1481 = vpop.permute.xlu0 %1480
        %1482 = vrot.lane.b32.xlu0 %v1448, 1
        %v1483 = vpop.permute.xlu0 %1482
        %1484 = vrot.lane.b32.xlu0 %v1449, 1
        %v1485 = vpop.permute.xlu0 %1484
        %v1486 = vsel %vm761, %v1463, %v1465
        %v1487 = vsel %vm761, %v1465, %v1467
        %v1488 = vsel %vm761, %v1469, %v1471
        %v1489 = vsel %vm761, %v1471, %v1473
        %v1490 = vsel %vm761, %v1475, %v1477
        %v1491 = vsel %vm761, %v1477, %v1479
        %v1492 = vsel %vm761, %v1481, %v1483
        %v1493 = vsel %vm761, %v1483, %v1485
        %1502 = vst [vmem:[#allocation3 + $0xc0] sm:$0xff] %v1486
        %1503 = vst [vmem:[#allocation3 + $0xc8] sm:$0xff] %v1487
        %1504 = vst [vmem:[#allocation3 + $0xd0] sm:$0xff] %v1488
        %1505 = vst [vmem:[#allocation3 + $0xd8] sm:$0xff] %v1489
        %1506 = vst [vmem:[#allocation3 + $0xe0] sm:$0xff] %v1490
        %1507 = vst [vmem:[#allocation3 + $0xe8] sm:$0xff] %v1491
        %1508 = vst [vmem:[#allocation3 + $0xf0] sm:$0xff] %v1492
        %1509 = vst [vmem:[#allocation3 + $0xf8] sm:$0xff] %v1493
        %v1510 = vld [vmem:[#allocation2 + $0x8] sm:$0xff]
        %v1511 = vld [vmem:[#allocation2 + $0x10] sm:$0xff]
        %v1512 = vld [vmem:[#allocation2 + $0x28] sm:$0xff]
        %v1513 = vld [vmem:[#allocation2 + $0x30] sm:$0xff]
        %v1514 = vld [vmem:[#allocation2 + $0x48] sm:$0xff]
        %v1515 = vld [vmem:[#allocation2 + $0x50] sm:$0xff]
        %v1516 = vld [vmem:[#allocation2 + $0x68] sm:$0xff]
        %v1517 = vld [vmem:[#allocation2 + $0x70] sm:$0xff]
        %1518 = vst [vmem:[#allocation3 + $0x100] sm:$0xff] %v1510
        %1519 = vst [vmem:[#allocation3 + $0x108] sm:$0xff] %v1511
        %1520 = vst [vmem:[#allocation3 + $0x110] sm:$0xff] %v1512
        %1521 = vst [vmem:[#allocation3 + $0x118] sm:$0xff] %v1513
        %1522 = vst [vmem:[#allocation3 + $0x120] sm:$0xff] %v1514
        %1523 = vst [vmem:[#allocation3 + $0x128] sm:$0xff] %v1515
        %1524 = vst [vmem:[#allocation3 + $0x130] sm:$0xff] %v1516
        %1525 = vst [vmem:[#allocation3 + $0x138] sm:$0xff] %v1517
        %v1526 = vld [vmem:[#allocation2 + $0x8] sm:$0xff]
        %v1527 = vld [vmem:[#allocation2 + $0x10] sm:$0xff]
        %v1528 = vld [vmem:[#allocation2 + $0x18] sm:$0xff]
        %v1529 = vld [vmem:[#allocation2 + $0x28] sm:$0xff]
        %v1530 = vld [vmem:[#allocation2 + $0x30] sm:$0xff]
        %v1531 = vld [vmem:[#allocation2 + $0x38] sm:$0xff]
        %v1532 = vld [vmem:[#allocation2 + $0x48] sm:$0xff]
        %v1533 = vld [vmem:[#allocation2 + $0x50] sm:$0xff]
        %v1534 = vld [vmem:[#allocation2 + $0x58] sm:$0xff]
        %v1535 = vld [vmem:[#allocation2 + $0x68] sm:$0xff]
        %v1536 = vld [vmem:[#allocation2 + $0x70] sm:$0xff]
        %v1537 = vld [vmem:[#allocation2 + $0x78] sm:$0xff]
        %v1538 = vmul.f32 %v1526, %v776
        %v1539 = vmul.f32 %v1527, %v779
        %v1540 = vmul.f32 %v1528, %v778
        %v1541 = vmul.f32 %v1529, %v776
        %v1542 = vmul.f32 %v1530, %v779
        %v1543 = vmul.f32 %v1531, %v778
        %v1544 = vmul.f32 %v1532, %v776
        %v1545 = vmul.f32 %v1533, %v779
        %v1546 = vmul.f32 %v1534, %v778
        %v1547 = vmul.f32 %v1535, %v776
        %v1548 = vmul.f32 %v1536, %v779
        %v1549 = vmul.f32 %v1537, %v778
        %1562 = vrot.lane.b32.xlu0 %v1538, 127
        %v1563 = vpop.permute.xlu0 %1562
        %1564 = vrot.lane.b32.xlu0 %v1539, 127
        %v1565 = vpop.permute.xlu0 %1564
        %1566 = vrot.lane.b32.xlu0 %v1540, 127
        %v1567 = vpop.permute.xlu0 %1566
        %1568 = vrot.lane.b32.xlu0 %v1541, 127
        %v1569 = vpop.permute.xlu0 %1568
        %1570 = vrot.lane.b32.xlu0 %v1542, 127
        %v1571 = vpop.permute.xlu0 %1570
        %1572 = vrot.lane.b32.xlu0 %v1543, 127
        %v1573 = vpop.permute.xlu0 %1572
        %1574 = vrot.lane.b32.xlu0 %v1544, 127
        %v1575 = vpop.permute.xlu0 %1574
        %1576 = vrot.lane.b32.xlu0 %v1545, 127
        %v1577 = vpop.permute.xlu0 %1576
        %1578 = vrot.lane.b32.xlu0 %v1546, 127
        %v1579 = vpop.permute.xlu0 %1578
        %1580 = vrot.lane.b32.xlu0 %v1547, 127
        %v1581 = vpop.permute.xlu0 %1580
        %1582 = vrot.lane.b32.xlu0 %v1548, 127
        %v1583 = vpop.permute.xlu0 %1582
        %1584 = vrot.lane.b32.xlu0 %v1549, 127
        %v1585 = vpop.permute.xlu0 %1584
        %v1586 = vsel %vm744, %v1563, %v1565
        %v1587 = vsel %vm744, %v1565, %v1567
        %v1588 = vsel %vm744, %v1569, %v1571
        %v1589 = vsel %vm744, %v1571, %v1573
        %v1590 = vsel %vm744, %v1575, %v1577
        %v1591 = vsel %vm744, %v1577, %v1579
        %v1592 = vsel %vm744, %v1581, %v1583
        %v1593 = vsel %vm744, %v1583, %v1585
        %1602 = vst [vmem:[#allocation3 + $0x140] sm:$0xff] %v1586
        %1603 = vst [vmem:[#allocation3 + $0x148] sm:$0xff] %v1587
        %1604 = vst [vmem:[#allocation3 + $0x150] sm:$0xff] %v1588
        %1605 = vst [vmem:[#allocation3 + $0x158] sm:$0xff] %v1589
        %1606 = vst [vmem:[#allocation3 + $0x160] sm:$0xff] %v1590
        %1607 = vst [vmem:[#allocation3 + $0x168] sm:$0xff] %v1591
        %1608 = vst [vmem:[#allocation3 + $0x170] sm:$0xff] %v1592
        %1609 = vst [vmem:[#allocation3 + $0x178] sm:$0xff] %v1593
        %v1610 = vld [vmem:[#allocation2 + $0x8] sm:$0xff]
        %v1611 = vld [vmem:[#allocation2 + $0x10] sm:$0xff]
        %v1612 = vld [vmem:[#allocation2 + $0x18] sm:$0xff]
        %v1613 = vld [vmem:[#allocation2 + $0x28] sm:$0xff]
        %v1614 = vld [vmem:[#allocation2 + $0x30] sm:$0xff]
        %v1615 = vld [vmem:[#allocation2 + $0x38] sm:$0xff]
        %v1616 = vld [vmem:[#allocation2 + $0x48] sm:$0xff]
        %v1617 = vld [vmem:[#allocation2 + $0x50] sm:$0xff]
        %v1618 = vld [vmem:[#allocation2 + $0x58] sm:$0xff]
        %v1619 = vld [vmem:[#allocation2 + $0x68] sm:$0xff]
        %v1620 = vld [vmem:[#allocation2 + $0x70] sm:$0xff]
        %v1621 = vld [vmem:[#allocation2 + $0x78] sm:$0xff]
        %v1622 = vmul.f32 %v1610, %v805
        %v1623 = vmul.f32 %v1611, %v808
        %v1624 = vmul.f32 %v1612, %v807
        %v1625 = vmul.f32 %v1613, %v805
        %v1626 = vmul.f32 %v1614, %v808
        %v1627 = vmul.f32 %v1615, %v807
        %v1628 = vmul.f32 %v1616, %v805
        %v1629 = vmul.f32 %v1617, %v808
        %v1630 = vmul.f32 %v1618, %v807
        %v1631 = vmul.f32 %v1619, %v805
        %v1632 = vmul.f32 %v1620, %v808
        %v1633 = vmul.f32 %v1621, %v807
        %1646 = vrot.lane.b32.xlu0 %v1622, 113
        %v1647 = vpop.permute.xlu0 %1646
        %1648 = vrot.lane.b32.xlu0 %v1623, 113
        %v1649 = vpop.permute.xlu0 %1648
        %1650 = vrot.lane.b32.xlu0 %v1624, 113
        %v1651 = vpop.permute.xlu0 %1650
        %1652 = vrot.lane.b32.xlu0 %v1625, 113
        %v1653 = vpop.permute.xlu0 %1652
        %1654 = vrot.lane.b32.xlu0 %v1626, 113
        %v1655 = vpop.permute.xlu0 %1654
        %1656 = vrot.lane.b32.xlu0 %v1627, 113
        %v1657 = vpop.permute.xlu0 %1656
        %1658 = vrot.lane.b32.xlu0 %v1628, 113
        %v1659 = vpop.permute.xlu0 %1658
        %1660 = vrot.lane.b32.xlu0 %v1629, 113
        %v1661 = vpop.permute.xlu0 %1660
        %1662 = vrot.lane.b32.xlu0 %v1630, 113
        %v1663 = vpop.permute.xlu0 %1662
        %1664 = vrot.lane.b32.xlu0 %v1631, 113
        %v1665 = vpop.permute.xlu0 %1664
        %1666 = vrot.lane.b32.xlu0 %v1632, 113
        %v1667 = vpop.permute.xlu0 %1666
        %1668 = vrot.lane.b32.xlu0 %v1633, 113
        %v1669 = vpop.permute.xlu0 %1668
        %v1670 = vsel %vm713, %v1647, %v1649
        %v1671 = vsel %vm713, %v1649, %v1651
        %v1672 = vsel %vm713, %v1653, %v1655
        %v1673 = vsel %vm713, %v1655, %v1657
        %v1674 = vsel %vm713, %v1659, %v1661
        %v1675 = vsel %vm713, %v1661, %v1663
        %v1676 = vsel %vm713, %v1665, %v1667
        %v1677 = vsel %vm713, %v1667, %v1669
        %1686 = vst [vmem:[#allocation3 + $0x180] sm:$0xff] %v1670
        %1687 = vst [vmem:[#allocation3 + $0x188] sm:$0xff] %v1671
        %1688 = vst [vmem:[#allocation3 + $0x190] sm:$0xff] %v1672
        %1689 = vst [vmem:[#allocation3 + $0x198] sm:$0xff] %v1673
        %1690 = vst [vmem:[#allocation3 + $0x1a0] sm:$0xff] %v1674
        %1691 = vst [vmem:[#allocation3 + $0x1a8] sm:$0xff] %v1675
        %1692 = vst [vmem:[#allocation3 + $0x1b0] sm:$0xff] %v1676
        %1693 = vst [vmem:[#allocation3 + $0x1b8] sm:$0xff] %v1677
        %v1694 = vld [vmem:[#allocation2 + $0x8] sm:$0xff]
        %v1695 = vld [vmem:[#allocation2 + $0x10] sm:$0xff]
        %v1696 = vld [vmem:[#allocation2 + $0x18] sm:$0xff]
        %v1697 = vld [vmem:[#allocation2 + $0x28] sm:$0xff]
        %v1698 = vld [vmem:[#allocation2 + $0x30] sm:$0xff]
        %v1699 = vld [vmem:[#allocation2 + $0x38] sm:$0xff]
        %v1700 = vld [vmem:[#allocation2 + $0x48] sm:$0xff]
        %v1701 = vld [vmem:[#allocation2 + $0x50] sm:$0xff]
        %v1702 = vld [vmem:[#allocation2 + $0x58] sm:$0xff]
        %v1703 = vld [vmem:[#allocation2 + $0x68] sm:$0xff]
        %v1704 = vld [vmem:[#allocation2 + $0x70] sm:$0xff]
        %v1705 = vld [vmem:[#allocation2 + $0x78] sm:$0xff]
        %1718 = vrot.lane.b32.xlu0 %v1694, 112
        %v1719 = vpop.permute.xlu0 %1718
        %1720 = vrot.lane.b32.xlu0 %v1695, 112
        %v1721 = vpop.permute.xlu0 %1720
        %1722 = vrot.lane.b32.xlu0 %v1696, 112
        %v1723 = vpop.permute.xlu0 %1722
        %1724 = vrot.lane.b32.xlu0 %v1697, 112
        %v1725 = vpop.permute.xlu0 %1724
        %1726 = vrot.lane.b32.xlu0 %v1698, 112
        %v1727 = vpop.permute.xlu0 %1726
        %1728 = vrot.lane.b32.xlu0 %v1699, 112
        %v1729 = vpop.permute.xlu0 %1728
        %1730 = vrot.lane.b32.xlu0 %v1700, 112
        %v1731 = vpop.permute.xlu0 %1730
        %1732 = vrot.lane.b32.xlu0 %v1701, 112
        %v1733 = vpop.permute.xlu0 %1732
        %1734 = vrot.lane.b32.xlu0 %v1702, 112
        %v1735 = vpop.permute.xlu0 %1734
        %1736 = vrot.lane.b32.xlu0 %v1703, 112
        %v1737 = vpop.permute.xlu0 %1736
        %1738 = vrot.lane.b32.xlu0 %v1704, 112
        %v1739 = vpop.permute.xlu0 %1738
        %1740 = vrot.lane.b32.xlu0 %v1705, 112
        %v1741 = vpop.permute.xlu0 %1740
        %v1742 = vsel %vm842, %v1719, %v1721
        %v1743 = vsel %vm842, %v1721, %v1723
        %v1744 = vsel %vm842, %v1725, %v1727
        %v1745 = vsel %vm842, %v1727, %v1729
        %v1746 = vsel %vm842, %v1731, %v1733
        %v1747 = vsel %vm842, %v1733, %v1735
        %v1748 = vsel %vm842, %v1737, %v1739
        %v1749 = vsel %vm842, %v1739, %v1741
        %1758 = vst [vmem:[#allocation3 + $0x1c0] sm:$0xff] %v1742
        %1759 = vst [vmem:[#allocation3 + $0x1c8] sm:$0xff] %v1743
        %1760 = vst [vmem:[#allocation3 + $0x1d0] sm:$0xff] %v1744
        %1761 = vst [vmem:[#allocation3 + $0x1d8] sm:$0xff] %v1745
        %1762 = vst [vmem:[#allocation3 + $0x1e0] sm:$0xff] %v1746
        %1763 = vst [vmem:[#allocation3 + $0x1e8] sm:$0xff] %v1747
        %1764 = vst [vmem:[#allocation3 + $0x1f0] sm:$0xff] %v1748
        %1765 = vst [vmem:[#allocation3 + $0x1f8] sm:$0xff] %v1749
        %v1766 = vld [vmem:[#allocation2 + $0x8] sm:$0xff]
        %v1767 = vld [vmem:[#allocation2 + $0x10] sm:$0xff]
        %v1768 = vld [vmem:[#allocation2 + $0x18] sm:$0xff]
        %v1769 = vld [vmem:[#allocation2 + $0x28] sm:$0xff]
        %v1770 = vld [vmem:[#allocation2 + $0x30] sm:$0xff]
        %v1771 = vld [vmem:[#allocation2 + $0x38] sm:$0xff]
        %v1772 = vld [vmem:[#allocation2 + $0x48] sm:$0xff]
        %v1773 = vld [vmem:[#allocation2 + $0x50] sm:$0xff]
        %v1774 = vld [vmem:[#allocation2 + $0x58] sm:$0xff]
        %v1775 = vld [vmem:[#allocation2 + $0x68] sm:$0xff]
        %v1776 = vld [vmem:[#allocation2 + $0x70] sm:$0xff]
        %v1777 = vld [vmem:[#allocation2 + $0x78] sm:$0xff]
        %v1778 = vmul.f32 %v1766, %v853
        %v1779 = vmul.f32 %v1767, %v856
        %v1780 = vmul.f32 %v1768, %v855
        %v1781 = vmul.f32 %v1769, %v853
        %v1782 = vmul.f32 %v1770, %v856
        %v1783 = vmul.f32 %v1771, %v855
        %v1784 = vmul.f32 %v1772, %v853
        %v1785 = vmul.f32 %v1773, %v856
        %v1786 = vmul.f32 %v1774, %v855
        %v1787 = vmul.f32 %v1775, %v853
        %v1788 = vmul.f32 %v1776, %v856
        %v1789 = vmul.f32 %v1777, %v855
        %1802 = vrot.lane.b32.xlu0 %v1778, 111
        %v1803 = vpop.permute.xlu0 %1802
        %1804 = vrot.lane.b32.xlu0 %v1779, 111
        %v1805 = vpop.permute.xlu0 %1804
        %1806 = vrot.lane.b32.xlu0 %v1780, 111
        %v1807 = vpop.permute.xlu0 %1806
        %1808 = vrot.lane.b32.xlu0 %v1781, 111
        %v1809 = vpop.permute.xlu0 %1808
        %1810 = vrot.lane.b32.xlu0 %v1782, 111
        %v1811 = vpop.permute.xlu0 %1810
        %1812 = vrot.lane.b32.xlu0 %v1783, 111
        %v1813 = vpop.permute.xlu0 %1812
        %1814 = vrot.lane.b32.xlu0 %v1784, 111
        %v1815 = vpop.permute.xlu0 %1814
        %1816 = vrot.lane.b32.xlu0 %v1785, 111
        %v1817 = vpop.permute.xlu0 %1816
        %1818 = vrot.lane.b32.xlu0 %v1786, 111
        %v1819 = vpop.permute.xlu0 %1818
        %1820 = vrot.lane.b32.xlu0 %v1787, 111
        %v1821 = vpop.permute.xlu0 %1820
        %1822 = vrot.lane.b32.xlu0 %v1788, 111
        %v1823 = vpop.permute.xlu0 %1822
        %1824 = vrot.lane.b32.xlu0 %v1789, 111
        %v1825 = vpop.permute.xlu0 %1824
        %v1826 = vsel %vm654, %v1803, %v1805
        %v1827 = vsel %vm654, %v1805, %v1807
        %v1828 = vsel %vm654, %v1809, %v1811
        %v1829 = vsel %vm654, %v1811, %v1813
        %v1830 = vsel %vm654, %v1815, %v1817
        %v1831 = vsel %vm654, %v1817, %v1819
        %v1832 = vsel %vm654, %v1821, %v1823
        %v1833 = vsel %vm654, %v1823, %v1825
        %1842 = vst [vmem:[#allocation3 + $0x200] sm:$0xff] %v1826
        %1843 = vst [vmem:[#allocation3 + $0x208] sm:$0xff] %v1827
        %1844 = vst [vmem:[#allocation3 + $0x210] sm:$0xff] %v1828
        %1845 = vst [vmem:[#allocation3 + $0x218] sm:$0xff] %v1829
        %1846 = vst [vmem:[#allocation3 + $0x220] sm:$0xff] %v1830
        %1847 = vst [vmem:[#allocation3 + $0x228] sm:$0xff] %v1831
        %1848 = vst [vmem:[#allocation3 + $0x230] sm:$0xff] %v1832
        %1849 = vst [vmem:[#allocation3 + $0x238] sm:$0xff] %v1833
        %v1850 = vld [vmem:[%s5] sm:$0xff]
        %v1851 = vld [vmem:[%s5 + $0x8] sm:$0xff]
        %v1852 = vld [vmem:[%s5 + $0x10] sm:$0xff]
        %v1853 = vld [vmem:[%s5 + $0x18] sm:$0xff]
        %v1854 = vld [vmem:[%s5 + $0x20] sm:$0xff]
        %v1855 = vld [vmem:[%s5 + $0x28] sm:$0xff]
        %v1856 = vld [vmem:[#allocation3] sm:$0xff]
        %v1857 = vld [vmem:[#allocation3 + $0x8] sm:$0xff]
        %v1858 = vld [vmem:[#allocation3 + $0x10] sm:$0xff]
        %v1859 = vld [vmem:[#allocation3 + $0x18] sm:$0xff]
        %v1860 = vld [vmem:[#allocation3 + $0x20] sm:$0xff]
        %v1861 = vld [vmem:[#allocation3 + $0x28] sm:$0xff]
        %v1862 = vld [vmem:[#allocation3 + $0x30] sm:$0xff]
        %v1863 = vld [vmem:[#allocation3 + $0x38] sm:$0xff]
        %v1864 = vld [vmem:[#allocation3 + $0x40] sm:$0xff]
        %v1865 = vld [vmem:[#allocation3 + $0x48] sm:$0xff]
        %v1866 = vld [vmem:[#allocation3 + $0x50] sm:$0xff]
        %v1867 = vld [vmem:[#allocation3 + $0x58] sm:$0xff]
        %v1868 = vld [vmem:[#allocation3 + $0x60] sm:$0xff]
        %v1869 = vld [vmem:[#allocation3 + $0x68] sm:$0xff]
        %v1870 = vld [vmem:[#allocation3 + $0x70] sm:$0xff]
        %v1871 = vld [vmem:[#allocation3 + $0x78] sm:$0xff]
        %v1872 = vld [vmem:[#allocation3 + $0x80] sm:$0xff]
        %v1873 = vld [vmem:[#allocation3 + $0x88] sm:$0xff]
        %v1874 = vld [vmem:[#allocation3 + $0x90] sm:$0xff]
        %v1875 = vld [vmem:[#allocation3 + $0x98] sm:$0xff]
        %v1876 = vld [vmem:[#allocation3 + $0xa0] sm:$0xff]
        %v1877 = vld [vmem:[#allocation3 + $0xa8] sm:$0xff]
        %v1878 = vld [vmem:[#allocation3 + $0xb0] sm:$0xff]
        %v1879 = vld [vmem:[#allocation3 + $0xb8] sm:$0xff]
        %v1880 = vld [vmem:[#allocation3 + $0xc0] sm:$0xff]
        %v1881 = vld [vmem:[#allocation3 + $0xc8] sm:$0xff]
        %v1882 = vld [vmem:[#allocation3 + $0xd0] sm:$0xff]
        %v1883 = vld [vmem:[#allocation3 + $0xd8] sm:$0xff]
        %v1884 = vld [vmem:[#allocation3 + $0xe0] sm:$0xff]
        %v1885 = vld [vmem:[#allocation3 + $0xe8] sm:$0xff]
        %v1886 = vld [vmem:[#allocation3 + $0xf0] sm:$0xff]
        %v1887 = vld [vmem:[#allocation3 + $0xf8] sm:$0xff]
        %v1888 = vld [vmem:[#allocation3 + $0x100] sm:$0xff]
        %v1889 = vld [vmem:[#allocation3 + $0x108] sm:$0xff]
        %v1890 = vld [vmem:[#allocation3 + $0x110] sm:$0xff]
        %v1891 = vld [vmem:[#allocation3 + $0x118] sm:$0xff]
        %v1892 = vld [vmem:[#allocation3 + $0x120] sm:$0xff]
        %v1893 = vld [vmem:[#allocation3 + $0x128] sm:$0xff]
        %v1894 = vld [vmem:[#allocation3 + $0x130] sm:$0xff]
        %v1895 = vld [vmem:[#allocation3 + $0x138] sm:$0xff]
        %v1896 = vld [vmem:[#allocation3 + $0x140] sm:$0xff]
        %v1897 = vld [vmem:[#allocation3 + $0x148] sm:$0xff]
        %v1898 = vld [vmem:[#allocation3 + $0x150] sm:$0xff]
        %v1899 = vld [vmem:[#allocation3 + $0x158] sm:$0xff]
        %v1900 = vld [vmem:[#allocation3 + $0x160] sm:$0xff]
        %v1901 = vld [vmem:[#allocation3 + $0x168] sm:$0xff]
        %v1902 = vld [vmem:[#allocation3 + $0x170] sm:$0xff]
        %v1903 = vld [vmem:[#allocation3 + $0x178] sm:$0xff]
        %v1904 = vld [vmem:[#allocation3 + $0x180] sm:$0xff]
        %v1905 = vld [vmem:[#allocation3 + $0x188] sm:$0xff]
        %v1906 = vld [vmem:[#allocation3 + $0x190] sm:$0xff]
        %v1907 = vld [vmem:[#allocation3 + $0x198] sm:$0xff]
        %v1908 = vld [vmem:[#allocation3 + $0x1a0] sm:$0xff]
        %v1909 = vld [vmem:[#allocation3 + $0x1a8] sm:$0xff]
        %v1910 = vld [vmem:[#allocation3 + $0x1b0] sm:$0xff]
        %v1911 = vld [vmem:[#allocation3 + $0x1b8] sm:$0xff]
        %v1912 = vld [vmem:[#allocation3 + $0x1c0] sm:$0xff]
        %v1913 = vld [vmem:[#allocation3 + $0x1c8] sm:$0xff]
        %v1914 = vld [vmem:[#allocation3 + $0x1d0] sm:$0xff]
        %v1915 = vld [vmem:[#allocation3 + $0x1d8] sm:$0xff]
        %v1916 = vld [vmem:[#allocation3 + $0x1e0] sm:$0xff]
        %v1917 = vld [vmem:[#allocation3 + $0x1e8] sm:$0xff]
        %v1918 = vld [vmem:[#allocation3 + $0x1f0] sm:$0xff]
        %v1919 = vld [vmem:[#allocation3 + $0x1f8] sm:$0xff]
        %v1920 = vld [vmem:[#allocation3 + $0x200] sm:$0xff]
        %v1921 = vld [vmem:[#allocation3 + $0x208] sm:$0xff]
        %v1922 = vld [vmem:[#allocation3 + $0x210] sm:$0xff]
        %v1923 = vld [vmem:[#allocation3 + $0x218] sm:$0xff]
        %v1924 = vld [vmem:[#allocation3 + $0x220] sm:$0xff]
        %v1925 = vld [vmem:[#allocation3 + $0x228] sm:$0xff]
        %v1926 = vld [vmem:[#allocation3 + $0x230] sm:$0xff]
        %v1927 = vld [vmem:[#allocation3 + $0x238] sm:$0xff]
        %v1928 = vld [vmem:[%s6] sm:$0xff]
        %v1929 = vld [vmem:[%s6 + $0x8] sm:$0xff]
        %1931 = vset.pattern.permute.xlu0 0
        %1932 = vperm.xlu0 %1931, %v1928
        %v1933 = vpop.permute.xlu0 %1932
        %1936 = vset.pattern.permute.xlu0 0
        %1937 = vperm.xlu0 %1936, %v1929
        %v1938 = vpop.permute.xlu0 %1937
        %vm1940 = vcmask 261120
        %v1942 = vsel %vm1940, %v1852, 0
        %v1945 = vsel %vm1940, %v1855, 0
        %1947 = vmatprep.subr.mxu0 %v1857
        %1948 = vmatpush1.msra.mxu0 %v1856
        %1949 = vmatprep.subr.mxu0 %v1859
        %1950 = vmatpush1.msra.mxu0 %v1858
        %1951 = vmatprep.subr.mxu0 %v1861
        %1952 = vmatpush1.msra.mxu0 %v1860
        %1953 = vmatprep.subr.mxu0 %v1863
        %1954 = vmatpush1.msra.mxu0 %v1862
        %1955 = vmatprep.subr.mxu0 %v1865
        %1956 = vmatpush1.msra.mxu0 %v1864
        %1957 = vmatprep.subr.mxu0 %v1867
        %1958 = vmatpush1.msra.mxu0 %v1866
        %1959 = vmatprep.subr.mxu0 %v1869
        %1960 = vmatpush1.msra.mxu0 %v1868
        %1961 = vmatprep.subr.mxu0 %v1871
        %1962 = vmatpush1.msra.mxu0 %v1870
        %1963 = vmatprep.subr.mxu0 %v1873
        %1964 = vmatpush1.msra.mxu0 %v1872
        %1965 = vmatprep.subr.mxu0 %v1875
        %1966 = vmatpush1.msra.mxu0 %v1874
        %1967 = vmatprep.subr.mxu0 %v1877
        %1968 = vmatpush1.msra.mxu0 %v1876
        %1969 = vmatprep.subr.mxu0 %v1879
        %1970 = vmatpush1.msra.mxu0 %v1878
        %1971 = vmatprep.subr.mxu0 %v1881
        %1972 = vmatpush1.msra.mxu0 %v1880
        %1973 = vmatprep.subr.mxu0 %v1883
        %1974 = vmatpush1.msra.mxu0 %v1882
        %1975 = vmatprep.subr.mxu0 %v1885
        %1976 = vmatpush1.msra.mxu0 %v1884
        %1977 = vmatprep.subr.mxu0 %v1887
        %1978 = vmatpush1.msra.mxu0 %v1886
        %1979 = vmatprep.subr.mxu0 %v1889
        %1980 = vmatpush1.msra.mxu0 %v1888
        %1981 = vmatprep.subr.mxu0 %v1891
        %1982 = vmatpush1.msra.mxu0 %v1890
        %1983 = vmatprep.subr.mxu0 %v1893
        %1984 = vmatpush1.msra.mxu0 %v1892
        %1985 = vmatprep.subr.mxu0 %v1895
        %1986 = vmatpush1.msra.mxu0 %v1894
        %1987 = vmatprep.subr.mxu0 %v1897
        %1988 = vmatpush1.msra.mxu0 %v1896
        %1989 = vmatprep.subr.mxu0 %v1899
        %1990 = vmatpush1.msra.mxu0 %v1898
        %1991 = vmatprep.subr.mxu0 %v1901
        %1992 = vmatpush1.msra.mxu0 %v1900
        %1993 = vmatprep.subr.mxu0 %v1903
        %1994 = vmatpush1.msra.mxu0 %v1902
        %1995 = vmatprep.subr.mxu0 %v1905
        %1996 = vmatpush1.msra.mxu0 %v1904
        %1997 = vmatprep.subr.mxu0 %v1907
        %1998 = vmatpush1.msra.mxu0 %v1906
        %1999 = vmatprep.subr.mxu0 %v1909
        %2000 = vmatpush1.msra.mxu0 %v1908
        %2001 = vmatprep.subr.mxu0 %v1911
        %2002 = vmatpush1.msra.mxu0 %v1910
        %2003 = vmatprep.subr.mxu0 %v1913
        %2004 = vmatpush1.msra.mxu0 %v1912
        %2005 = vmatprep.subr.mxu0 %v1915
        %2006 = vmatpush1.msra.mxu0 %v1914
        %2007 = vmatprep.subr.mxu0 %v1917
        %2008 = vmatpush1.msra.mxu0 %v1916
        %2009 = vmatprep.subr.mxu0 %v1919
        %2010 = vmatpush1.msra.mxu0 %v1918
        %2011 = vmatprep.mubr.f32.mxu0 %v1851
        %2012 = vmatmul.mubr.f32.gmra.mrb[0].mxu0 %v1850
        %v2013 = vpop.f32.mrb[0].mxu0
        %v2014 = vadd.f32 %v1933, %v2013
        %v2015 = vpop.f32.mrb[0].mxu0
        %v2016 = vadd.f32 %v1933, %v2015
        %2017 = vmatprep.mubr.f32.mxu0 %v1854
        %2018 = vmatmul.mubr.f32.gmra.mrb[0].mxu0 %v1853
        %v2019 = vpop.f32.mrb[0].mxu0
        %v2020 = vadd.f32 %v1938, %v2019
        %v2021 = vpop.f32.mrb[0].mxu0
        %v2022 = vadd.f32 %v1938, %v2021
        %2023 = vdwg.mxu0
        %2024 = vmatprep.subr.mxu0 %v1921
        %2025 = vmatpush1.msra.mxu0 %v1920
        %2026 = vmatprep.subr.mxu0 %v1923
        %2027 = vmatpush1.msra.mxu0 %v1922
        %2028 = vmatprep.subr.mxu0 %v1925
        %2029 = vmatpush1.msra.mxu0 %v1924
        %2030 = vmatprep.subr.mxu0 %v1927
        %2031 = vmatpush1.msra.mxu0 %v1926
        %2032 = vmatprep.subr.mxu0 0.0
        %2033 = vmatpush1.msra.mxu0 0.0
        %2034 = vmatprep.subr.mxu0 0.0
        %2035 = vmatpush1.msra.mxu0 0.0
        %2036 = vmatprep.subr.mxu0 0.0
        %2037 = vmatpush1.msra.mxu0 0.0
        %2038 = vmatprep.subr.mxu0 0.0
        %2039 = vmatpush1.msra.mxu0 0.0
        %2040 = vmatprep.subr.mxu0 0.0
        %2041 = vmatpush1.msra.mxu0 0.0
        %2042 = vmatprep.subr.mxu0 0.0
        %2043 = vmatpush1.msra.mxu0 0.0
        %2044 = vmatprep.subr.mxu0 0.0
        %2045 = vmatpush1.msra.mxu0 0.0
        %2046 = vmatprep.subr.mxu0 0.0
        %2047 = vmatpush1.msra.mxu0 0.0
        %2048 = vmatprep.subr.mxu0 0.0
        %2049 = vmatpush1.msra.mxu0 0.0
        %2050 = vmatprep.subr.mxu0 0.0
        %2051 = vmatpush1.msra.mxu0 0.0
        %2052 = vmatprep.subr.mxu0 0.0
        %2053 = vmatpush1.msra.mxu0 0.0
        %2054 = vmatprep.subr.mxu0 0.0
        %2055 = vmatpush1.msra.mxu0 0.0
        %2056 = vmatprep.subr.mxu0 0.0
        %2057 = vmatpush1.msra.mxu0 0.0
        %2058 = vmatprep.subr.mxu0 0.0
        %2059 = vmatpush1.msra.mxu0 0.0
        %2060 = vmatprep.subr.mxu0 0.0
        %2061 = vmatpush1.msra.mxu0 0.0
        %2062 = vmatprep.subr.mxu0 0.0
        %2063 = vmatpush1.msra.mxu0 0.0
        %2064 = vmatprep.subr.mxu0 0.0
        %2065 = vmatpush1.msra.mxu0 0.0
        %2066 = vmatprep.subr.mxu0 0.0
        %2067 = vmatpush1.msra.mxu0 0.0
        %2068 = vmatprep.subr.mxu0 0.0
        %2069 = vmatpush1.msra.mxu0 0.0
        %2070 = vmatprep.subr.mxu0 0.0
        %2071 = vmatpush1.msra.mxu0 0.0
        %2072 = vmatprep.subr.mxu0 0.0
        %2073 = vmatpush1.msra.mxu0 0.0
        %2074 = vmatprep.subr.mxu0 0.0
        %2075 = vmatpush1.msra.mxu0 0.0
        %2076 = vmatprep.subr.mxu0 0.0
        %2077 = vmatpush1.msra.mxu0 0.0
        %2078 = vmatprep.subr.mxu0 0.0
        %2079 = vmatpush1.msra.mxu0 0.0
        %2080 = vmatprep.subr.mxu0 0.0
        %2081 = vmatpush1.msra.mxu0 0.0
        %2082 = vmatprep.subr.mxu0 0.0
        %2083 = vmatpush1.msra.mxu0 0.0
        %2084 = vmatprep.subr.mxu0 0.0
        %2085 = vmatpush1.msra.mxu0 0.0
        %2086 = vmatprep.subr.mxu0 0.0
        %2087 = vmatpush1.msra.mxu0 0.0
        %2088 = vmatprep.mubr.f32.mxu0 0.0
        %2089 = vmatmul.mubr.f32.gmra.mrb[0].mxu0 %v1942
        %v2090 = vpop.f32.mrb[0].mxu0
        %v2091 = vadd.f32 %v2014, %v2090
        %v2092 = vpop.f32.mrb[0].mxu0
        %v2093 = vadd.f32 %v2016, %v2092
        %2094 = vmatprep.mubr.f32.mxu0 0.0
        %2095 = vmatmul.mubr.f32.gmra.mrb[0].mxu0 %v1945
        %v2096 = vpop.f32.mrb[0].mxu0
        %v2097 = vadd.f32 %v2020, %v2096
        %v2098 = vpop.f32.mrb[0].mxu0
        %v2099 = vadd.f32 %v2022, %v2098
        %2100 = vdwg.mxu0
        %v2102 = vcombine.high %v632, %v632
        %vm2104 = vcmask 1043456
        %v2105 = vsel %vm2104, %v632, 0.0
        %v2106 = vsel %vm2104, %v2102, 0.0
        %v2107 = vadd.f32 %v2105, %v2106
        %2108 = vadd.xlane.f32.xlu0 %v2107
        %v2109 = vpop.xlane.xlu0 %2108
        %v2110 = vrcp.pop 256.0
        %v2111 = vmul.f32 %v2109, %v2110
        %v2114 = vunpack.c.l.s4 839922192
        %v2115 = vunpack.c.0.s8 %v2114
        %v2116 = vlaneseq
        %v2117 = vshrl.u32 %v2116, 7
        %v2118 = vsub.s32 %v2115, %v2117
        %v2119 = vrot.slane %v2111, %v2118
        %v2121 = vsub.f32 %v632, %v2119
        %v2122 = vmul.f32 %v2121, %v2121
        %v2124 = vcombine.high %v2122, %v2122
        %v2126 = vsel %vm2104, %v2122, 0.0
        %v2127 = vsel %vm2104, %v2124, 0.0
        %v2128 = vadd.f32 %v2126, %v2127
        %2129 = vadd.xlane.f32.xlu0 %v2128
        %v2130 = vpop.xlane.xlu0 %2129
        %v2131 = vmul.f32 %v2130, %v2110
        %v2132 = vadd.f32 %v2131, 1e-05
        %v2133 = vrsqrt.pop %v2132
        %v2136 = vunpack.c.l.s4 839922192
        %v2137 = vunpack.c.0.s8 %v2136
        %v2138 = vlaneseq
        %v2139 = vshrl.u32 %v2138, 7
        %v2140 = vsub.s32 %v2137, %v2139
        %v2141 = vrot.slane %v2133, %v2140
        %v2143 = vmul.f32 %v2121, %v2141
        %v2144 = vadd.f32 %v2091, 1.0
        %v2145 = vadd.f32 %v2093, 1.0
        %v2148 = vcombine.low %v2144, %v2145
        %v2150 = vmul.f32 %v2143, %v2148
        %v2153 = vcombine.low %v2097, %v2099
        %v2155 = vadd.f32 %v2150, %v2153
        %v2156 = vmax.f32 %v2155, 0.0
        %v2158 = vcombine.high %v2156, %v2156
        %2160 = vst [vmem:[#allocation2 + $0x8] sm:$0xf] %v2156
        %2161 = vst [vmem:[#allocation2 + $0x10] sm:$0xf] %v2158
        %v2162 = vld [vmem:[#allocation2] sm:$0xff]
        %v2163 = vld [vmem:[#allocation2 + $0x8] sm:$0xff]
        %v2164 = vld [vmem:[#allocation2 + $0x10] sm:$0xff]
        %v2165 = vmul.f32 %v2162, %v651
        %v2166 = vmul.f32 %v2163, %v655
        %v2167 = vmul.f32 %v2164, %v653
        %2171 = vrot.lane.b32.xlu0 %v2165, 17
        %v2172 = vpop.permute.xlu0 %2171
        %2173 = vrot.lane.b32.xlu0 %v2166, 17
        %v2174 = vpop.permute.xlu0 %2173
        %2175 = vrot.lane.b32.xlu0 %v2167, 17
        %v2176 = vpop.permute.xlu0 %2175
        %v2177 = vsel %vm671, %v2172, %v2174
        %v2178 = vsel %vm671, %v2174, %v2176
        %2181 = vst [vmem:[#allocation3] sm:$0xff] %v2177
        %2182 = vst [vmem:[#allocation3 + $0x8] sm:$0xff] %v2178
        %v2183 = vld [vmem:[#allocation2] sm:$0xff]
        %v2184 = vld [vmem:[#allocation2 + $0x8] sm:$0xff]
        %v2185 = vld [vmem:[#allocation2 + $0x10] sm:$0xff]
        %2189 = vrot.lane.b32.xlu0 %v2183, 16
        %v2190 = vpop.permute.xlu0 %2189
        %2191 = vrot.lane.b32.xlu0 %v2184, 16
        %v2192 = vpop.permute.xlu0 %2191
        %2193 = vrot.lane.b32.xlu0 %v2185, 16
        %v2194 = vpop.permute.xlu0 %2193
        %v2195 = vsel %vm690, %v2190, %v2192
        %v2196 = vsel %vm690, %v2192, %v2194
        %2199 = vst [vmem:[#allocation3 + $0x10] sm:$0xff] %v2195
        %2200 = vst [vmem:[#allocation3 + $0x18] sm:$0xff] %v2196
        %v2201 = vld [vmem:[#allocation2] sm:$0xff]
        %v2202 = vld [vmem:[#allocation2 + $0x8] sm:$0xff]
        %v2203 = vld [vmem:[#allocation2 + $0x10] sm:$0xff]
        %v2204 = vmul.f32 %v2201, %v710
        %v2205 = vmul.f32 %v2202, %v714
        %v2206 = vmul.f32 %v2203, %v712
        %2210 = vrot.lane.b32.xlu0 %v2204, 15
        %v2211 = vpop.permute.xlu0 %2210
        %2212 = vrot.lane.b32.xlu0 %v2205, 15
        %v2213 = vpop.permute.xlu0 %2212
        %2214 = vrot.lane.b32.xlu0 %v2206, 15
        %v2215 = vpop.permute.xlu0 %2214
        %v2216 = vsel %vm730, %v2211, %v2213
        %v2217 = vsel %vm730, %v2213, %v2215
        %2220 = vst [vmem:[#allocation3 + $0x20] sm:$0xff] %v2216
        %2221 = vst [vmem:[#allocation3 + $0x28] sm:$0xff] %v2217
        %v2222 = vld [vmem:[#allocation2] sm:$0xff]
        %v2223 = vld [vmem:[#allocation2 + $0x8] sm:$0xff]
        %v2224 = vld [vmem:[#allocation2 + $0x10] sm:$0xff]
        %v2225 = vmul.f32 %v2222, %v741
        %v2226 = vmul.f32 %v2223, %v745
        %v2227 = vmul.f32 %v2224, %v743
        %2231 = vrot.lane.b32.xlu0 %v2225, 1
        %v2232 = vpop.permute.xlu0 %2231
        %2233 = vrot.lane.b32.xlu0 %v2226, 1
        %v2234 = vpop.permute.xlu0 %2233
        %2235 = vrot.lane.b32.xlu0 %v2227, 1
        %v2236 = vpop.permute.xlu0 %2235
        %v2237 = vsel %vm761, %v2232, %v2234
        %v2238 = vsel %vm761, %v2234, %v2236
        %2241 = vst [vmem:[#allocation3 + $0x30] sm:$0xff] %v2237
        %2242 = vst [vmem:[#allocation3 + $0x38] sm:$0xff] %v2238
        %v2243 = vld [vmem:[#allocation2 + $0x8] sm:$0xff]
        %v2244 = vld [vmem:[#allocation2 + $0x10] sm:$0xff]
        %2245 = vst [vmem:[#allocation3 + $0x40] sm:$0xff] %v2243
        %2246 = vst [vmem:[#allocation3 + $0x48] sm:$0xff] %v2244
        %v2247 = vld [vmem:[#allocation2 + $0x8] sm:$0xff]
        %v2248 = vld [vmem:[#allocation2 + $0x10] sm:$0xff]
        %v2249 = vld [vmem:[#allocation2 + $0x18] sm:$0xff]
        %v2250 = vmul.f32 %v2247, %v776
        %v2251 = vmul.f32 %v2248, %v779
        %v2252 = vmul.f32 %v2249, %v778
        %2256 = vrot.lane.b32.xlu0 %v2250, 127
        %v2257 = vpop.permute.xlu0 %2256
        %2258 = vrot.lane.b32.xlu0 %v2251, 127
        %v2259 = vpop.permute.xlu0 %2258
        %2260 = vrot.lane.b32.xlu0 %v2252, 127
        %v2261 = vpop.permute.xlu0 %2260
        %v2262 = vsel %vm744, %v2257, %v2259
        %v2263 = vsel %vm744, %v2259, %v2261
        %2266 = vst [vmem:[#allocation3 + $0x50] sm:$0xff] %v2262
        %2267 = vst [vmem:[#allocation3 + $0x58] sm:$0xff] %v2263
        %v2268 = vld [vmem:[#allocation2 + $0x8] sm:$0xff]
        %v2269 = vld [vmem:[#allocation2 + $0x10] sm:$0xff]
        %v2270 = vld [vmem:[#allocation2 + $0x18] sm:$0xff]
        %v2271 = vmul.f32 %v2268, %v805
        %v2272 = vmul.f32 %v2269, %v808
        %v2273 = vmul.f32 %v2270, %v807
        %2277 = vrot.lane.b32.xlu0 %v2271, 113
        %v2278 = vpop.permute.xlu0 %2277
        %2279 = vrot.lane.b32.xlu0 %v2272, 113
        %v2280 = vpop.permute.xlu0 %2279
        %2281 = vrot.lane.b32.xlu0 %v2273, 113
        %v2282 = vpop.permute.xlu0 %2281
        %v2283 = vsel %vm713, %v2278, %v2280
        %v2284 = vsel %vm713, %v2280, %v2282
        %2287 = vst [vmem:[#allocation3 + $0x60] sm:$0xff] %v2283
        %2288 = vst [vmem:[#allocation3 + $0x68] sm:$0xff] %v2284
        %v2289 = vld [vmem:[#allocation2 + $0x8] sm:$0xff]
        %v2290 = vld [vmem:[#allocation2 + $0x10] sm:$0xff]
        %v2291 = vld [vmem:[#allocation2 + $0x18] sm:$0xff]
        %2295 = vrot.lane.b32.xlu0 %v2289, 112
        %v2296 = vpop.permute.xlu0 %2295
        %2297 = vrot.lane.b32.xlu0 %v2290, 112
        %v2298 = vpop.permute.xlu0 %2297
        %2299 = vrot.lane.b32.xlu0 %v2291, 112
        %v2300 = vpop.permute.xlu0 %2299
        %v2301 = vsel %vm842, %v2296, %v2298
        %v2302 = vsel %vm842, %v2298, %v2300
        %2305 = vst [vmem:[#allocation3 + $0x70] sm:$0xff] %v2301
        %2306 = vst [vmem:[#allocation3 + $0x78] sm:$0xff] %v2302
        %v2307 = vld [vmem:[#allocation2 + $0x8] sm:$0xff]
        %v2308 = vld [vmem:[#allocation2 + $0x10] sm:$0xff]
        %v2309 = vld [vmem:[#allocation2 + $0x18] sm:$0xff]
        %v2310 = vmul.f32 %v2307, %v853
        %v2311 = vmul.f32 %v2308, %v856
        %v2312 = vmul.f32 %v2309, %v855
        %2316 = vrot.lane.b32.xlu0 %v2310, 111
        %v2317 = vpop.permute.xlu0 %2316
        %2318 = vrot.lane.b32.xlu0 %v2311, 111
        %v2319 = vpop.permute.xlu0 %2318
        %2320 = vrot.lane.b32.xlu0 %v2312, 111
        %v2321 = vpop.permute.xlu0 %2320
        %v2322 = vsel %vm654, %v2317, %v2319
        %v2323 = vsel %vm654, %v2319, %v2321
        %2326 = vst [vmem:[#allocation3 + $0x80] sm:$0xff] %v2322
        %2327 = vst [vmem:[#allocation3 + $0x88] sm:$0xff] %v2323
        %v2328 = vld [vmem:[%s11] sm:$0xff]
        %v2329 = vld [vmem:[#allocation3] sm:$0xff]
        %v2330 = vld [vmem:[#allocation3 + $0x8] sm:$0xff]
        %v2331 = vld [vmem:[#allocation3 + $0x10] sm:$0xff]
        %v2332 = vld [vmem:[#allocation3 + $0x18] sm:$0xff]
        %v2333 = vld [vmem:[#allocation3 + $0x20] sm:$0xff]
        %v2334 = vld [vmem:[#allocation3 + $0x28] sm:$0xff]
        %v2335 = vld [vmem:[#allocation3 + $0x30] sm:$0xff]
        %v2336 = vld [vmem:[#allocation3 + $0x38] sm:$0xff]
        %v2337 = vld [vmem:[#allocation3 + $0x40] sm:$0xff]
        %v2338 = vld [vmem:[#allocation3 + $0x48] sm:$0xff]
        %v2339 = vld [vmem:[#allocation3 + $0x50] sm:$0xff]
        %v2340 = vld [vmem:[#allocation3 + $0x58] sm:$0xff]
        %v2341 = vld [vmem:[#allocation3 + $0x60] sm:$0xff]
        %v2342 = vld [vmem:[#allocation3 + $0x68] sm:$0xff]
        %v2343 = vld [vmem:[#allocation3 + $0x70] sm:$0xff]
        %v2344 = vld [vmem:[#allocation3 + $0x78] sm:$0xff]
        %v2345 = vld [vmem:[#allocation3 + $0x80] sm:$0xff]
        %v2346 = vld [vmem:[#allocation3 + $0x88] sm:$0xff]
        %v2347 = vld [vmem:[%s12] sm:$0xff]
        %2349 = vset.pattern.permute.xlu0 0
        %2350 = vperm.xlu0 %2349, %v2347
        %v2351 = vpop.permute.xlu0 %2350
        %v2354 = vsel %vm980, %v2328, 0
        %2356 = vmatprep.subr.mxu0 %v2330
        %2357 = vmatpush1.msra.mxu0 %v2329
        %2358 = vmatprep.subr.mxu0 %v2332
        %2359 = vmatpush1.msra.mxu0 %v2331
        %2360 = vmatprep.subr.mxu0 %v2334
        %2361 = vmatpush1.msra.mxu0 %v2333
        %2362 = vmatprep.subr.mxu0 %v2336
        %2363 = vmatpush1.msra.mxu0 %v2335
        %2364 = vmatprep.subr.mxu0 %v2338
        %2365 = vmatpush1.msra.mxu0 %v2337
        %2366 = vmatprep.subr.mxu0 %v2340
        %2367 = vmatpush1.msra.mxu0 %v2339
        %2368 = vmatprep.subr.mxu0 %v2342
        %2369 = vmatpush1.msra.mxu0 %v2341
        %2370 = vmatprep.subr.mxu0 %v2344
        %2371 = vmatpush1.msra.mxu0 %v2343
        %2372 = vmatprep.subr.mxu0 %v2346
        %2373 = vmatpush1.msra.mxu0 %v2345
        %2374 = vmatprep.subr.mxu0 0.0
        %2375 = vmatpush1.msra.mxu0 0.0
        %2376 = vmatprep.subr.mxu0 0.0
        %2377 = vmatpush1.msra.mxu0 0.0
        %2378 = vmatprep.subr.mxu0 0.0
        %2379 = vmatpush1.msra.mxu0 0.0
        %2380 = vmatprep.subr.mxu0 0.0
        %2381 = vmatpush1.msra.mxu0 0.0
        %2382 = vmatprep.subr.mxu0 0.0
        %2383 = vmatpush1.msra.mxu0 0.0
        %2384 = vmatprep.subr.mxu0 0.0
        %2385 = vmatpush1.msra.mxu0 0.0
        %2386 = vmatprep.subr.mxu0 0.0
        %2387 = vmatpush1.msra.mxu0 0.0
        %2388 = vmatprep.subr.mxu0 0.0
        %2389 = vmatpush1.msra.mxu0 0.0
        %2390 = vmatprep.subr.mxu0 0.0
        %2391 = vmatpush1.msra.mxu0 0.0
        %2392 = vmatprep.subr.mxu0 0.0
        %2393 = vmatpush1.msra.mxu0 0.0
        %2394 = vmatprep.subr.mxu0 0.0
        %2395 = vmatpush1.msra.mxu0 0.0
        %2396 = vmatprep.subr.mxu0 0.0
        %2397 = vmatpush1.msra.mxu0 0.0
        %2398 = vmatprep.subr.mxu0 0.0
        %2399 = vmatpush1.msra.mxu0 0.0
        %2400 = vmatprep.subr.mxu0 0.0
        %2401 = vmatpush1.msra.mxu0 0.0
        %2402 = vmatprep.subr.mxu0 0.0
        %2403 = vmatpush1.msra.mxu0 0.0
        %2404 = vmatprep.subr.mxu0 0.0
        %2405 = vmatpush1.msra.mxu0 0.0
        %2406 = vmatprep.subr.mxu0 0.0
        %2407 = vmatpush1.msra.mxu0 0.0
        %2408 = vmatprep.subr.mxu0 0.0
        %2409 = vmatpush1.msra.mxu0 0.0
        %2410 = vmatprep.subr.mxu0 0.0
        %2411 = vmatpush1.msra.mxu0 0.0
        %2412 = vmatprep.subr.mxu0 0.0
        %2413 = vmatpush1.msra.mxu0 0.0
        %2414 = vmatprep.subr.mxu0 0.0
        %2415 = vmatpush1.msra.mxu0 0.0
        %2416 = vmatprep.subr.mxu0 0.0
        %2417 = vmatpush1.msra.mxu0 0.0
        %2418 = vmatprep.subr.mxu0 0.0
        %2419 = vmatpush1.msra.mxu0 0.0
        %2420 = vmatprep.mubr.f32.mxu0 0.0
        %2421 = vmatmul.mubr.f32.gmra.mrb[0].mxu0 %v2354
        %v2422 = vpop.f32.mrb[0].mxu0
        %v2423 = vadd.f32 %v2351, %v2422
        %v2424 = vpop.f32.mrb[0].mxu0
        %v2425 = vadd.f32 %v2351, %v2424
        %2426 = vdwg.mxu0
        %2427 = vst [vmem:[#allocation2 + $0x8] sm:$0xff] %v1162
        %2428 = vst [vmem:[#allocation2 + $0x10] sm:$0xff] %v1163
        %2429 = vst [vmem:[#allocation2 + $0x28] sm:$0xff] %v1164
        %2430 = vst [vmem:[#allocation2 + $0x30] sm:$0xff] %v1165
        %2431 = vst [vmem:[#allocation2 + $0x48] sm:$0xff] %v1166
        %2432 = vst [vmem:[#allocation2 + $0x50] sm:$0xff] %v1167
        %2433 = vst [vmem:[#allocation2 + $0x68] sm:$0xff] %v1168
        %2434 = vst [vmem:[#allocation2 + $0x70] sm:$0xff] %v1169
        %v2435 = vld [vmem:[#allocation2] sm:$0xff]
        %v2436 = vld [vmem:[#allocation2 + $0x8] sm:$0xff]
        %v2437 = vld [vmem:[#allocation2 + $0x10] sm:$0xff]
        %v2438 = vld [vmem:[#allocation2 + $0x20] sm:$0xff]
        %v2439 = vld [vmem:[#allocation2 + $0x28] sm:$0xff]
        %v2440 = vld [vmem:[#allocation2 + $0x30] sm:$0xff]
        %v2441 = vld [vmem:[#allocation2 + $0x40] sm:$0xff]
        %v2442 = vld [vmem:[#allocation2 + $0x48] sm:$0xff]
        %v2443 = vld [vmem:[#allocation2 + $0x50] sm:$0xff]
        %v2444 = vld [vmem:[#allocation2 + $0x60] sm:$0xff]
        %v2445 = vld [vmem:[#allocation2 + $0x68] sm:$0xff]
        %v2446 = vld [vmem:[#allocation2 + $0x70] sm:$0xff]
        %v2447 = vmul.f32 %v2435, %v651
        %v2448 = vmul.f32 %v2436, %v655
        %v2449 = vmul.f32 %v2437, %v653
        %v2450 = vmul.f32 %v2438, %v651
        %v2451 = vmul.f32 %v2439, %v655
        %v2452 = vmul.f32 %v2440, %v653
        %v2453 = vmul.f32 %v2441, %v651
        %v2454 = vmul.f32 %v2442, %v655
        %v2455 = vmul.f32 %v2443, %v653
        %v2456 = vmul.f32 %v2444, %v651
        %v2457 = vmul.f32 %v2445, %v655
        %v2458 = vmul.f32 %v2446, %v653
        %2471 = vrot.lane.b32.xlu0 %v2447, 17
        %v2472 = vpop.permute.xlu0 %2471
        %2473 = vrot.lane.b32.xlu0 %v2448, 17
        %v2474 = vpop.permute.xlu0 %2473
        %2475 = vrot.lane.b32.xlu0 %v2449, 17
        %v2476 = vpop.permute.xlu0 %2475
        %2477 = vrot.lane.b32.xlu0 %v2450, 17
        %v2478 = vpop.permute.xlu0 %2477
        %2479 = vrot.lane.b32.xlu0 %v2451, 17
        %v2480 = vpop.permute.xlu0 %2479
        %2481 = vrot.lane.b32.xlu0 %v2452, 17
        %v2482 = vpop.permute.xlu0 %2481
        %2483 = vrot.lane.b32.xlu0 %v2453, 17
        %v2484 = vpop.permute.xlu0 %2483
        %2485 = vrot.lane.b32.xlu0 %v2454, 17
        %v2486 = vpop.permute.xlu0 %2485
        %2487 = vrot.lane.b32.xlu0 %v2455, 17
        %v2488 = vpop.permute.xlu0 %2487
        %2489 = vrot.lane.b32.xlu0 %v2456, 17
        %v2490 = vpop.permute.xlu0 %2489
        %2491 = vrot.lane.b32.xlu0 %v2457, 17
        %v2492 = vpop.permute.xlu0 %2491
        %2493 = vrot.lane.b32.xlu0 %v2458, 17
        %v2494 = vpop.permute.xlu0 %2493
        %v2495 = vsel %vm671, %v2472, %v2474
        %v2496 = vsel %vm671, %v2474, %v2476
        %v2497 = vsel %vm671, %v2478, %v2480
        %v2498 = vsel %vm671, %v2480, %v2482
        %v2499 = vsel %vm671, %v2484, %v2486
        %v2500 = vsel %vm671, %v2486, %v2488
        %v2501 = vsel %vm671, %v2490, %v2492
        %v2502 = vsel %vm671, %v2492, %v2494
        %2511 = vst [vmem:[#allocation3] sm:$0xff] %v2495
        %2512 = vst [vmem:[#allocation3 + $0x8] sm:$0xff] %v2496
        %2513 = vst [vmem:[#allocation3 + $0x10] sm:$0xff] %v2497
        %2514 = vst [vmem:[#allocation3 + $0x18] sm:$0xff] %v2498
        %2515 = vst [vmem:[#allocation3 + $0x20] sm:$0xff] %v2499
        %2516 = vst [vmem:[#allocation3 + $0x28] sm:$0xff] %v2500
        %2517 = vst [vmem:[#allocation3 + $0x30] sm:$0xff] %v2501
        %2518 = vst [vmem:[#allocation3 + $0x38] sm:$0xff] %v2502
        %v2519 = vld [vmem:[#allocation2] sm:$0xff]
        %v2520 = vld [vmem:[#allocation2 + $0x8] sm:$0xff]
        %v2521 = vld [vmem:[#allocation2 + $0x10] sm:$0xff]
        %v2522 = vld [vmem:[#allocation2 + $0x20] sm:$0xff]
        %v2523 = vld [vmem:[#allocation2 + $0x28] sm:$0xff]
        %v2524 = vld [vmem:[#allocation2 + $0x30] sm:$0xff]
        %v2525 = vld [vmem:[#allocation2 + $0x40] sm:$0xff]
        %v2526 = vld [vmem:[#allocation2 + $0x48] sm:$0xff]
        %v2527 = vld [vmem:[#allocation2 + $0x50] sm:$0xff]
        %v2528 = vld [vmem:[#allocation2 + $0x60] sm:$0xff]
        %v2529 = vld [vmem:[#allocation2 + $0x68] sm:$0xff]
        %v2530 = vld [vmem:[#allocation2 + $0x70] sm:$0xff]
        %2543 = vrot.lane.b32.xlu0 %v2519, 16
        %v2544 = vpop.permute.xlu0 %2543
        %2545 = vrot.lane.b32.xlu0 %v2520, 16
        %v2546 = vpop.permute.xlu0 %2545
        %2547 = vrot.lane.b32.xlu0 %v2521, 16
        %v2548 = vpop.permute.xlu0 %2547
        %2549 = vrot.lane.b32.xlu0 %v2522, 16
        %v2550 = vpop.permute.xlu0 %2549
        %2551 = vrot.lane.b32.xlu0 %v2523, 16
        %v2552 = vpop.permute.xlu0 %2551
        %2553 = vrot.lane.b32.xlu0 %v2524, 16
        %v2554 = vpop.permute.xlu0 %2553
        %2555 = vrot.lane.b32.xlu0 %v2525, 16
        %v2556 = vpop.permute.xlu0 %2555
        %2557 = vrot.lane.b32.xlu0 %v2526, 16
        %v2558 = vpop.permute.xlu0 %2557
        %2559 = vrot.lane.b32.xlu0 %v2527, 16
        %v2560 = vpop.permute.xlu0 %2559
        %2561 = vrot.lane.b32.xlu0 %v2528, 16
        %v2562 = vpop.permute.xlu0 %2561
        %2563 = vrot.lane.b32.xlu0 %v2529, 16
        %v2564 = vpop.permute.xlu0 %2563
        %2565 = vrot.lane.b32.xlu0 %v2530, 16
        %v2566 = vpop.permute.xlu0 %2565
        %v2567 = vsel %vm690, %v2544, %v2546
        %v2568 = vsel %vm690, %v2546, %v2548
        %v2569 = vsel %vm690, %v2550, %v2552
        %v2570 = vsel %vm690, %v2552, %v2554
        %v2571 = vsel %vm690, %v2556, %v2558
        %v2572 = vsel %vm690, %v2558, %v2560
        %v2573 = vsel %vm690, %v2562, %v2564
        %v2574 = vsel %vm690, %v2564, %v2566
        %2583 = vst [vmem:[#allocation3 + $0x40] sm:$0xff] %v2567
        %2584 = vst [vmem:[#allocation3 + $0x48] sm:$0xff] %v2568
        %2585 = vst [vmem:[#allocation3 + $0x50] sm:$0xff] %v2569
        %2586 = vst [vmem:[#allocation3 + $0x58] sm:$0xff] %v2570
        %2587 = vst [vmem:[#allocation3 + $0x60] sm:$0xff] %v2571
        %2588 = vst [vmem:[#allocation3 + $0x68] sm:$0xff] %v2572
        %2589 = vst [vmem:[#allocation3 + $0x70] sm:$0xff] %v2573
        %2590 = vst [vmem:[#allocation3 + $0x78] sm:$0xff] %v2574
        %v2591 = vld [vmem:[#allocation2] sm:$0xff]
        %v2592 = vld [vmem:[#allocation2 + $0x8] sm:$0xff]
        %v2593 = vld [vmem:[#allocation2 + $0x10] sm:$0xff]
        %v2594 = vld [vmem:[#allocation2 + $0x20] sm:$0xff]
        %v2595 = vld [vmem:[#allocation2 + $0x28] sm:$0xff]
        %v2596 = vld [vmem:[#allocation2 + $0x30] sm:$0xff]
        %v2597 = vld [vmem:[#allocation2 + $0x40] sm:$0xff]
        %v2598 = vld [vmem:[#allocation2 + $0x48] sm:$0xff]
        %v2599 = vld [vmem:[#allocation2 + $0x50] sm:$0xff]
        %v2600 = vld [vmem:[#allocation2 + $0x60] sm:$0xff]
        %v2601 = vld [vmem:[#allocation2 + $0x68] sm:$0xff]
        %v2602 = vld [vmem:[#allocation2 + $0x70] sm:$0xff]
        %v2603 = vmul.f32 %v2591, %v710
        %v2604 = vmul.f32 %v2592, %v714
        %v2605 = vmul.f32 %v2593, %v712
        %v2606 = vmul.f32 %v2594, %v710
        %v2607 = vmul.f32 %v2595, %v714
        %v2608 = vmul.f32 %v2596, %v712
        %v2609 = vmul.f32 %v2597, %v710
        %v2610 = vmul.f32 %v2598, %v714
        %v2611 = vmul.f32 %v2599, %v712
        %v2612 = vmul.f32 %v2600, %v710
        %v2613 = vmul.f32 %v2601, %v714
        %v2614 = vmul.f32 %v2602, %v712
        %2627 = vrot.lane.b32.xlu0 %v2603, 15
        %v2628 = vpop.permute.xlu0 %2627
        %2629 = vrot.lane.b32.xlu0 %v2604, 15
        %v2630 = vpop.permute.xlu0 %2629
        %2631 = vrot.lane.b32.xlu0 %v2605, 15
        %v2632 = vpop.permute.xlu0 %2631
        %2633 = vrot.lane.b32.xlu0 %v2606, 15
        %v2634 = vpop.permute.xlu0 %2633
        %2635 = vrot.lane.b32.xlu0 %v2607, 15
        %v2636 = vpop.permute.xlu0 %2635
        %2637 = vrot.lane.b32.xlu0 %v2608, 15
        %v2638 = vpop.permute.xlu0 %2637
        %2639 = vrot.lane.b32.xlu0 %v2609, 15
        %v2640 = vpop.permute.xlu0 %2639
        %2641 = vrot.lane.b32.xlu0 %v2610, 15
        %v2642 = vpop.permute.xlu0 %2641
        %2643 = vrot.lane.b32.xlu0 %v2611, 15
        %v2644 = vpop.permute.xlu0 %2643
        %2645 = vrot.lane.b32.xlu0 %v2612, 15
        %v2646 = vpop.permute.xlu0 %2645
        %2647 = vrot.lane.b32.xlu0 %v2613, 15
        %v2648 = vpop.permute.xlu0 %2647
        %2649 = vrot.lane.b32.xlu0 %v2614, 15
        %v2650 = vpop.permute.xlu0 %2649
        %v2651 = vsel %vm730, %v2628, %v2630
        %v2652 = vsel %vm730, %v2630, %v2632
        %v2653 = vsel %vm730, %v2634, %v2636
        %v2654 = vsel %vm730, %v2636, %v2638
        %v2655 = vsel %vm730, %v2640, %v2642
        %v2656 = vsel %vm730, %v2642, %v2644
        %v2657 = vsel %vm730, %v2646, %v2648
        %v2658 = vsel %vm730, %v2648, %v2650
        %2667 = vst [vmem:[#allocation3 + $0x80] sm:$0xff] %v2651
        %2668 = vst [vmem:[#allocation3 + $0x88] sm:$0xff] %v2652
        %2669 = vst [vmem:[#allocation3 + $0x90] sm:$0xff] %v2653
        %2670 = vst [vmem:[#allocation3 + $0x98] sm:$0xff] %v2654
        %2671 = vst [vmem:[#allocation3 + $0xa0] sm:$0xff] %v2655
        %2672 = vst [vmem:[#allocation3 + $0xa8] sm:$0xff] %v2656
        %2673 = vst [vmem:[#allocation3 + $0xb0] sm:$0xff] %v2657
        %2674 = vst [vmem:[#allocation3 + $0xb8] sm:$0xff] %v2658
        %v2675 = vld [vmem:[#allocation2] sm:$0xff]
        %v2676 = vld [vmem:[#allocation2 + $0x8] sm:$0xff]
        %v2677 = vld [vmem:[#allocation2 + $0x10] sm:$0xff]
        %v2678 = vld [vmem:[#allocation2 + $0x20] sm:$0xff]
        %v2679 = vld [vmem:[#allocation2 + $0x28] sm:$0xff]
        %v2680 = vld [vmem:[#allocation2 + $0x30] sm:$0xff]
        %v2681 = vld [vmem:[#allocation2 + $0x40] sm:$0xff]
        %v2682 = vld [vmem:[#allocation2 + $0x48] sm:$0xff]
        %v2683 = vld [vmem:[#allocation2 + $0x50] sm:$0xff]
        %v2684 = vld [vmem:[#allocation2 + $0x60] sm:$0xff]
        %v2685 = vld [vmem:[#allocation2 + $0x68] sm:$0xff]
        %v2686 = vld [vmem:[#allocation2 + $0x70] sm:$0xff]
        %v2687 = vmul.f32 %v2675, %v741
        %v2688 = vmul.f32 %v2676, %v745
        %v2689 = vmul.f32 %v2677, %v743
        %v2690 = vmul.f32 %v2678, %v741
        %v2691 = vmul.f32 %v2679, %v745
        %v2692 = vmul.f32 %v2680, %v743
        %v2693 = vmul.f32 %v2681, %v741
        %v2694 = vmul.f32 %v2682, %v745
        %v2695 = vmul.f32 %v2683, %v743
        %v2696 = vmul.f32 %v2684, %v741
        %v2697 = vmul.f32 %v2685, %v745
        %v2698 = vmul.f32 %v2686, %v743
        %2711 = vrot.lane.b32.xlu0 %v2687, 1
        %v2712 = vpop.permute.xlu0 %2711
        %2713 = vrot.lane.b32.xlu0 %v2688, 1
        %v2714 = vpop.permute.xlu0 %2713
        %2715 = vrot.lane.b32.xlu0 %v2689, 1
        %v2716 = vpop.permute.xlu0 %2715
        %2717 = vrot.lane.b32.xlu0 %v2690, 1
        %v2718 = vpop.permute.xlu0 %2717
        %2719 = vrot.lane.b32.xlu0 %v2691, 1
        %v2720 = vpop.permute.xlu0 %2719
        %2721 = vrot.lane.b32.xlu0 %v2692, 1
        %v2722 = vpop.permute.xlu0 %2721
        %2723 = vrot.lane.b32.xlu0 %v2693, 1
        %v2724 = vpop.permute.xlu0 %2723
        %2725 = vrot.lane.b32.xlu0 %v2694, 1
        %v2726 = vpop.permute.xlu0 %2725
        %2727 = vrot.lane.b32.xlu0 %v2695, 1
        %v2728 = vpop.permute.xlu0 %2727
        %2729 = vrot.lane.b32.xlu0 %v2696, 1
        %v2730 = vpop.permute.xlu0 %2729
        %2731 = vrot.lane.b32.xlu0 %v2697, 1
        %v2732 = vpop.permute.xlu0 %2731
        %2733 = vrot.lane.b32.xlu0 %v2698, 1
        %v2734 = vpop.permute.xlu0 %2733
        %v2735 = vsel %vm761, %v2712, %v2714
        %v2736 = vsel %vm761, %v2714, %v2716
        %v2737 = vsel %vm761, %v2718, %v2720
        %v2738 = vsel %vm761, %v2720, %v2722
        %v2739 = vsel %vm761, %v2724, %v2726
        %v2740 = vsel %vm761, %v2726, %v2728
        %v2741 = vsel %vm761, %v2730, %v2732
        %v2742 = vsel %vm761, %v2732, %v2734
        %2751 = vst [vmem:[#allocation3 + $0xc0] sm:$0xff] %v2735
        %2752 = vst [vmem:[#allocation3 + $0xc8] sm:$0xff] %v2736
        %2753 = vst [vmem:[#allocation3 + $0xd0] sm:$0xff] %v2737
        %2754 = vst [vmem:[#allocation3 + $0xd8] sm:$0xff] %v2738
        %2755 = vst [vmem:[#allocation3 + $0xe0] sm:$0xff] %v2739
        %2756 = vst [vmem:[#allocation3 + $0xe8] sm:$0xff] %v2740
        %2757 = vst [vmem:[#allocation3 + $0xf0] sm:$0xff] %v2741
        %2758 = vst [vmem:[#allocation3 + $0xf8] sm:$0xff] %v2742
        %v2759 = vld [vmem:[#allocation2 + $0x8] sm:$0xff]
        %v2760 = vld [vmem:[#allocation2 + $0x10] sm:$0xff]
        %v2761 = vld [vmem:[#allocation2 + $0x28] sm:$0xff]
        %v2762 = vld [vmem:[#allocation2 + $0x30] sm:$0xff]
        %v2763 = vld [vmem:[#allocation2 + $0x48] sm:$0xff]
        %v2764 = vld [vmem:[#allocation2 + $0x50] sm:$0xff]
        %v2765 = vld [vmem:[#allocation2 + $0x68] sm:$0xff]
        %v2766 = vld [vmem:[#allocation2 + $0x70] sm:$0xff]
        %2767 = vst [vmem:[#allocation3 + $0x100] sm:$0xff] %v2759
        %2768 = vst [vmem:[#allocation3 + $0x108] sm:$0xff] %v2760
        %2769 = vst [vmem:[#allocation3 + $0x110] sm:$0xff] %v2761
        %2770 = vst [vmem:[#allocation3 + $0x118] sm:$0xff] %v2762
        %2771 = vst [vmem:[#allocation3 + $0x120] sm:$0xff] %v2763
        %2772 = vst [vmem:[#allocation3 + $0x128] sm:$0xff] %v2764
        %2773 = vst [vmem:[#allocation3 + $0x130] sm:$0xff] %v2765
        %2774 = vst [vmem:[#allocation3 + $0x138] sm:$0xff] %v2766
        %v2775 = vld [vmem:[#allocation2 + $0x8] sm:$0xff]
        %v2776 = vld [vmem:[#allocation2 + $0x10] sm:$0xff]
        %v2777 = vld [vmem:[#allocation2 + $0x18] sm:$0xff]
        %v2778 = vld [vmem:[#allocation2 + $0x28] sm:$0xff]
        %v2779 = vld [vmem:[#allocation2 + $0x30] sm:$0xff]
        %v2780 = vld [vmem:[#allocation2 + $0x38] sm:$0xff]
        %v2781 = vld [vmem:[#allocation2 + $0x48] sm:$0xff]
        %v2782 = vld [vmem:[#allocation2 + $0x50] sm:$0xff]
        %v2783 = vld [vmem:[#allocation2 + $0x58] sm:$0xff]
        %v2784 = vld [vmem:[#allocation2 + $0x68] sm:$0xff]
        %v2785 = vld [vmem:[#allocation2 + $0x70] sm:$0xff]
        %v2786 = vld [vmem:[#allocation2 + $0x78] sm:$0xff]
        %v2787 = vmul.f32 %v2775, %v776
        %v2788 = vmul.f32 %v2776, %v779
        %v2789 = vmul.f32 %v2777, %v778
        %v2790 = vmul.f32 %v2778, %v776
        %v2791 = vmul.f32 %v2779, %v779
        %v2792 = vmul.f32 %v2780, %v778
        %v2793 = vmul.f32 %v2781, %v776
        %v2794 = vmul.f32 %v2782, %v779
        %v2795 = vmul.f32 %v2783, %v778
        %v2796 = vmul.f32 %v2784, %v776
        %v2797 = vmul.f32 %v2785, %v779
        %v2798 = vmul.f32 %v2786, %v778
        %2811 = vrot.lane.b32.xlu0 %v2787, 127
        %v2812 = vpop.permute.xlu0 %2811
        %2813 = vrot.lane.b32.xlu0 %v2788, 127
        %v2814 = vpop.permute.xlu0 %2813
        %2815 = vrot.lane.b32.xlu0 %v2789, 127
        %v2816 = vpop.permute.xlu0 %2815
        %2817 = vrot.lane.b32.xlu0 %v2790, 127
        %v2818 = vpop.permute.xlu0 %2817
        %2819 = vrot.lane.b32.xlu0 %v2791, 127
        %v2820 = vpop.permute.xlu0 %2819
        %2821 = vrot.lane.b32.xlu0 %v2792, 127
        %v2822 = vpop.permute.xlu0 %2821
        %2823 = vrot.lane.b32.xlu0 %v2793, 127
        %v2824 = vpop.permute.xlu0 %2823
        %2825 = vrot.lane.b32.xlu0 %v2794, 127
        %v2826 = vpop.permute.xlu0 %2825
        %2827 = vrot.lane.b32.xlu0 %v2795, 127
        %v2828 = vpop.permute.xlu0 %2827
        %2829 = vrot.lane.b32.xlu0 %v2796, 127
        %v2830 = vpop.permute.xlu0 %2829
        %2831 = vrot.lane.b32.xlu0 %v2797, 127
        %v2832 = vpop.permute.xlu0 %2831
        %2833 = vrot.lane.b32.xlu0 %v2798, 127
        %v2834 = vpop.permute.xlu0 %2833
        %v2835 = vsel %vm744, %v2812, %v2814
        %v2836 = vsel %vm744, %v2814, %v2816
        %v2837 = vsel %vm744, %v2818, %v2820
        %v2838 = vsel %vm744, %v2820, %v2822
        %v2839 = vsel %vm744, %v2824, %v2826
        %v2840 = vsel %vm744, %v2826, %v2828
        %v2841 = vsel %vm744, %v2830, %v2832
        %v2842 = vsel %vm744, %v2832, %v2834
        %2851 = vst [vmem:[#allocation3 + $0x140] sm:$0xff] %v2835
        %2852 = vst [vmem:[#allocation3 + $0x148] sm:$0xff] %v2836
        %2853 = vst [vmem:[#allocation3 + $0x150] sm:$0xff] %v2837
        %2854 = vst [vmem:[#allocation3 + $0x158] sm:$0xff] %v2838
        %2855 = vst [vmem:[#allocation3 + $0x160] sm:$0xff] %v2839
        %2856 = vst [vmem:[#allocation3 + $0x168] sm:$0xff] %v2840
        %2857 = vst [vmem:[#allocation3 + $0x170] sm:$0xff] %v2841
        %2858 = vst [vmem:[#allocation3 + $0x178] sm:$0xff] %v2842
        %v2859 = vld [vmem:[#allocation2 + $0x8] sm:$0xff]
        %v2860 = vld [vmem:[#allocation2 + $0x10] sm:$0xff]
        %v2861 = vld [vmem:[#allocation2 + $0x18] sm:$0xff]
        %v2862 = vld [vmem:[#allocation2 + $0x28] sm:$0xff]
        %v2863 = vld [vmem:[#allocation2 + $0x30] sm:$0xff]
        %v2864 = vld [vmem:[#allocation2 + $0x38] sm:$0xff]
        %v2865 = vld [vmem:[#allocation2 + $0x48] sm:$0xff]
        %v2866 = vld [vmem:[#allocation2 + $0x50] sm:$0xff]
        %v2867 = vld [vmem:[#allocation2 + $0x58] sm:$0xff]
        %v2868 = vld [vmem:[#allocation2 + $0x68] sm:$0xff]
        %v2869 = vld [vmem:[#allocation2 + $0x70] sm:$0xff]
        %v2870 = vld [vmem:[#allocation2 + $0x78] sm:$0xff]
        %v2871 = vmul.f32 %v2859, %v805
        %v2872 = vmul.f32 %v2860, %v808
        %v2873 = vmul.f32 %v2861, %v807
        %v2874 = vmul.f32 %v2862, %v805
        %v2875 = vmul.f32 %v2863, %v808
        %v2876 = vmul.f32 %v2864, %v807
        %v2877 = vmul.f32 %v2865, %v805
        %v2878 = vmul.f32 %v2866, %v808
        %v2879 = vmul.f32 %v2867, %v807
        %v2880 = vmul.f32 %v2868, %v805
        %v2881 = vmul.f32 %v2869, %v808
        %v2882 = vmul.f32 %v2870, %v807
        %2895 = vrot.lane.b32.xlu0 %v2871, 113
        %v2896 = vpop.permute.xlu0 %2895
        %2897 = vrot.lane.b32.xlu0 %v2872, 113
        %v2898 = vpop.permute.xlu0 %2897
        %2899 = vrot.lane.b32.xlu0 %v2873, 113
        %v2900 = vpop.permute.xlu0 %2899
        %2901 = vrot.lane.b32.xlu0 %v2874, 113
        %v2902 = vpop.permute.xlu0 %2901
        %2903 = vrot.lane.b32.xlu0 %v2875, 113
        %v2904 = vpop.permute.xlu0 %2903
        %2905 = vrot.lane.b32.xlu0 %v2876, 113
        %v2906 = vpop.permute.xlu0 %2905
        %2907 = vrot.lane.b32.xlu0 %v2877, 113
        %v2908 = vpop.permute.xlu0 %2907
        %2909 = vrot.lane.b32.xlu0 %v2878, 113
        %v2910 = vpop.permute.xlu0 %2909
        %2911 = vrot.lane.b32.xlu0 %v2879, 113
        %v2912 = vpop.permute.xlu0 %2911
        %2913 = vrot.lane.b32.xlu0 %v2880, 113
        %v2914 = vpop.permute.xlu0 %2913
        %2915 = vrot.lane.b32.xlu0 %v2881, 113
        %v2916 = vpop.permute.xlu0 %2915
        %2917 = vrot.lane.b32.xlu0 %v2882, 113
        %v2918 = vpop.permute.xlu0 %2917
        %v2919 = vsel %vm713, %v2896, %v2898
        %v2920 = vsel %vm713, %v2898, %v2900
        %v2921 = vsel %vm713, %v2902, %v2904
        %v2922 = vsel %vm713, %v2904, %v2906
        %v2923 = vsel %vm713, %v2908, %v2910
        %v2924 = vsel %vm713, %v2910, %v2912
        %v2925 = vsel %vm713, %v2914, %v2916
        %v2926 = vsel %vm713, %v2916, %v2918
        %2935 = vst [vmem:[#allocation3 + $0x180] sm:$0xff] %v2919
        %2936 = vst [vmem:[#allocation3 + $0x188] sm:$0xff] %v2920
        %2937 = vst [vmem:[#allocation3 + $0x190] sm:$0xff] %v2921
        %2938 = vst [vmem:[#allocation3 + $0x198] sm:$0xff] %v2922
        %2939 = vst [vmem:[#allocation3 + $0x1a0] sm:$0xff] %v2923
        %2940 = vst [vmem:[#allocation3 + $0x1a8] sm:$0xff] %v2924
        %2941 = vst [vmem:[#allocation3 + $0x1b0] sm:$0xff] %v2925
        %2942 = vst [vmem:[#allocation3 + $0x1b8] sm:$0xff] %v2926
        %v2943 = vld [vmem:[#allocation2 + $0x8] sm:$0xff]
        %v2944 = vld [vmem:[#allocation2 + $0x10] sm:$0xff]
        %v2945 = vld [vmem:[#allocation2 + $0x18] sm:$0xff]
        %v2946 = vld [vmem:[#allocation2 + $0x28] sm:$0xff]
        %v2947 = vld [vmem:[#allocation2 + $0x30] sm:$0xff]
        %v2948 = vld [vmem:[#allocation2 + $0x38] sm:$0xff]
        %v2949 = vld [vmem:[#allocation2 + $0x48] sm:$0xff]
        %v2950 = vld [vmem:[#allocation2 + $0x50] sm:$0xff]
        %v2951 = vld [vmem:[#allocation2 + $0x58] sm:$0xff]
        %v2952 = vld [vmem:[#allocation2 + $0x68] sm:$0xff]
        %v2953 = vld [vmem:[#allocation2 + $0x70] sm:$0xff]
        %v2954 = vld [vmem:[#allocation2 + $0x78] sm:$0xff]
        %2967 = vrot.lane.b32.xlu0 %v2943, 112
        %v2968 = vpop.permute.xlu0 %2967
        %2969 = vrot.lane.b32.xlu0 %v2944, 112
        %v2970 = vpop.permute.xlu0 %2969
        %2971 = vrot.lane.b32.xlu0 %v2945, 112
        %v2972 = vpop.permute.xlu0 %2971
        %2973 = vrot.lane.b32.xlu0 %v2946, 112
        %v2974 = vpop.permute.xlu0 %2973
        %2975 = vrot.lane.b32.xlu0 %v2947, 112
        %v2976 = vpop.permute.xlu0 %2975
        %2977 = vrot.lane.b32.xlu0 %v2948, 112
        %v2978 = vpop.permute.xlu0 %2977
        %2979 = vrot.lane.b32.xlu0 %v2949, 112
        %v2980 = vpop.permute.xlu0 %2979
        %2981 = vrot.lane.b32.xlu0 %v2950, 112
        %v2982 = vpop.permute.xlu0 %2981
        %2983 = vrot.lane.b32.xlu0 %v2951, 112
        %v2984 = vpop.permute.xlu0 %2983
        %2985 = vrot.lane.b32.xlu0 %v2952, 112
        %v2986 = vpop.permute.xlu0 %2985
        %2987 = vrot.lane.b32.xlu0 %v2953, 112
        %v2988 = vpop.permute.xlu0 %2987
        %2989 = vrot.lane.b32.xlu0 %v2954, 112
        %v2990 = vpop.permute.xlu0 %2989
        %v2991 = vsel %vm842, %v2968, %v2970
        %v2992 = vsel %vm842, %v2970, %v2972
        %v2993 = vsel %vm842, %v2974, %v2976
        %v2994 = vsel %vm842, %v2976, %v2978
        %v2995 = vsel %vm842, %v2980, %v2982
        %v2996 = vsel %vm842, %v2982, %v2984
        %v2997 = vsel %vm842, %v2986, %v2988
        %v2998 = vsel %vm842, %v2988, %v2990
        %3007 = vst [vmem:[#allocation3 + $0x1c0] sm:$0xff] %v2991
        %3008 = vst [vmem:[#allocation3 + $0x1c8] sm:$0xff] %v2992
        %3009 = vst [vmem:[#allocation3 + $0x1d0] sm:$0xff] %v2993
        %3010 = vst [vmem:[#allocation3 + $0x1d8] sm:$0xff] %v2994
        %3011 = vst [vmem:[#allocation3 + $0x1e0] sm:$0xff] %v2995
        %3012 = vst [vmem:[#allocation3 + $0x1e8] sm:$0xff] %v2996
        %3013 = vst [vmem:[#allocation3 + $0x1f0] sm:$0xff] %v2997
        %3014 = vst [vmem:[#allocation3 + $0x1f8] sm:$0xff] %v2998
        %v3015 = vld [vmem:[#allocation2 + $0x8] sm:$0xff]
        %v3016 = vld [vmem:[#allocation2 + $0x10] sm:$0xff]
        %v3017 = vld [vmem:[#allocation2 + $0x18] sm:$0xff]
        %v3018 = vld [vmem:[#allocation2 + $0x28] sm:$0xff]
        %v3019 = vld [vmem:[#allocation2 + $0x30] sm:$0xff]
        %v3020 = vld [vmem:[#allocation2 + $0x38] sm:$0xff]
        %v3021 = vld [vmem:[#allocation2 + $0x48] sm:$0xff]
        %v3022 = vld [vmem:[#allocation2 + $0x50] sm:$0xff]
        %v3023 = vld [vmem:[#allocation2 + $0x58] sm:$0xff]
        %v3024 = vld [vmem:[#allocation2 + $0x68] sm:$0xff]
        %v3025 = vld [vmem:[#allocation2 + $0x70] sm:$0xff]
        %v3026 = vld [vmem:[#allocation2 + $0x78] sm:$0xff]
        %v3027 = vmul.f32 %v3015, %v853
        %v3028 = vmul.f32 %v3016, %v856
        %v3029 = vmul.f32 %v3017, %v855
        %v3030 = vmul.f32 %v3018, %v853
        %v3031 = vmul.f32 %v3019, %v856
        %v3032 = vmul.f32 %v3020, %v855
        %v3033 = vmul.f32 %v3021, %v853
        %v3034 = vmul.f32 %v3022, %v856
        %v3035 = vmul.f32 %v3023, %v855
        %v3036 = vmul.f32 %v3024, %v853
        %v3037 = vmul.f32 %v3025, %v856
        %v3038 = vmul.f32 %v3026, %v855
        %3051 = vrot.lane.b32.xlu0 %v3027, 111
        %v3052 = vpop.permute.xlu0 %3051
        %3053 = vrot.lane.b32.xlu0 %v3028, 111
        %v3054 = vpop.permute.xlu0 %3053
        %3055 = vrot.lane.b32.xlu0 %v3029, 111
        %v3056 = vpop.permute.xlu0 %3055
        %3057 = vrot.lane.b32.xlu0 %v3030, 111
        %v3058 = vpop.permute.xlu0 %3057
        %3059 = vrot.lane.b32.xlu0 %v3031, 111
        %v3060 = vpop.permute.xlu0 %3059
        %3061 = vrot.lane.b32.xlu0 %v3032, 111
        %v3062 = vpop.permute.xlu0 %3061
        %3063 = vrot.lane.b32.xlu0 %v3033, 111
        %v3064 = vpop.permute.xlu0 %3063
        %3065 = vrot.lane.b32.xlu0 %v3034, 111
        %v3066 = vpop.permute.xlu0 %3065
        %3067 = vrot.lane.b32.xlu0 %v3035, 111
        %v3068 = vpop.permute.xlu0 %3067
        %3069 = vrot.lane.b32.xlu0 %v3036, 111
        %v3070 = vpop.permute.xlu0 %3069
        %3071 = vrot.lane.b32.xlu0 %v3037, 111
        %v3072 = vpop.permute.xlu0 %3071
        %3073 = vrot.lane.b32.xlu0 %v3038, 111
        %v3074 = vpop.permute.xlu0 %3073
        %v3075 = vsel %vm654, %v3052, %v3054
        %v3076 = vsel %vm654, %v3054, %v3056
        %v3077 = vsel %vm654, %v3058, %v3060
        %v3078 = vsel %vm654, %v3060, %v3062
        %v3079 = vsel %vm654, %v3064, %v3066
        %v3080 = vsel %vm654, %v3066, %v3068
        %v3081 = vsel %vm654, %v3070, %v3072
        %v3082 = vsel %vm654, %v3072, %v3074
        %3091 = vst [vmem:[#allocation3 + $0x200] sm:$0xff] %v3075
        %3092 = vst [vmem:[#allocation3 + $0x208] sm:$0xff] %v3076
        %3093 = vst [vmem:[#allocation3 + $0x210] sm:$0xff] %v3077
        %3094 = vst [vmem:[#allocation3 + $0x218] sm:$0xff] %v3078
        %3095 = vst [vmem:[#allocation3 + $0x220] sm:$0xff] %v3079
        %3096 = vst [vmem:[#allocation3 + $0x228] sm:$0xff] %v3080
        %3097 = vst [vmem:[#allocation3 + $0x230] sm:$0xff] %v3081
        %3098 = vst [vmem:[#allocation3 + $0x238] sm:$0xff] %v3082
        %v3099 = vld [vmem:[%s7] sm:$0xff]
        %v3100 = vld [vmem:[%s7 + $0x8] sm:$0xff]
        %v3101 = vld [vmem:[%s7 + $0x10] sm:$0xff]
        %v3102 = vld [vmem:[%s7 + $0x18] sm:$0xff]
        %v3103 = vld [vmem:[%s7 + $0x20] sm:$0xff]
        %v3104 = vld [vmem:[%s7 + $0x28] sm:$0xff]
        %v3105 = vld [vmem:[#allocation3] sm:$0xff]
        %v3106 = vld [vmem:[#allocation3 + $0x8] sm:$0xff]
        %v3107 = vld [vmem:[#allocation3 + $0x10] sm:$0xff]
        %v3108 = vld [vmem:[#allocation3 + $0x18] sm:$0xff]
        %v3109 = vld [vmem:[#allocation3 + $0x20] sm:$0xff]
        %v3110 = vld [vmem:[#allocation3 + $0x28] sm:$0xff]
        %v3111 = vld [vmem:[#allocation3 + $0x30] sm:$0xff]
        %v3112 = vld [vmem:[#allocation3 + $0x38] sm:$0xff]
        %v3113 = vld [vmem:[#allocation3 + $0x40] sm:$0xff]
        %v3114 = vld [vmem:[#allocation3 + $0x48] sm:$0xff]
        %v3115 = vld [vmem:[#allocation3 + $0x50] sm:$0xff]
        %v3116 = vld [vmem:[#allocation3 + $0x58] sm:$0xff]
        %v3117 = vld [vmem:[#allocation3 + $0x60] sm:$0xff]
        %v3118 = vld [vmem:[#allocation3 + $0x68] sm:$0xff]
        %v3119 = vld [vmem:[#allocation3 + $0x70] sm:$0xff]
        %v3120 = vld [vmem:[#allocation3 + $0x78] sm:$0xff]
        %v3121 = vld [vmem:[#allocation3 + $0x80] sm:$0xff]
        %v3122 = vld [vmem:[#allocation3 + $0x88] sm:$0xff]
        %v3123 = vld [vmem:[#allocation3 + $0x90] sm:$0xff]
        %v3124 = vld [vmem:[#allocation3 + $0x98] sm:$0xff]
        %v3125 = vld [vmem:[#allocation3 + $0xa0] sm:$0xff]
        %v3126 = vld [vmem:[#allocation3 + $0xa8] sm:$0xff]
        %v3127 = vld [vmem:[#allocation3 + $0xb0] sm:$0xff]
        %v3128 = vld [vmem:[#allocation3 + $0xb8] sm:$0xff]
        %v3129 = vld [vmem:[#allocation3 + $0xc0] sm:$0xff]
        %v3130 = vld [vmem:[#allocation3 + $0xc8] sm:$0xff]
        %v3131 = vld [vmem:[#allocation3 + $0xd0] sm:$0xff]
        %v3132 = vld [vmem:[#allocation3 + $0xd8] sm:$0xff]
        %v3133 = vld [vmem:[#allocation3 + $0xe0] sm:$0xff]
        %v3134 = vld [vmem:[#allocation3 + $0xe8] sm:$0xff]
        %v3135 = vld [vmem:[#allocation3 + $0xf0] sm:$0xff]
        %v3136 = vld [vmem:[#allocation3 + $0xf8] sm:$0xff]
        %v3137 = vld [vmem:[#allocation3 + $0x100] sm:$0xff]
        %v3138 = vld [vmem:[#allocation3 + $0x108] sm:$0xff]
        %v3139 = vld [vmem:[#allocation3 + $0x110] sm:$0xff]
        %v3140 = vld [vmem:[#allocation3 + $0x118] sm:$0xff]
        %v3141 = vld [vmem:[#allocation3 + $0x120] sm:$0xff]
        %v3142 = vld [vmem:[#allocation3 + $0x128] sm:$0xff]
        %v3143 = vld [vmem:[#allocation3 + $0x130] sm:$0xff]
        %v3144 = vld [vmem:[#allocation3 + $0x138] sm:$0xff]
        %v3145 = vld [vmem:[#allocation3 + $0x140] sm:$0xff]
        %v3146 = vld [vmem:[#allocation3 + $0x148] sm:$0xff]
        %v3147 = vld [vmem:[#allocation3 + $0x150] sm:$0xff]
        %v3148 = vld [vmem:[#allocation3 + $0x158] sm:$0xff]
        %v3149 = vld [vmem:[#allocation3 + $0x160] sm:$0xff]
        %v3150 = vld [vmem:[#allocation3 + $0x168] sm:$0xff]
        %v3151 = vld [vmem:[#allocation3 + $0x170] sm:$0xff]
        %v3152 = vld [vmem:[#allocation3 + $0x178] sm:$0xff]
        %v3153 = vld [vmem:[#allocation3 + $0x180] sm:$0xff]
        %v3154 = vld [vmem:[#allocation3 + $0x188] sm:$0xff]
        %v3155 = vld [vmem:[#allocation3 + $0x190] sm:$0xff]
        %v3156 = vld [vmem:[#allocation3 + $0x198] sm:$0xff]
        %v3157 = vld [vmem:[#allocation3 + $0x1a0] sm:$0xff]
        %v3158 = vld [vmem:[#allocation3 + $0x1a8] sm:$0xff]
        %v3159 = vld [vmem:[#allocation3 + $0x1b0] sm:$0xff]
        %v3160 = vld [vmem:[#allocation3 + $0x1b8] sm:$0xff]
        %v3161 = vld [vmem:[#allocation3 + $0x1c0] sm:$0xff]
        %v3162 = vld [vmem:[#allocation3 + $0x1c8] sm:$0xff]
        %v3163 = vld [vmem:[#allocation3 + $0x1d0] sm:$0xff]
        %v3164 = vld [vmem:[#allocation3 + $0x1d8] sm:$0xff]
        %v3165 = vld [vmem:[#allocation3 + $0x1e0] sm:$0xff]
        %v3166 = vld [vmem:[#allocation3 + $0x1e8] sm:$0xff]
        %v3167 = vld [vmem:[#allocation3 + $0x1f0] sm:$0xff]
        %v3168 = vld [vmem:[#allocation3 + $0x1f8] sm:$0xff]
        %v3169 = vld [vmem:[#allocation3 + $0x200] sm:$0xff]
        %v3170 = vld [vmem:[#allocation3 + $0x208] sm:$0xff]
        %v3171 = vld [vmem:[#allocation3 + $0x210] sm:$0xff]
        %v3172 = vld [vmem:[#allocation3 + $0x218] sm:$0xff]
        %v3173 = vld [vmem:[#allocation3 + $0x220] sm:$0xff]
        %v3174 = vld [vmem:[#allocation3 + $0x228] sm:$0xff]
        %v3175 = vld [vmem:[#allocation3 + $0x230] sm:$0xff]
        %v3176 = vld [vmem:[#allocation3 + $0x238] sm:$0xff]
        %v3177 = vld [vmem:[%s8] sm:$0xff]
        %v3178 = vld [vmem:[%s8 + $0x8] sm:$0xff]
        %3180 = vset.pattern.permute.xlu0 0
        %3181 = vperm.xlu0 %3180, %v3177
        %v3182 = vpop.permute.xlu0 %3181
        %3185 = vset.pattern.permute.xlu0 0
        %3186 = vperm.xlu0 %3185, %v3178
        %v3187 = vpop.permute.xlu0 %3186
        %v3190 = vsel %vm1940, %v3101, 0
        %v3193 = vsel %vm1940, %v3104, 0
        %3195 = vmatprep.subr.mxu0 %v3106
        %3196 = vmatpush1.msra.mxu0 %v3105
        %3197 = vmatprep.subr.mxu0 %v3108
        %3198 = vmatpush1.msra.mxu0 %v3107
        %3199 = vmatprep.subr.mxu0 %v3110
        %3200 = vmatpush1.msra.mxu0 %v3109
        %3201 = vmatprep.subr.mxu0 %v3112
        %3202 = vmatpush1.msra.mxu0 %v3111
        %3203 = vmatprep.subr.mxu0 %v3114
        %3204 = vmatpush1.msra.mxu0 %v3113
        %3205 = vmatprep.subr.mxu0 %v3116
        %3206 = vmatpush1.msra.mxu0 %v3115
        %3207 = vmatprep.subr.mxu0 %v3118
        %3208 = vmatpush1.msra.mxu0 %v3117
        %3209 = vmatprep.subr.mxu0 %v3120
        %3210 = vmatpush1.msra.mxu0 %v3119
        %3211 = vmatprep.subr.mxu0 %v3122
        %3212 = vmatpush1.msra.mxu0 %v3121
        %3213 = vmatprep.subr.mxu0 %v3124
        %3214 = vmatpush1.msra.mxu0 %v3123
        %3215 = vmatprep.subr.mxu0 %v3126
        %3216 = vmatpush1.msra.mxu0 %v3125
        %3217 = vmatprep.subr.mxu0 %v3128
        %3218 = vmatpush1.msra.mxu0 %v3127
        %3219 = vmatprep.subr.mxu0 %v3130
        %3220 = vmatpush1.msra.mxu0 %v3129
        %3221 = vmatprep.subr.mxu0 %v3132
        %3222 = vmatpush1.msra.mxu0 %v3131
        %3223 = vmatprep.subr.mxu0 %v3134
        %3224 = vmatpush1.msra.mxu0 %v3133
        %3225 = vmatprep.subr.mxu0 %v3136
        %3226 = vmatpush1.msra.mxu0 %v3135
        %3227 = vmatprep.subr.mxu0 %v3138
        %3228 = vmatpush1.msra.mxu0 %v3137
        %3229 = vmatprep.subr.mxu0 %v3140
        %3230 = vmatpush1.msra.mxu0 %v3139
        %3231 = vmatprep.subr.mxu0 %v3142
        %3232 = vmatpush1.msra.mxu0 %v3141
        %3233 = vmatprep.subr.mxu0 %v3144
        %3234 = vmatpush1.msra.mxu0 %v3143
        %3235 = vmatprep.subr.mxu0 %v3146
        %3236 = vmatpush1.msra.mxu0 %v3145
        %3237 = vmatprep.subr.mxu0 %v3148
        %3238 = vmatpush1.msra.mxu0 %v3147
        %3239 = vmatprep.subr.mxu0 %v3150
        %3240 = vmatpush1.msra.mxu0 %v3149
        %3241 = vmatprep.subr.mxu0 %v3152
        %3242 = vmatpush1.msra.mxu0 %v3151
        %3243 = vmatprep.subr.mxu0 %v3154
        %3244 = vmatpush1.msra.mxu0 %v3153
        %3245 = vmatprep.subr.mxu0 %v3156
        %3246 = vmatpush1.msra.mxu0 %v3155
        %3247 = vmatprep.subr.mxu0 %v3158
        %3248 = vmatpush1.msra.mxu0 %v3157
        %3249 = vmatprep.subr.mxu0 %v3160
        %3250 = vmatpush1.msra.mxu0 %v3159
        %3251 = vmatprep.subr.mxu0 %v3162
        %3252 = vmatpush1.msra.mxu0 %v3161
        %3253 = vmatprep.subr.mxu0 %v3164
        %3254 = vmatpush1.msra.mxu0 %v3163
        %3255 = vmatprep.subr.mxu0 %v3166
        %3256 = vmatpush1.msra.mxu0 %v3165
        %3257 = vmatprep.subr.mxu0 %v3168
        %3258 = vmatpush1.msra.mxu0 %v3167
        %3259 = vmatprep.mubr.f32.mxu0 %v3100
        %3260 = vmatmul.mubr.f32.gmra.mrb[0].mxu0 %v3099
        %v3261 = vpop.f32.mrb[0].mxu0
        %v3262 = vadd.f32 %v3182, %v3261
        %v3263 = vpop.f32.mrb[0].mxu0
        %v3264 = vadd.f32 %v3182, %v3263
        %3265 = vmatprep.mubr.f32.mxu0 %v3103
        %3266 = vmatmul.mubr.f32.gmra.mrb[0].mxu0 %v3102
        %v3267 = vpop.f32.mrb[0].mxu0
        %v3268 = vadd.f32 %v3187, %v3267
        %v3269 = vpop.f32.mrb[0].mxu0
        %v3270 = vadd.f32 %v3187, %v3269
        %3271 = vdwg.mxu0
        %3272 = vmatprep.subr.mxu0 %v3170
        %3273 = vmatpush1.msra.mxu0 %v3169
        %3274 = vmatprep.subr.mxu0 %v3172
        %3275 = vmatpush1.msra.mxu0 %v3171
        %3276 = vmatprep.subr.mxu0 %v3174
        %3277 = vmatpush1.msra.mxu0 %v3173
        %3278 = vmatprep.subr.mxu0 %v3176
        %3279 = vmatpush1.msra.mxu0 %v3175
        %3280 = vmatprep.subr.mxu0 0.0
        %3281 = vmatpush1.msra.mxu0 0.0
        %3282 = vmatprep.subr.mxu0 0.0
        %3283 = vmatpush1.msra.mxu0 0.0
        %3284 = vmatprep.subr.mxu0 0.0
        %3285 = vmatpush1.msra.mxu0 0.0
        %3286 = vmatprep.subr.mxu0 0.0
        %3287 = vmatpush1.msra.mxu0 0.0
        %3288 = vmatprep.subr.mxu0 0.0
        %3289 = vmatpush1.msra.mxu0 0.0
        %3290 = vmatprep.subr.mxu0 0.0
        %3291 = vmatpush1.msra.mxu0 0.0
        %3292 = vmatprep.subr.mxu0 0.0
        %3293 = vmatpush1.msra.mxu0 0.0
        %3294 = vmatprep.subr.mxu0 0.0
        %3295 = vmatpush1.msra.mxu0 0.0
        %3296 = vmatprep.subr.mxu0 0.0
        %3297 = vmatpush1.msra.mxu0 0.0
        %3298 = vmatprep.subr.mxu0 0.0
        %3299 = vmatpush1.msra.mxu0 0.0
        %3300 = vmatprep.subr.mxu0 0.0
        %3301 = vmatpush1.msra.mxu0 0.0
        %3302 = vmatprep.subr.mxu0 0.0
        %3303 = vmatpush1.msra.mxu0 0.0
        %3304 = vmatprep.subr.mxu0 0.0
        %3305 = vmatpush1.msra.mxu0 0.0
        %3306 = vmatprep.subr.mxu0 0.0
        %3307 = vmatpush1.msra.mxu0 0.0
        %3308 = vmatprep.subr.mxu0 0.0
        %3309 = vmatpush1.msra.mxu0 0.0
        %3310 = vmatprep.subr.mxu0 0.0
        %3311 = vmatpush1.msra.mxu0 0.0
        %3312 = vmatprep.subr.mxu0 0.0
        %3313 = vmatpush1.msra.mxu0 0.0
        %3314 = vmatprep.subr.mxu0 0.0
        %3315 = vmatpush1.msra.mxu0 0.0
        %3316 = vmatprep.subr.mxu0 0.0
        %3317 = vmatpush1.msra.mxu0 0.0
        %3318 = vmatprep.subr.mxu0 0.0
        %3319 = vmatpush1.msra.mxu0 0.0
        %3320 = vmatprep.subr.mxu0 0.0
        %3321 = vmatpush1.msra.mxu0 0.0
        %3322 = vmatprep.subr.mxu0 0.0
        %3323 = vmatpush1.msra.mxu0 0.0
        %3324 = vmatprep.subr.mxu0 0.0
        %3325 = vmatpush1.msra.mxu0 0.0
        %3326 = vmatprep.subr.mxu0 0.0
        %3327 = vmatpush1.msra.mxu0 0.0
        %3328 = vmatprep.subr.mxu0 0.0
        %3329 = vmatpush1.msra.mxu0 0.0
        %3330 = vmatprep.subr.mxu0 0.0
        %3331 = vmatpush1.msra.mxu0 0.0
        %3332 = vmatprep.subr.mxu0 0.0
        %3333 = vmatpush1.msra.mxu0 0.0
        %3334 = vmatprep.subr.mxu0 0.0
        %3335 = vmatpush1.msra.mxu0 0.0
        %3336 = vmatprep.mubr.f32.mxu0 0.0
        %3337 = vmatmul.mubr.f32.gmra.mrb[0].mxu0 %v3190
        %v3338 = vpop.f32.mrb[0].mxu0
        %v3339 = vadd.f32 %v3262, %v3338
        %v3340 = vpop.f32.mrb[0].mxu0
        %v3341 = vadd.f32 %v3264, %v3340
        %3342 = vmatprep.mubr.f32.mxu0 0.0
        %3343 = vmatmul.mubr.f32.gmra.mrb[0].mxu0 %v3193
        %v3344 = vpop.f32.mrb[0].mxu0
        %v3345 = vadd.f32 %v3268, %v3344
        %v3346 = vpop.f32.mrb[0].mxu0
        %v3347 = vadd.f32 %v3270, %v3346
        %3348 = vdwg.mxu0
        %v3349 = vadd.f32 %v2423, %v2425
        %3350 = vadd.xlane.f32.xlu0 %v3349
        %v3351 = vpop.xlane.xlu0 %3350
        %v3352 = vmul.f32 %v3351, %v2110
        %v3353 = vsub.f32 %v2423, %v3352
        %v3354 = vsub.f32 %v2425, %v3352
        %v3355 = vmul.f32 %v3353, %v3353
        %v3356 = vmul.f32 %v3354, %v3354
        %v3357 = vadd.f32 %v3355, %v3356
        %3358 = vadd.xlane.f32.xlu0 %v3357
        %v3359 = vpop.xlane.xlu0 %3358
        %v3360 = vmul.f32 %v3359, %v2110
        %v3361 = vadd.f32 %v3360, 1e-05
        %v3362 = vrsqrt.pop %v3361
        %v3363 = vmul.f32 %v3353, %v3362
        %v3364 = vmul.f32 %v3354, %v3362
        %v3365 = vadd.f32 %v3339, 1.0
        %v3366 = vadd.f32 %v3341, 1.0
        %v3367 = vmul.f32 %v3363, %v3365
        %v3368 = vmul.f32 %v3364, %v3366
        %v3369 = vadd.f32 %v3367, %v3345
        %v3370 = vadd.f32 %v3368, %v3347
        %v3371 = vmax.f32 %v3369, 0.0
        %v3372 = vmax.f32 %v3370, 0.0
        %3373 = vst [vmem:[#allocation2 + $0x8] sm:$0xff] %v3371
        %3374 = vst [vmem:[#allocation2 + $0x10] sm:$0xff] %v3372
        %v3375 = vld [vmem:[#allocation2] sm:$0xff]
        %v3376 = vld [vmem:[#allocation2 + $0x8] sm:$0xff]
        %v3377 = vld [vmem:[#allocation2 + $0x10] sm:$0xff]
        %v3378 = vmul.f32 %v3375, %v651
        %v3379 = vmul.f32 %v3376, %v655
        %v3380 = vmul.f32 %v3377, %v653
        %3384 = vrot.lane.b32.xlu0 %v3378, 17
        %v3385 = vpop.permute.xlu0 %3384
        %3386 = vrot.lane.b32.xlu0 %v3379, 17
        %v3387 = vpop.permute.xlu0 %3386
        %3388 = vrot.lane.b32.xlu0 %v3380, 17
        %v3389 = vpop.permute.xlu0 %3388
        %v3390 = vsel %vm671, %v3385, %v3387
        %v3391 = vsel %vm671, %v3387, %v3389
        %3394 = vst [vmem:[#allocation3] sm:$0xff] %v3390
        %3395 = vst [vmem:[#allocation3 + $0x8] sm:$0xff] %v3391
        %v3396 = vld [vmem:[#allocation2] sm:$0xff]
        %v3397 = vld [vmem:[#allocation2 + $0x8] sm:$0xff]
        %v3398 = vld [vmem:[#allocation2 + $0x10] sm:$0xff]
        %3402 = vrot.lane.b32.xlu0 %v3396, 16
        %v3403 = vpop.permute.xlu0 %3402
        %3404 = vrot.lane.b32.xlu0 %v3397, 16
        %v3405 = vpop.permute.xlu0 %3404
        %3406 = vrot.lane.b32.xlu0 %v3398, 16
        %v3407 = vpop.permute.xlu0 %3406
        %v3408 = vsel %vm690, %v3403, %v3405
        %v3409 = vsel %vm690, %v3405, %v3407
        %3412 = vst [vmem:[#allocation3 + $0x10] sm:$0xff] %v3408
        %3413 = vst [vmem:[#allocation3 + $0x18] sm:$0xff] %v3409
        %v3414 = vld [vmem:[#allocation2] sm:$0xff]
        %v3415 = vld [vmem:[#allocation2 + $0x8] sm:$0xff]
        %v3416 = vld [vmem:[#allocation2 + $0x10] sm:$0xff]
        %v3417 = vmul.f32 %v3414, %v710
        %v3418 = vmul.f32 %v3415, %v714
        %v3419 = vmul.f32 %v3416, %v712
        %3423 = vrot.lane.b32.xlu0 %v3417, 15
        %v3424 = vpop.permute.xlu0 %3423
        %3425 = vrot.lane.b32.xlu0 %v3418, 15
        %v3426 = vpop.permute.xlu0 %3425
        %3427 = vrot.lane.b32.xlu0 %v3419, 15
        %v3428 = vpop.permute.xlu0 %3427
        %v3429 = vsel %vm730, %v3424, %v3426
        %v3430 = vsel %vm730, %v3426, %v3428
        %3433 = vst [vmem:[#allocation3 + $0x20] sm:$0xff] %v3429
        %3434 = vst [vmem:[#allocation3 + $0x28] sm:$0xff] %v3430
        %v3435 = vld [vmem:[#allocation2] sm:$0xff]
        %v3436 = vld [vmem:[#allocation2 + $0x8] sm:$0xff]
        %v3437 = vld [vmem:[#allocation2 + $0x10] sm:$0xff]
        %v3438 = vmul.f32 %v3435, %v741
        %v3439 = vmul.f32 %v3436, %v745
        %v3440 = vmul.f32 %v3437, %v743
        %3444 = vrot.lane.b32.xlu0 %v3438, 1
        %v3445 = vpop.permute.xlu0 %3444
        %3446 = vrot.lane.b32.xlu0 %v3439, 1
        %v3447 = vpop.permute.xlu0 %3446
        %3448 = vrot.lane.b32.xlu0 %v3440, 1
        %v3449 = vpop.permute.xlu0 %3448
        %v3450 = vsel %vm761, %v3445, %v3447
        %v3451 = vsel %vm761, %v3447, %v3449
        %3454 = vst [vmem:[#allocation3 + $0x30] sm:$0xff] %v3450
        %3455 = vst [vmem:[#allocation3 + $0x38] sm:$0xff] %v3451
        %v3456 = vld [vmem:[#allocation2 + $0x8] sm:$0xff]
        %v3457 = vld [vmem:[#allocation2 + $0x10] sm:$0xff]
        %3458 = vst [vmem:[#allocation3 + $0x40] sm:$0xff] %v3456
        %3459 = vst [vmem:[#allocation3 + $0x48] sm:$0xff] %v3457
        %v3460 = vld [vmem:[#allocation2 + $0x8] sm:$0xff]
        %v3461 = vld [vmem:[#allocation2 + $0x10] sm:$0xff]
        %v3462 = vld [vmem:[#allocation2 + $0x18] sm:$0xff]
        %v3463 = vmul.f32 %v3460, %v776
        %v3464 = vmul.f32 %v3461, %v779
        %v3465 = vmul.f32 %v3462, %v778
        %3469 = vrot.lane.b32.xlu0 %v3463, 127
        %v3470 = vpop.permute.xlu0 %3469
        %3471 = vrot.lane.b32.xlu0 %v3464, 127
        %v3472 = vpop.permute.xlu0 %3471
        %3473 = vrot.lane.b32.xlu0 %v3465, 127
        %v3474 = vpop.permute.xlu0 %3473
        %v3475 = vsel %vm744, %v3470, %v3472
        %v3476 = vsel %vm744, %v3472, %v3474
        %3479 = vst [vmem:[#allocation3 + $0x50] sm:$0xff] %v3475
        %3480 = vst [vmem:[#allocation3 + $0x58] sm:$0xff] %v3476
        %v3481 = vld [vmem:[#allocation2 + $0x8] sm:$0xff]
        %v3482 = vld [vmem:[#allocation2 + $0x10] sm:$0xff]
        %v3483 = vld [vmem:[#allocation2 + $0x18] sm:$0xff]
        %v3484 = vmul.f32 %v3481, %v805
        %v3485 = vmul.f32 %v3482, %v808
        %v3486 = vmul.f32 %v3483, %v807
        %3490 = vrot.lane.b32.xlu0 %v3484, 113
        %v3491 = vpop.permute.xlu0 %3490
        %3492 = vrot.lane.b32.xlu0 %v3485, 113
        %v3493 = vpop.permute.xlu0 %3492
        %3494 = vrot.lane.b32.xlu0 %v3486, 113
        %v3495 = vpop.permute.xlu0 %3494
        %v3496 = vsel %vm713, %v3491, %v3493
        %v3497 = vsel %vm713, %v3493, %v3495
        %3500 = vst [vmem:[#allocation3 + $0x60] sm:$0xff] %v3496
        %3501 = vst [vmem:[#allocation3 + $0x68] sm:$0xff] %v3497
        %v3502 = vld [vmem:[#allocation2 + $0x8] sm:$0xff]
        %v3503 = vld [vmem:[#allocation2 + $0x10] sm:$0xff]
        %v3504 = vld [vmem:[#allocation2 + $0x18] sm:$0xff]
        %3508 = vrot.lane.b32.xlu0 %v3502, 112
        %v3509 = vpop.permute.xlu0 %3508
        %3510 = vrot.lane.b32.xlu0 %v3503, 112
        %v3511 = vpop.permute.xlu0 %3510
        %3512 = vrot.lane.b32.xlu0 %v3504, 112
        %v3513 = vpop.permute.xlu0 %3512
        %v3514 = vsel %vm842, %v3509, %v3511
        %v3515 = vsel %vm842, %v3511, %v3513
        %3518 = vst [vmem:[#allocation3 + $0x70] sm:$0xff] %v3514
        %3519 = vst [vmem:[#allocation3 + $0x78] sm:$0xff] %v3515
        %v3520 = vld [vmem:[#allocation2 + $0x8] sm:$0xff]
        %v3521 = vld [vmem:[#allocation2 + $0x10] sm:$0xff]
        %v3522 = vld [vmem:[#allocation2 + $0x18] sm:$0xff]
        %v3523 = vmul.f32 %v3520, %v853
        %v3524 = vmul.f32 %v3521, %v856
        %v3525 = vmul.f32 %v3522, %v855
        %3529 = vrot.lane.b32.xlu0 %v3523, 111
        %v3530 = vpop.permute.xlu0 %3529
        %3531 = vrot.lane.b32.xlu0 %v3524, 111
        %v3532 = vpop.permute.xlu0 %3531
        %3533 = vrot.lane.b32.xlu0 %v3525, 111
        %v3534 = vpop.permute.xlu0 %3533
        %v3535 = vsel %vm654, %v3530, %v3532
        %v3536 = vsel %vm654, %v3532, %v3534
        %3539 = vst [vmem:[#allocation3 + $0x80] sm:$0xff] %v3535
        %3540 = vst [vmem:[#allocation3 + $0x88] sm:$0xff] %v3536
        %v3541 = vld [vmem:[%s13] sm:$0xff]
        %v3542 = vld [vmem:[#allocation3] sm:$0xff]
        %v3543 = vld [vmem:[#allocation3 + $0x8] sm:$0xff]
        %v3544 = vld [vmem:[#allocation3 + $0x10] sm:$0xff]
        %v3545 = vld [vmem:[#allocation3 + $0x18] sm:$0xff]
        %v3546 = vld [vmem:[#allocation3 + $0x20] sm:$0xff]
        %v3547 = vld [vmem:[#allocation3 + $0x28] sm:$0xff]
        %v3548 = vld [vmem:[#allocation3 + $0x30] sm:$0xff]
        %v3549 = vld [vmem:[#allocation3 + $0x38] sm:$0xff]
        %v3550 = vld [vmem:[#allocation3 + $0x40] sm:$0xff]
        %v3551 = vld [vmem:[#allocation3 + $0x48] sm:$0xff]
        %v3552 = vld [vmem:[#allocation3 + $0x50] sm:$0xff]
        %v3553 = vld [vmem:[#allocation3 + $0x58] sm:$0xff]
        %v3554 = vld [vmem:[#allocation3 + $0x60] sm:$0xff]
        %v3555 = vld [vmem:[#allocation3 + $0x68] sm:$0xff]
        %v3556 = vld [vmem:[#allocation3 + $0x70] sm:$0xff]
        %v3557 = vld [vmem:[#allocation3 + $0x78] sm:$0xff]
        %v3558 = vld [vmem:[#allocation3 + $0x80] sm:$0xff]
        %v3559 = vld [vmem:[#allocation3 + $0x88] sm:$0xff]
        %v3560 = vld [vmem:[%s14] sm:$0xff]
        %3562 = vset.pattern.permute.xlu0 0
        %3563 = vperm.xlu0 %3562, %v3560
        %v3564 = vpop.permute.xlu0 %3563
        %v3567 = vsel %vm980, %v3541, 0
        %3569 = vmatprep.subr.mxu0 %v3543
        %3570 = vmatpush1.msra.mxu0 %v3542
        %3571 = vmatprep.subr.mxu0 %v3545
        %3572 = vmatpush1.msra.mxu0 %v3544
        %3573 = vmatprep.subr.mxu0 %v3547
        %3574 = vmatpush1.msra.mxu0 %v3546
        %3575 = vmatprep.subr.mxu0 %v3549
        %3576 = vmatpush1.msra.mxu0 %v3548
        %3577 = vmatprep.subr.mxu0 %v3551
        %3578 = vmatpush1.msra.mxu0 %v3550
        %3579 = vmatprep.subr.mxu0 %v3553
        %3580 = vmatpush1.msra.mxu0 %v3552
        %3581 = vmatprep.subr.mxu0 %v3555
        %3582 = vmatpush1.msra.mxu0 %v3554
        %3583 = vmatprep.subr.mxu0 %v3557
        %3584 = vmatpush1.msra.mxu0 %v3556
        %3585 = vmatprep.subr.mxu0 %v3559
        %3586 = vmatpush1.msra.mxu0 %v3558
        %3587 = vmatprep.subr.mxu0 0.0
        %3588 = vmatpush1.msra.mxu0 0.0
        %3589 = vmatprep.subr.mxu0 0.0
        %3590 = vmatpush1.msra.mxu0 0.0
        %3591 = vmatprep.subr.mxu0 0.0
        %3592 = vmatpush1.msra.mxu0 0.0
        %3593 = vmatprep.subr.mxu0 0.0
        %3594 = vmatpush1.msra.mxu0 0.0
        %3595 = vmatprep.subr.mxu0 0.0
        %3596 = vmatpush1.msra.mxu0 0.0
        %3597 = vmatprep.subr.mxu0 0.0
        %3598 = vmatpush1.msra.mxu0 0.0
        %3599 = vmatprep.subr.mxu0 0.0
        %3600 = vmatpush1.msra.mxu0 0.0
        %3601 = vmatprep.subr.mxu0 0.0
        %3602 = vmatpush1.msra.mxu0 0.0
        %3603 = vmatprep.subr.mxu0 0.0
        %3604 = vmatpush1.msra.mxu0 0.0
        %3605 = vmatprep.subr.mxu0 0.0
        %3606 = vmatpush1.msra.mxu0 0.0
        %3607 = vmatprep.subr.mxu0 0.0
        %3608 = vmatpush1.msra.mxu0 0.0
        %3609 = vmatprep.subr.mxu0 0.0
        %3610 = vmatpush1.msra.mxu0 0.0
        %3611 = vmatprep.subr.mxu0 0.0
        %3612 = vmatpush1.msra.mxu0 0.0
        %3613 = vmatprep.subr.mxu0 0.0
        %3614 = vmatpush1.msra.mxu0 0.0
        %3615 = vmatprep.subr.mxu0 0.0
        %3616 = vmatpush1.msra.mxu0 0.0
        %3617 = vmatprep.subr.mxu0 0.0
        %3618 = vmatpush1.msra.mxu0 0.0
        %3619 = vmatprep.subr.mxu0 0.0
        %3620 = vmatpush1.msra.mxu0 0.0
        %3621 = vmatprep.subr.mxu0 0.0
        %3622 = vmatpush1.msra.mxu0 0.0
        %3623 = vmatprep.subr.mxu0 0.0
        %3624 = vmatpush1.msra.mxu0 0.0
        %3625 = vmatprep.subr.mxu0 0.0
        %3626 = vmatpush1.msra.mxu0 0.0
        %3627 = vmatprep.subr.mxu0 0.0
        %3628 = vmatpush1.msra.mxu0 0.0
        %3629 = vmatprep.subr.mxu0 0.0
        %3630 = vmatpush1.msra.mxu0 0.0
        %3631 = vmatprep.subr.mxu0 0.0
        %3632 = vmatpush1.msra.mxu0 0.0
        %3633 = vmatprep.mubr.f32.mxu0 0.0
        %3634 = vmatmul.mubr.f32.gmra.mrb[0].mxu0 %v3567
        %v3635 = vpop.f32.mrb[0].mxu0
        %v3636 = vadd.f32 %v3564, %v3635
        %v3637 = vpop.f32.mrb[0].mxu0
        %v3638 = vadd.f32 %v3564, %v3637
        %3639 = vdwg.mxu0
        %3640 = vst [vmem:[#allocation2 + $0x8] sm:$0xff] %v1170
        %3641 = vst [vmem:[#allocation2 + $0x10] sm:$0xff] %v1171
        %3642 = vst [vmem:[#allocation2 + $0x28] sm:$0xff] %v1172
        %3643 = vst [vmem:[#allocation2 + $0x30] sm:$0xff] %v1173
        %3644 = vst [vmem:[#allocation2 + $0x48] sm:$0xff] %v1174
        %3645 = vst [vmem:[#allocation2 + $0x50] sm:$0xff] %v1175
        %3646 = vst [vmem:[#allocation2 + $0x68] sm:$0xff] %v1176
        %3647 = vst [vmem:[#allocation2 + $0x70] sm:$0xff] %v1177
        %v3648 = vld [vmem:[#allocation2] sm:$0xff]
        %v3649 = vld [vmem:[#allocation2 + $0x8] sm:$0xff]
        %v3650 = vld [vmem:[#allocation2 + $0x10] sm:$0xff]
        %v3651 = vld [vmem:[#allocation2 + $0x20] sm:$0xff]
        %v3652 = vld [vmem:[#allocation2 + $0x28] sm:$0xff]
        %v3653 = vld [vmem:[#allocation2 + $0x30] sm:$0xff]
        %v3654 = vld [vmem:[#allocation2 + $0x40] sm:$0xff]
        %v3655 = vld [vmem:[#allocation2 + $0x48] sm:$0xff]
        %v3656 = vld [vmem:[#allocation2 + $0x50] sm:$0xff]
        %v3657 = vld [vmem:[#allocation2 + $0x60] sm:$0xff]
        %v3658 = vld [vmem:[#allocation2 + $0x68] sm:$0xff]
        %v3659 = vld [vmem:[#allocation2 + $0x70] sm:$0xff]
        %v3660 = vmul.f32 %v3648, %v651
        %v3661 = vmul.f32 %v3649, %v655
        %v3662 = vmul.f32 %v3650, %v653
        %v3663 = vmul.f32 %v3651, %v651
        %v3664 = vmul.f32 %v3652, %v655
        %v3665 = vmul.f32 %v3653, %v653
        %v3666 = vmul.f32 %v3654, %v651
        %v3667 = vmul.f32 %v3655, %v655
        %v3668 = vmul.f32 %v3656, %v653
        %v3669 = vmul.f32 %v3657, %v651
        %v3670 = vmul.f32 %v3658, %v655
        %v3671 = vmul.f32 %v3659, %v653
        %3684 = vrot.lane.b32.xlu0 %v3660, 17
        %v3685 = vpop.permute.xlu0 %3684
        %3686 = vrot.lane.b32.xlu0 %v3661, 17
        %v3687 = vpop.permute.xlu0 %3686
        %3688 = vrot.lane.b32.xlu0 %v3662, 17
        %v3689 = vpop.permute.xlu0 %3688
        %3690 = vrot.lane.b32.xlu0 %v3663, 17
        %v3691 = vpop.permute.xlu0 %3690
        %3692 = vrot.lane.b32.xlu0 %v3664, 17
        %v3693 = vpop.permute.xlu0 %3692
        %3694 = vrot.lane.b32.xlu0 %v3665, 17
        %v3695 = vpop.permute.xlu0 %3694
        %3696 = vrot.lane.b32.xlu0 %v3666, 17
        %v3697 = vpop.permute.xlu0 %3696
        %3698 = vrot.lane.b32.xlu0 %v3667, 17
        %v3699 = vpop.permute.xlu0 %3698
        %3700 = vrot.lane.b32.xlu0 %v3668, 17
        %v3701 = vpop.permute.xlu0 %3700
        %3702 = vrot.lane.b32.xlu0 %v3669, 17
        %v3703 = vpop.permute.xlu0 %3702
        %3704 = vrot.lane.b32.xlu0 %v3670, 17
        %v3705 = vpop.permute.xlu0 %3704
        %3706 = vrot.lane.b32.xlu0 %v3671, 17
        %v3707 = vpop.permute.xlu0 %3706
        %v3708 = vsel %vm671, %v3685, %v3687
        %v3709 = vsel %vm671, %v3687, %v3689
        %v3710 = vsel %vm671, %v3691, %v3693
        %v3711 = vsel %vm671, %v3693, %v3695
        %v3712 = vsel %vm671, %v3697, %v3699
        %v3713 = vsel %vm671, %v3699, %v3701
        %v3714 = vsel %vm671, %v3703, %v3705
        %v3715 = vsel %vm671, %v3705, %v3707
        %3724 = vst [vmem:[#allocation3] sm:$0xff] %v3708
        %3725 = vst [vmem:[#allocation3 + $0x8] sm:$0xff] %v3709
        %3726 = vst [vmem:[#allocation3 + $0x10] sm:$0xff] %v3710
        %3727 = vst [vmem:[#allocation3 + $0x18] sm:$0xff] %v3711
        %3728 = vst [vmem:[#allocation3 + $0x20] sm:$0xff] %v3712
        %3729 = vst [vmem:[#allocation3 + $0x28] sm:$0xff] %v3713
        %3730 = vst [vmem:[#allocation3 + $0x30] sm:$0xff] %v3714
        %3731 = vst [vmem:[#allocation3 + $0x38] sm:$0xff] %v3715
        %v3732 = vld [vmem:[#allocation2] sm:$0xff]
        %v3733 = vld [vmem:[#allocation2 + $0x8] sm:$0xff]
        %v3734 = vld [vmem:[#allocation2 + $0x10] sm:$0xff]
        %v3735 = vld [vmem:[#allocation2 + $0x20] sm:$0xff]
        %v3736 = vld [vmem:[#allocation2 + $0x28] sm:$0xff]
        %v3737 = vld [vmem:[#allocation2 + $0x30] sm:$0xff]
        %v3738 = vld [vmem:[#allocation2 + $0x40] sm:$0xff]
        %v3739 = vld [vmem:[#allocation2 + $0x48] sm:$0xff]
        %v3740 = vld [vmem:[#allocation2 + $0x50] sm:$0xff]
        %v3741 = vld [vmem:[#allocation2 + $0x60] sm:$0xff]
        %v3742 = vld [vmem:[#allocation2 + $0x68] sm:$0xff]
        %v3743 = vld [vmem:[#allocation2 + $0x70] sm:$0xff]
        %3756 = vrot.lane.b32.xlu0 %v3732, 16
        %v3757 = vpop.permute.xlu0 %3756
        %3758 = vrot.lane.b32.xlu0 %v3733, 16
        %v3759 = vpop.permute.xlu0 %3758
        %3760 = vrot.lane.b32.xlu0 %v3734, 16
        %v3761 = vpop.permute.xlu0 %3760
        %3762 = vrot.lane.b32.xlu0 %v3735, 16
        %v3763 = vpop.permute.xlu0 %3762
        %3764 = vrot.lane.b32.xlu0 %v3736, 16
        %v3765 = vpop.permute.xlu0 %3764
        %3766 = vrot.lane.b32.xlu0 %v3737, 16
        %v3767 = vpop.permute.xlu0 %3766
        %3768 = vrot.lane.b32.xlu0 %v3738, 16
        %v3769 = vpop.permute.xlu0 %3768
        %3770 = vrot.lane.b32.xlu0 %v3739, 16
        %v3771 = vpop.permute.xlu0 %3770
        %3772 = vrot.lane.b32.xlu0 %v3740, 16
        %v3773 = vpop.permute.xlu0 %3772
        %3774 = vrot.lane.b32.xlu0 %v3741, 16
        %v3775 = vpop.permute.xlu0 %3774
        %3776 = vrot.lane.b32.xlu0 %v3742, 16
        %v3777 = vpop.permute.xlu0 %3776
        %3778 = vrot.lane.b32.xlu0 %v3743, 16
        %v3779 = vpop.permute.xlu0 %3778
        %v3780 = vsel %vm690, %v3757, %v3759
        %v3781 = vsel %vm690, %v3759, %v3761
        %v3782 = vsel %vm690, %v3763, %v3765
        %v3783 = vsel %vm690, %v3765, %v3767
        %v3784 = vsel %vm690, %v3769, %v3771
        %v3785 = vsel %vm690, %v3771, %v3773
        %v3786 = vsel %vm690, %v3775, %v3777
        %v3787 = vsel %vm690, %v3777, %v3779
        %3796 = vst [vmem:[#allocation3 + $0x40] sm:$0xff] %v3780
        %3797 = vst [vmem:[#allocation3 + $0x48] sm:$0xff] %v3781
        %3798 = vst [vmem:[#allocation3 + $0x50] sm:$0xff] %v3782
        %3799 = vst [vmem:[#allocation3 + $0x58] sm:$0xff] %v3783
        %3800 = vst [vmem:[#allocation3 + $0x60] sm:$0xff] %v3784
        %3801 = vst [vmem:[#allocation3 + $0x68] sm:$0xff] %v3785
        %3802 = vst [vmem:[#allocation3 + $0x70] sm:$0xff] %v3786
        %3803 = vst [vmem:[#allocation3 + $0x78] sm:$0xff] %v3787
        %v3804 = vld [vmem:[#allocation2] sm:$0xff]
        %v3805 = vld [vmem:[#allocation2 + $0x8] sm:$0xff]
        %v3806 = vld [vmem:[#allocation2 + $0x10] sm:$0xff]
        %v3807 = vld [vmem:[#allocation2 + $0x20] sm:$0xff]
        %v3808 = vld [vmem:[#allocation2 + $0x28] sm:$0xff]
        %v3809 = vld [vmem:[#allocation2 + $0x30] sm:$0xff]
        %v3810 = vld [vmem:[#allocation2 + $0x40] sm:$0xff]
        %v3811 = vld [vmem:[#allocation2 + $0x48] sm:$0xff]
        %v3812 = vld [vmem:[#allocation2 + $0x50] sm:$0xff]
        %v3813 = vld [vmem:[#allocation2 + $0x60] sm:$0xff]
        %v3814 = vld [vmem:[#allocation2 + $0x68] sm:$0xff]
        %v3815 = vld [vmem:[#allocation2 + $0x70] sm:$0xff]
        %v3816 = vmul.f32 %v3804, %v710
        %v3817 = vmul.f32 %v3805, %v714
        %v3818 = vmul.f32 %v3806, %v712
        %v3819 = vmul.f32 %v3807, %v710
        %v3820 = vmul.f32 %v3808, %v714
        %v3821 = vmul.f32 %v3809, %v712
        %v3822 = vmul.f32 %v3810, %v710
        %v3823 = vmul.f32 %v3811, %v714
        %v3824 = vmul.f32 %v3812, %v712
        %v3825 = vmul.f32 %v3813, %v710
        %v3826 = vmul.f32 %v3814, %v714
        %v3827 = vmul.f32 %v3815, %v712
        %3840 = vrot.lane.b32.xlu0 %v3816, 15
        %v3841 = vpop.permute.xlu0 %3840
        %3842 = vrot.lane.b32.xlu0 %v3817, 15
        %v3843 = vpop.permute.xlu0 %3842
        %3844 = vrot.lane.b32.xlu0 %v3818, 15
        %v3845 = vpop.permute.xlu0 %3844
        %3846 = vrot.lane.b32.xlu0 %v3819, 15
        %v3847 = vpop.permute.xlu0 %3846
        %3848 = vrot.lane.b32.xlu0 %v3820, 15
        %v3849 = vpop.permute.xlu0 %3848
        %3850 = vrot.lane.b32.xlu0 %v3821, 15
        %v3851 = vpop.permute.xlu0 %3850
        %3852 = vrot.lane.b32.xlu0 %v3822, 15
        %v3853 = vpop.permute.xlu0 %3852
        %3854 = vrot.lane.b32.xlu0 %v3823, 15
        %v3855 = vpop.permute.xlu0 %3854
        %3856 = vrot.lane.b32.xlu0 %v3824, 15
        %v3857 = vpop.permute.xlu0 %3856
        %3858 = vrot.lane.b32.xlu0 %v3825, 15
        %v3859 = vpop.permute.xlu0 %3858
        %3860 = vrot.lane.b32.xlu0 %v3826, 15
        %v3861 = vpop.permute.xlu0 %3860
        %3862 = vrot.lane.b32.xlu0 %v3827, 15
        %v3863 = vpop.permute.xlu0 %3862
        %v3864 = vsel %vm730, %v3841, %v3843
        %v3865 = vsel %vm730, %v3843, %v3845
        %v3866 = vsel %vm730, %v3847, %v3849
        %v3867 = vsel %vm730, %v3849, %v3851
        %v3868 = vsel %vm730, %v3853, %v3855
        %v3869 = vsel %vm730, %v3855, %v3857
        %v3870 = vsel %vm730, %v3859, %v3861
        %v3871 = vsel %vm730, %v3861, %v3863
        %3880 = vst [vmem:[#allocation3 + $0x80] sm:$0xff] %v3864
        %3881 = vst [vmem:[#allocation3 + $0x88] sm:$0xff] %v3865
        %3882 = vst [vmem:[#allocation3 + $0x90] sm:$0xff] %v3866
        %3883 = vst [vmem:[#allocation3 + $0x98] sm:$0xff] %v3867
        %3884 = vst [vmem:[#allocation3 + $0xa0] sm:$0xff] %v3868
        %3885 = vst [vmem:[#allocation3 + $0xa8] sm:$0xff] %v3869
        %3886 = vst [vmem:[#allocation3 + $0xb0] sm:$0xff] %v3870
        %3887 = vst [vmem:[#allocation3 + $0xb8] sm:$0xff] %v3871
        %v3888 = vld [vmem:[#allocation2] sm:$0xff]
        %v3889 = vld [vmem:[#allocation2 + $0x8] sm:$0xff]
        %v3890 = vld [vmem:[#allocation2 + $0x10] sm:$0xff]
        %v3891 = vld [vmem:[#allocation2 + $0x20] sm:$0xff]
        %v3892 = vld [vmem:[#allocation2 + $0x28] sm:$0xff]
        %v3893 = vld [vmem:[#allocation2 + $0x30] sm:$0xff]
        %v3894 = vld [vmem:[#allocation2 + $0x40] sm:$0xff]
        %v3895 = vld [vmem:[#allocation2 + $0x48] sm:$0xff]
        %v3896 = vld [vmem:[#allocation2 + $0x50] sm:$0xff]
        %v3897 = vld [vmem:[#allocation2 + $0x60] sm:$0xff]
        %v3898 = vld [vmem:[#allocation2 + $0x68] sm:$0xff]
        %v3899 = vld [vmem:[#allocation2 + $0x70] sm:$0xff]
        %v3900 = vmul.f32 %v3888, %v741
        %v3901 = vmul.f32 %v3889, %v745
        %v3902 = vmul.f32 %v3890, %v743
        %v3903 = vmul.f32 %v3891, %v741
        %v3904 = vmul.f32 %v3892, %v745
        %v3905 = vmul.f32 %v3893, %v743
        %v3906 = vmul.f32 %v3894, %v741
        %v3907 = vmul.f32 %v3895, %v745
        %v3908 = vmul.f32 %v3896, %v743
        %v3909 = vmul.f32 %v3897, %v741
        %v3910 = vmul.f32 %v3898, %v745
        %v3911 = vmul.f32 %v3899, %v743
        %3924 = vrot.lane.b32.xlu0 %v3900, 1
        %v3925 = vpop.permute.xlu0 %3924
        %3926 = vrot.lane.b32.xlu0 %v3901, 1
        %v3927 = vpop.permute.xlu0 %3926
        %3928 = vrot.lane.b32.xlu0 %v3902, 1
        %v3929 = vpop.permute.xlu0 %3928
        %3930 = vrot.lane.b32.xlu0 %v3903, 1
        %v3931 = vpop.permute.xlu0 %3930
        %3932 = vrot.lane.b32.xlu0 %v3904, 1
        %v3933 = vpop.permute.xlu0 %3932
        %3934 = vrot.lane.b32.xlu0 %v3905, 1
        %v3935 = vpop.permute.xlu0 %3934
        %3936 = vrot.lane.b32.xlu0 %v3906, 1
        %v3937 = vpop.permute.xlu0 %3936
        %3938 = vrot.lane.b32.xlu0 %v3907, 1
        %v3939 = vpop.permute.xlu0 %3938
        %3940 = vrot.lane.b32.xlu0 %v3908, 1
        %v3941 = vpop.permute.xlu0 %3940
        %3942 = vrot.lane.b32.xlu0 %v3909, 1
        %v3943 = vpop.permute.xlu0 %3942
        %3944 = vrot.lane.b32.xlu0 %v3910, 1
        %v3945 = vpop.permute.xlu0 %3944
        %3946 = vrot.lane.b32.xlu0 %v3911, 1
        %v3947 = vpop.permute.xlu0 %3946
        %v3948 = vsel %vm761, %v3925, %v3927
        %v3949 = vsel %vm761, %v3927, %v3929
        %v3950 = vsel %vm761, %v3931, %v3933
        %v3951 = vsel %vm761, %v3933, %v3935
        %v3952 = vsel %vm761, %v3937, %v3939
        %v3953 = vsel %vm761, %v3939, %v3941
        %v3954 = vsel %vm761, %v3943, %v3945
        %v3955 = vsel %vm761, %v3945, %v3947
        %3964 = vst [vmem:[#allocation3 + $0xc0] sm:$0xff] %v3948
        %3965 = vst [vmem:[#allocation3 + $0xc8] sm:$0xff] %v3949
        %3966 = vst [vmem:[#allocation3 + $0xd0] sm:$0xff] %v3950
        %3967 = vst [vmem:[#allocation3 + $0xd8] sm:$0xff] %v3951
        %3968 = vst [vmem:[#allocation3 + $0xe0] sm:$0xff] %v3952
        %3969 = vst [vmem:[#allocation3 + $0xe8] sm:$0xff] %v3953
        %3970 = vst [vmem:[#allocation3 + $0xf0] sm:$0xff] %v3954
        %3971 = vst [vmem:[#allocation3 + $0xf8] sm:$0xff] %v3955
        %v3972 = vld [vmem:[#allocation2 + $0x8] sm:$0xff]
        %v3973 = vld [vmem:[#allocation2 + $0x10] sm:$0xff]
        %v3974 = vld [vmem:[#allocation2 + $0x28] sm:$0xff]
        %v3975 = vld [vmem:[#allocation2 + $0x30] sm:$0xff]
        %v3976 = vld [vmem:[#allocation2 + $0x48] sm:$0xff]
        %v3977 = vld [vmem:[#allocation2 + $0x50] sm:$0xff]
        %v3978 = vld [vmem:[#allocation2 + $0x68] sm:$0xff]
        %v3979 = vld [vmem:[#allocation2 + $0x70] sm:$0xff]
        %3980 = vst [vmem:[#allocation3 + $0x100] sm:$0xff] %v3972
        %3981 = vst [vmem:[#allocation3 + $0x108] sm:$0xff] %v3973
        %3982 = vst [vmem:[#allocation3 + $0x110] sm:$0xff] %v3974
        %3983 = vst [vmem:[#allocation3 + $0x118] sm:$0xff] %v3975
        %3984 = vst [vmem:[#allocation3 + $0x120] sm:$0xff] %v3976
        %3985 = vst [vmem:[#allocation3 + $0x128] sm:$0xff] %v3977
        %3986 = vst [vmem:[#allocation3 + $0x130] sm:$0xff] %v3978
        %3987 = vst [vmem:[#allocation3 + $0x138] sm:$0xff] %v3979
        %v3988 = vld [vmem:[#allocation2 + $0x8] sm:$0xff]
        %v3989 = vld [vmem:[#allocation2 + $0x10] sm:$0xff]
        %v3990 = vld [vmem:[#allocation2 + $0x18] sm:$0xff]
        %v3991 = vld [vmem:[#allocation2 + $0x28] sm:$0xff]
        %v3992 = vld [vmem:[#allocation2 + $0x30] sm:$0xff]
        %v3993 = vld [vmem:[#allocation2 + $0x38] sm:$0xff]
        %v3994 = vld [vmem:[#allocation2 + $0x48] sm:$0xff]
        %v3995 = vld [vmem:[#allocation2 + $0x50] sm:$0xff]
        %v3996 = vld [vmem:[#allocation2 + $0x58] sm:$0xff]
        %v3997 = vld [vmem:[#allocation2 + $0x68] sm:$0xff]
        %v3998 = vld [vmem:[#allocation2 + $0x70] sm:$0xff]
        %v3999 = vld [vmem:[#allocation2 + $0x78] sm:$0xff]
        %v4000 = vmul.f32 %v3988, %v776
        %v4001 = vmul.f32 %v3989, %v779
        %v4002 = vmul.f32 %v3990, %v778
        %v4003 = vmul.f32 %v3991, %v776
        %v4004 = vmul.f32 %v3992, %v779
        %v4005 = vmul.f32 %v3993, %v778
        %v4006 = vmul.f32 %v3994, %v776
        %v4007 = vmul.f32 %v3995, %v779
        %v4008 = vmul.f32 %v3996, %v778
        %v4009 = vmul.f32 %v3997, %v776
        %v4010 = vmul.f32 %v3998, %v779
        %v4011 = vmul.f32 %v3999, %v778
        %4024 = vrot.lane.b32.xlu0 %v4000, 127
        %v4025 = vpop.permute.xlu0 %4024
        %4026 = vrot.lane.b32.xlu0 %v4001, 127
        %v4027 = vpop.permute.xlu0 %4026
        %4028 = vrot.lane.b32.xlu0 %v4002, 127
        %v4029 = vpop.permute.xlu0 %4028
        %4030 = vrot.lane.b32.xlu0 %v4003, 127
        %v4031 = vpop.permute.xlu0 %4030
        %4032 = vrot.lane.b32.xlu0 %v4004, 127
        %v4033 = vpop.permute.xlu0 %4032
        %4034 = vrot.lane.b32.xlu0 %v4005, 127
        %v4035 = vpop.permute.xlu0 %4034
        %4036 = vrot.lane.b32.xlu0 %v4006, 127
        %v4037 = vpop.permute.xlu0 %4036
        %4038 = vrot.lane.b32.xlu0 %v4007, 127
        %v4039 = vpop.permute.xlu0 %4038
        %4040 = vrot.lane.b32.xlu0 %v4008, 127
        %v4041 = vpop.permute.xlu0 %4040
        %4042 = vrot.lane.b32.xlu0 %v4009, 127
        %v4043 = vpop.permute.xlu0 %4042
        %4044 = vrot.lane.b32.xlu0 %v4010, 127
        %v4045 = vpop.permute.xlu0 %4044
        %4046 = vrot.lane.b32.xlu0 %v4011, 127
        %v4047 = vpop.permute.xlu0 %4046
        %v4048 = vsel %vm744, %v4025, %v4027
        %v4049 = vsel %vm744, %v4027, %v4029
        %v4050 = vsel %vm744, %v4031, %v4033
        %v4051 = vsel %vm744, %v4033, %v4035
        %v4052 = vsel %vm744, %v4037, %v4039
        %v4053 = vsel %vm744, %v4039, %v4041
        %v4054 = vsel %vm744, %v4043, %v4045
        %v4055 = vsel %vm744, %v4045, %v4047
        %4064 = vst [vmem:[#allocation3 + $0x140] sm:$0xff] %v4048
        %4065 = vst [vmem:[#allocation3 + $0x148] sm:$0xff] %v4049
        %4066 = vst [vmem:[#allocation3 + $0x150] sm:$0xff] %v4050
        %4067 = vst [vmem:[#allocation3 + $0x158] sm:$0xff] %v4051
        %4068 = vst [vmem:[#allocation3 + $0x160] sm:$0xff] %v4052
        %4069 = vst [vmem:[#allocation3 + $0x168] sm:$0xff] %v4053
        %4070 = vst [vmem:[#allocation3 + $0x170] sm:$0xff] %v4054
        %4071 = vst [vmem:[#allocation3 + $0x178] sm:$0xff] %v4055
        %v4072 = vld [vmem:[#allocation2 + $0x8] sm:$0xff]
        %v4073 = vld [vmem:[#allocation2 + $0x10] sm:$0xff]
        %v4074 = vld [vmem:[#allocation2 + $0x18] sm:$0xff]
        %v4075 = vld [vmem:[#allocation2 + $0x28] sm:$0xff]
        %v4076 = vld [vmem:[#allocation2 + $0x30] sm:$0xff]
        %v4077 = vld [vmem:[#allocation2 + $0x38] sm:$0xff]
        %v4078 = vld [vmem:[#allocation2 + $0x48] sm:$0xff]
        %v4079 = vld [vmem:[#allocation2 + $0x50] sm:$0xff]
        %v4080 = vld [vmem:[#allocation2 + $0x58] sm:$0xff]
        %v4081 = vld [vmem:[#allocation2 + $0x68] sm:$0xff]
        %v4082 = vld [vmem:[#allocation2 + $0x70] sm:$0xff]
        %v4083 = vld [vmem:[#allocation2 + $0x78] sm:$0xff]
        %v4084 = vmul.f32 %v4072, %v805
        %v4085 = vmul.f32 %v4073, %v808
        %v4086 = vmul.f32 %v4074, %v807
        %v4087 = vmul.f32 %v4075, %v805
        %v4088 = vmul.f32 %v4076, %v808
        %v4089 = vmul.f32 %v4077, %v807
        %v4090 = vmul.f32 %v4078, %v805
        %v4091 = vmul.f32 %v4079, %v808
        %v4092 = vmul.f32 %v4080, %v807
        %v4093 = vmul.f32 %v4081, %v805
        %v4094 = vmul.f32 %v4082, %v808
        %v4095 = vmul.f32 %v4083, %v807
        %4108 = vrot.lane.b32.xlu0 %v4084, 113
        %v4109 = vpop.permute.xlu0 %4108
        %4110 = vrot.lane.b32.xlu0 %v4085, 113
        %v4111 = vpop.permute.xlu0 %4110
        %4112 = vrot.lane.b32.xlu0 %v4086, 113
        %v4113 = vpop.permute.xlu0 %4112
        %4114 = vrot.lane.b32.xlu0 %v4087, 113
        %v4115 = vpop.permute.xlu0 %4114
        %4116 = vrot.lane.b32.xlu0 %v4088, 113
        %v4117 = vpop.permute.xlu0 %4116
        %4118 = vrot.lane.b32.xlu0 %v4089, 113
        %v4119 = vpop.permute.xlu0 %4118
        %4120 = vrot.lane.b32.xlu0 %v4090, 113
        %v4121 = vpop.permute.xlu0 %4120
        %4122 = vrot.lane.b32.xlu0 %v4091, 113
        %v4123 = vpop.permute.xlu0 %4122
        %4124 = vrot.lane.b32.xlu0 %v4092, 113
        %v4125 = vpop.permute.xlu0 %4124
        %4126 = vrot.lane.b32.xlu0 %v4093, 113
        %v4127 = vpop.permute.xlu0 %4126
        %4128 = vrot.lane.b32.xlu0 %v4094, 113
        %v4129 = vpop.permute.xlu0 %4128
        %4130 = vrot.lane.b32.xlu0 %v4095, 113
        %v4131 = vpop.permute.xlu0 %4130
        %v4132 = vsel %vm713, %v4109, %v4111
        %v4133 = vsel %vm713, %v4111, %v4113
        %v4134 = vsel %vm713, %v4115, %v4117
        %v4135 = vsel %vm713, %v4117, %v4119
        %v4136 = vsel %vm713, %v4121, %v4123
        %v4137 = vsel %vm713, %v4123, %v4125
        %v4138 = vsel %vm713, %v4127, %v4129
        %v4139 = vsel %vm713, %v4129, %v4131
        %4148 = vst [vmem:[#allocation3 + $0x180] sm:$0xff] %v4132
        %4149 = vst [vmem:[#allocation3 + $0x188] sm:$0xff] %v4133
        %4150 = vst [vmem:[#allocation3 + $0x190] sm:$0xff] %v4134
        %4151 = vst [vmem:[#allocation3 + $0x198] sm:$0xff] %v4135
        %4152 = vst [vmem:[#allocation3 + $0x1a0] sm:$0xff] %v4136
        %4153 = vst [vmem:[#allocation3 + $0x1a8] sm:$0xff] %v4137
        %4154 = vst [vmem:[#allocation3 + $0x1b0] sm:$0xff] %v4138
        %4155 = vst [vmem:[#allocation3 + $0x1b8] sm:$0xff] %v4139
        %v4156 = vld [vmem:[#allocation2 + $0x8] sm:$0xff]
        %v4157 = vld [vmem:[#allocation2 + $0x10] sm:$0xff]
        %v4158 = vld [vmem:[#allocation2 + $0x18] sm:$0xff]
        %v4159 = vld [vmem:[#allocation2 + $0x28] sm:$0xff]
        %v4160 = vld [vmem:[#allocation2 + $0x30] sm:$0xff]
        %v4161 = vld [vmem:[#allocation2 + $0x38] sm:$0xff]
        %v4162 = vld [vmem:[#allocation2 + $0x48] sm:$0xff]
        %v4163 = vld [vmem:[#allocation2 + $0x50] sm:$0xff]
        %v4164 = vld [vmem:[#allocation2 + $0x58] sm:$0xff]
        %v4165 = vld [vmem:[#allocation2 + $0x68] sm:$0xff]
        %v4166 = vld [vmem:[#allocation2 + $0x70] sm:$0xff]
        %v4167 = vld [vmem:[#allocation2 + $0x78] sm:$0xff]
        %4180 = vrot.lane.b32.xlu0 %v4156, 112
        %v4181 = vpop.permute.xlu0 %4180
        %4182 = vrot.lane.b32.xlu0 %v4157, 112
        %v4183 = vpop.permute.xlu0 %4182
        %4184 = vrot.lane.b32.xlu0 %v4158, 112
        %v4185 = vpop.permute.xlu0 %4184
        %4186 = vrot.lane.b32.xlu0 %v4159, 112
        %v4187 = vpop.permute.xlu0 %4186
        %4188 = vrot.lane.b32.xlu0 %v4160, 112
        %v4189 = vpop.permute.xlu0 %4188
        %4190 = vrot.lane.b32.xlu0 %v4161, 112
        %v4191 = vpop.permute.xlu0 %4190
        %4192 = vrot.lane.b32.xlu0 %v4162, 112
        %v4193 = vpop.permute.xlu0 %4192
        %4194 = vrot.lane.b32.xlu0 %v4163, 112
        %v4195 = vpop.permute.xlu0 %4194
        %4196 = vrot.lane.b32.xlu0 %v4164, 112
        %v4197 = vpop.permute.xlu0 %4196
        %4198 = vrot.lane.b32.xlu0 %v4165, 112
        %v4199 = vpop.permute.xlu0 %4198
        %4200 = vrot.lane.b32.xlu0 %v4166, 112
        %v4201 = vpop.permute.xlu0 %4200
        %4202 = vrot.lane.b32.xlu0 %v4167, 112
        %v4203 = vpop.permute.xlu0 %4202
        %v4204 = vsel %vm842, %v4181, %v4183
        %v4205 = vsel %vm842, %v4183, %v4185
        %v4206 = vsel %vm842, %v4187, %v4189
        %v4207 = vsel %vm842, %v4189, %v4191
        %v4208 = vsel %vm842, %v4193, %v4195
        %v4209 = vsel %vm842, %v4195, %v4197
        %v4210 = vsel %vm842, %v4199, %v4201
        %v4211 = vsel %vm842, %v4201, %v4203
        %4220 = vst [vmem:[#allocation3 + $0x1c0] sm:$0xff] %v4204
        %4221 = vst [vmem:[#allocation3 + $0x1c8] sm:$0xff] %v4205
        %4222 = vst [vmem:[#allocation3 + $0x1d0] sm:$0xff] %v4206
        %4223 = vst [vmem:[#allocation3 + $0x1d8] sm:$0xff] %v4207
        %4224 = vst [vmem:[#allocation3 + $0x1e0] sm:$0xff] %v4208
        %4225 = vst [vmem:[#allocation3 + $0x1e8] sm:$0xff] %v4209
        %4226 = vst [vmem:[#allocation3 + $0x1f0] sm:$0xff] %v4210
        %4227 = vst [vmem:[#allocation3 + $0x1f8] sm:$0xff] %v4211
        %v4228 = vld [vmem:[#allocation2 + $0x8] sm:$0xff]
        %v4229 = vld [vmem:[#allocation2 + $0x10] sm:$0xff]
        %v4230 = vld [vmem:[#allocation2 + $0x18] sm:$0xff]
        %v4231 = vld [vmem:[#allocation2 + $0x28] sm:$0xff]
        %v4232 = vld [vmem:[#allocation2 + $0x30] sm:$0xff]
        %v4233 = vld [vmem:[#allocation2 + $0x38] sm:$0xff]
        %v4234 = vld [vmem:[#allocation2 + $0x48] sm:$0xff]
        %v4235 = vld [vmem:[#allocation2 + $0x50] sm:$0xff]
        %v4236 = vld [vmem:[#allocation2 + $0x58] sm:$0xff]
        %v4237 = vld [vmem:[#allocation2 + $0x68] sm:$0xff]
        %v4238 = vld [vmem:[#allocation2 + $0x70] sm:$0xff]
        %v4239 = vld [vmem:[#allocation2 + $0x78] sm:$0xff]
        %v4240 = vmul.f32 %v4228, %v853
        %v4241 = vmul.f32 %v4229, %v856
        %v4242 = vmul.f32 %v4230, %v855
        %v4243 = vmul.f32 %v4231, %v853
        %v4244 = vmul.f32 %v4232, %v856
        %v4245 = vmul.f32 %v4233, %v855
        %v4246 = vmul.f32 %v4234, %v853
        %v4247 = vmul.f32 %v4235, %v856
        %v4248 = vmul.f32 %v4236, %v855
        %v4249 = vmul.f32 %v4237, %v853
        %v4250 = vmul.f32 %v4238, %v856
        %v4251 = vmul.f32 %v4239, %v855
        %4264 = vrot.lane.b32.xlu0 %v4240, 111
        %v4265 = vpop.permute.xlu0 %4264
        %4266 = vrot.lane.b32.xlu0 %v4241, 111
        %v4267 = vpop.permute.xlu0 %4266
        %4268 = vrot.lane.b32.xlu0 %v4242, 111
        %v4269 = vpop.permute.xlu0 %4268
        %4270 = vrot.lane.b32.xlu0 %v4243, 111
        %v4271 = vpop.permute.xlu0 %4270
        %4272 = vrot.lane.b32.xlu0 %v4244, 111
        %v4273 = vpop.permute.xlu0 %4272
        %4274 = vrot.lane.b32.xlu0 %v4245, 111
        %v4275 = vpop.permute.xlu0 %4274
        %4276 = vrot.lane.b32.xlu0 %v4246, 111
        %v4277 = vpop.permute.xlu0 %4276
        %4278 = vrot.lane.b32.xlu0 %v4247, 111
        %v4279 = vpop.permute.xlu0 %4278
        %4280 = vrot.lane.b32.xlu0 %v4248, 111
        %v4281 = vpop.permute.xlu0 %4280
        %4282 = vrot.lane.b32.xlu0 %v4249, 111
        %v4283 = vpop.permute.xlu0 %4282
        %4284 = vrot.lane.b32.xlu0 %v4250, 111
        %v4285 = vpop.permute.xlu0 %4284
        %4286 = vrot.lane.b32.xlu0 %v4251, 111
        %v4287 = vpop.permute.xlu0 %4286
        %v4288 = vsel %vm654, %v4265, %v4267
        %v4289 = vsel %vm654, %v4267, %v4269
        %v4290 = vsel %vm654, %v4271, %v4273
        %v4291 = vsel %vm654, %v4273, %v4275
        %v4292 = vsel %vm654, %v4277, %v4279
        %v4293 = vsel %vm654, %v4279, %v4281
        %v4294 = vsel %vm654, %v4283, %v4285
        %v4295 = vsel %vm654, %v4285, %v4287
        %4304 = vst [vmem:[#allocation3 + $0x200] sm:$0xff] %v4288
        %4305 = vst [vmem:[#allocation3 + $0x208] sm:$0xff] %v4289
        %4306 = vst [vmem:[#allocation3 + $0x210] sm:$0xff] %v4290
        %4307 = vst [vmem:[#allocation3 + $0x218] sm:$0xff] %v4291
        %4308 = vst [vmem:[#allocation3 + $0x220] sm:$0xff] %v4292
        %4309 = vst [vmem:[#allocation3 + $0x228] sm:$0xff] %v4293
        %4310 = vst [vmem:[#allocation3 + $0x230] sm:$0xff] %v4294
        %4311 = vst [vmem:[#allocation3 + $0x238] sm:$0xff] %v4295
        %v4312 = vld [vmem:[%s9] sm:$0xff]
        %v4313 = vld [vmem:[%s9 + $0x8] sm:$0xff]
        %v4314 = vld [vmem:[%s9 + $0x10] sm:$0xff]
        %v4315 = vld [vmem:[%s9 + $0x18] sm:$0xff]
        %v4316 = vld [vmem:[%s9 + $0x20] sm:$0xff]
        %v4317 = vld [vmem:[%s9 + $0x28] sm:$0xff]
        %v4318 = vld [vmem:[#allocation3] sm:$0xff]
        %v4319 = vld [vmem:[#allocation3 + $0x8] sm:$0xff]
        %v4320 = vld [vmem:[#allocation3 + $0x10] sm:$0xff]
        %v4321 = vld [vmem:[#allocation3 + $0x18] sm:$0xff]
        %v4322 = vld [vmem:[#allocation3 + $0x20] sm:$0xff]
        %v4323 = vld [vmem:[#allocation3 + $0x28] sm:$0xff]
        %v4324 = vld [vmem:[#allocation3 + $0x30] sm:$0xff]
        %v4325 = vld [vmem:[#allocation3 + $0x38] sm:$0xff]
        %v4326 = vld [vmem:[#allocation3 + $0x40] sm:$0xff]
        %v4327 = vld [vmem:[#allocation3 + $0x48] sm:$0xff]
        %v4328 = vld [vmem:[#allocation3 + $0x50] sm:$0xff]
        %v4329 = vld [vmem:[#allocation3 + $0x58] sm:$0xff]
        %v4330 = vld [vmem:[#allocation3 + $0x60] sm:$0xff]
        %v4331 = vld [vmem:[#allocation3 + $0x68] sm:$0xff]
        %v4332 = vld [vmem:[#allocation3 + $0x70] sm:$0xff]
        %v4333 = vld [vmem:[#allocation3 + $0x78] sm:$0xff]
        %v4334 = vld [vmem:[#allocation3 + $0x80] sm:$0xff]
        %v4335 = vld [vmem:[#allocation3 + $0x88] sm:$0xff]
        %v4336 = vld [vmem:[#allocation3 + $0x90] sm:$0xff]
        %v4337 = vld [vmem:[#allocation3 + $0x98] sm:$0xff]
        %v4338 = vld [vmem:[#allocation3 + $0xa0] sm:$0xff]
        %v4339 = vld [vmem:[#allocation3 + $0xa8] sm:$0xff]
        %v4340 = vld [vmem:[#allocation3 + $0xb0] sm:$0xff]
        %v4341 = vld [vmem:[#allocation3 + $0xb8] sm:$0xff]
        %v4342 = vld [vmem:[#allocation3 + $0xc0] sm:$0xff]
        %v4343 = vld [vmem:[#allocation3 + $0xc8] sm:$0xff]
        %v4344 = vld [vmem:[#allocation3 + $0xd0] sm:$0xff]
        %v4345 = vld [vmem:[#allocation3 + $0xd8] sm:$0xff]
        %v4346 = vld [vmem:[#allocation3 + $0xe0] sm:$0xff]
        %v4347 = vld [vmem:[#allocation3 + $0xe8] sm:$0xff]
        %v4348 = vld [vmem:[#allocation3 + $0xf0] sm:$0xff]
        %v4349 = vld [vmem:[#allocation3 + $0xf8] sm:$0xff]
        %v4350 = vld [vmem:[#allocation3 + $0x100] sm:$0xff]
        %v4351 = vld [vmem:[#allocation3 + $0x108] sm:$0xff]
        %v4352 = vld [vmem:[#allocation3 + $0x110] sm:$0xff]
        %v4353 = vld [vmem:[#allocation3 + $0x118] sm:$0xff]
        %v4354 = vld [vmem:[#allocation3 + $0x120] sm:$0xff]
        %v4355 = vld [vmem:[#allocation3 + $0x128] sm:$0xff]
        %v4356 = vld [vmem:[#allocation3 + $0x130] sm:$0xff]
        %v4357 = vld [vmem:[#allocation3 + $0x138] sm:$0xff]
        %v4358 = vld [vmem:[#allocation3 + $0x140] sm:$0xff]
        %v4359 = vld [vmem:[#allocation3 + $0x148] sm:$0xff]
        %v4360 = vld [vmem:[#allocation3 + $0x150] sm:$0xff]
        %v4361 = vld [vmem:[#allocation3 + $0x158] sm:$0xff]
        %v4362 = vld [vmem:[#allocation3 + $0x160] sm:$0xff]
        %v4363 = vld [vmem:[#allocation3 + $0x168] sm:$0xff]
        %v4364 = vld [vmem:[#allocation3 + $0x170] sm:$0xff]
        %v4365 = vld [vmem:[#allocation3 + $0x178] sm:$0xff]
        %v4366 = vld [vmem:[#allocation3 + $0x180] sm:$0xff]
        %v4367 = vld [vmem:[#allocation3 + $0x188] sm:$0xff]
        %v4368 = vld [vmem:[#allocation3 + $0x190] sm:$0xff]
        %v4369 = vld [vmem:[#allocation3 + $0x198] sm:$0xff]
        %v4370 = vld [vmem:[#allocation3 + $0x1a0] sm:$0xff]
        %v4371 = vld [vmem:[#allocation3 + $0x1a8] sm:$0xff]
        %v4372 = vld [vmem:[#allocation3 + $0x1b0] sm:$0xff]
        %v4373 = vld [vmem:[#allocation3 + $0x1b8] sm:$0xff]
        %v4374 = vld [vmem:[#allocation3 + $0x1c0] sm:$0xff]
        %v4375 = vld [vmem:[#allocation3 + $0x1c8] sm:$0xff]
        %v4376 = vld [vmem:[#allocation3 + $0x1d0] sm:$0xff]
        %v4377 = vld [vmem:[#allocation3 + $0x1d8] sm:$0xff]
        %v4378 = vld [vmem:[#allocation3 + $0x1e0] sm:$0xff]
        %v4379 = vld [vmem:[#allocation3 + $0x1e8] sm:$0xff]
        %v4380 = vld [vmem:[#allocation3 + $0x1f0] sm:$0xff]
        %v4381 = vld [vmem:[#allocation3 + $0x1f8] sm:$0xff]
        %v4382 = vld [vmem:[#allocation3 + $0x200] sm:$0xff]
        %v4383 = vld [vmem:[#allocation3 + $0x208] sm:$0xff]
        %v4384 = vld [vmem:[#allocation3 + $0x210] sm:$0xff]
        %v4385 = vld [vmem:[#allocation3 + $0x218] sm:$0xff]
        %v4386 = vld [vmem:[#allocation3 + $0x220] sm:$0xff]
        %v4387 = vld [vmem:[#allocation3 + $0x228] sm:$0xff]
        %v4388 = vld [vmem:[#allocation3 + $0x230] sm:$0xff]
        %v4389 = vld [vmem:[#allocation3 + $0x238] sm:$0xff]
        %v4390 = vld [vmem:[%s10] sm:$0xff]
        %v4391 = vld [vmem:[%s10 + $0x8] sm:$0xff]
        %4393 = vset.pattern.permute.xlu0 0
        %4394 = vperm.xlu0 %4393, %v4390
        %v4395 = vpop.permute.xlu0 %4394
        %4398 = vset.pattern.permute.xlu0 0
        %4399 = vperm.xlu0 %4398, %v4391
        %v4400 = vpop.permute.xlu0 %4399
        %v4403 = vsel %vm1940, %v4314, 0
        %v4406 = vsel %vm1940, %v4317, 0
        %4408 = vmatprep.subr.mxu0 %v4319
        %4409 = vmatpush1.msra.mxu0 %v4318
        %4410 = vmatprep.subr.mxu0 %v4321
        %4411 = vmatpush1.msra.mxu0 %v4320
        %4412 = vmatprep.subr.mxu0 %v4323
        %4413 = vmatpush1.msra.mxu0 %v4322
        %4414 = vmatprep.subr.mxu0 %v4325
        %4415 = vmatpush1.msra.mxu0 %v4324
        %4416 = vmatprep.subr.mxu0 %v4327
        %4417 = vmatpush1.msra.mxu0 %v4326
        %4418 = vmatprep.subr.mxu0 %v4329
        %4419 = vmatpush1.msra.mxu0 %v4328
        %4420 = vmatprep.subr.mxu0 %v4331
        %4421 = vmatpush1.msra.mxu0 %v4330
        %4422 = vmatprep.subr.mxu0 %v4333
        %4423 = vmatpush1.msra.mxu0 %v4332
        %4424 = vmatprep.subr.mxu0 %v4335
        %4425 = vmatpush1.msra.mxu0 %v4334
        %4426 = vmatprep.subr.mxu0 %v4337
        %4427 = vmatpush1.msra.mxu0 %v4336
        %4428 = vmatprep.subr.mxu0 %v4339
        %4429 = vmatpush1.msra.mxu0 %v4338
        %4430 = vmatprep.subr.mxu0 %v4341
        %4431 = vmatpush1.msra.mxu0 %v4340
        %4432 = vmatprep.subr.mxu0 %v4343
        %4433 = vmatpush1.msra.mxu0 %v4342
        %4434 = vmatprep.subr.mxu0 %v4345
        %4435 = vmatpush1.msra.mxu0 %v4344
        %4436 = vmatprep.subr.mxu0 %v4347
        %4437 = vmatpush1.msra.mxu0 %v4346
        %4438 = vmatprep.subr.mxu0 %v4349
        %4439 = vmatpush1.msra.mxu0 %v4348
        %4440 = vmatprep.subr.mxu0 %v4351
        %4441 = vmatpush1.msra.mxu0 %v4350
        %4442 = vmatprep.subr.mxu0 %v4353
        %4443 = vmatpush1.msra.mxu0 %v4352
        %4444 = vmatprep.subr.mxu0 %v4355
        %4445 = vmatpush1.msra.mxu0 %v4354
        %4446 = vmatprep.subr.mxu0 %v4357
        %4447 = vmatpush1.msra.mxu0 %v4356
        %4448 = vmatprep.subr.mxu0 %v4359
        %4449 = vmatpush1.msra.mxu0 %v4358
        %4450 = vmatprep.subr.mxu0 %v4361
        %4451 = vmatpush1.msra.mxu0 %v4360
        %4452 = vmatprep.subr.mxu0 %v4363
        %4453 = vmatpush1.msra.mxu0 %v4362
        %4454 = vmatprep.subr.mxu0 %v4365
        %4455 = vmatpush1.msra.mxu0 %v4364
        %4456 = vmatprep.subr.mxu0 %v4367
        %4457 = vmatpush1.msra.mxu0 %v4366
        %4458 = vmatprep.subr.mxu0 %v4369
        %4459 = vmatpush1.msra.mxu0 %v4368
        %4460 = vmatprep.subr.mxu0 %v4371
        %4461 = vmatpush1.msra.mxu0 %v4370
        %4462 = vmatprep.subr.mxu0 %v4373
        %4463 = vmatpush1.msra.mxu0 %v4372
        %4464 = vmatprep.subr.mxu0 %v4375
        %4465 = vmatpush1.msra.mxu0 %v4374
        %4466 = vmatprep.subr.mxu0 %v4377
        %4467 = vmatpush1.msra.mxu0 %v4376
        %4468 = vmatprep.subr.mxu0 %v4379
        %4469 = vmatpush1.msra.mxu0 %v4378
        %4470 = vmatprep.subr.mxu0 %v4381
        %4471 = vmatpush1.msra.mxu0 %v4380
        %4472 = vmatprep.mubr.f32.mxu0 %v4313
        %4473 = vmatmul.mubr.f32.gmra.mrb[0].mxu0 %v4312
        %v4474 = vpop.f32.mrb[0].mxu0
        %v4475 = vadd.f32 %v4395, %v4474
        %v4476 = vpop.f32.mrb[0].mxu0
        %v4477 = vadd.f32 %v4395, %v4476
        %4478 = vmatprep.mubr.f32.mxu0 %v4316
        %4479 = vmatmul.mubr.f32.gmra.mrb[0].mxu0 %v4315
        %v4480 = vpop.f32.mrb[0].mxu0
        %v4481 = vadd.f32 %v4400, %v4480
        %v4482 = vpop.f32.mrb[0].mxu0
        %v4483 = vadd.f32 %v4400, %v4482
        %4484 = vdwg.mxu0
        %4485 = vmatprep.subr.mxu0 %v4383
        %4486 = vmatpush1.msra.mxu0 %v4382
        %4487 = vmatprep.subr.mxu0 %v4385
        %4488 = vmatpush1.msra.mxu0 %v4384
        %4489 = vmatprep.subr.mxu0 %v4387
        %4490 = vmatpush1.msra.mxu0 %v4386
        %4491 = vmatprep.subr.mxu0 %v4389
        %4492 = vmatpush1.msra.mxu0 %v4388
        %4493 = vmatprep.subr.mxu0 0.0
        %4494 = vmatpush1.msra.mxu0 0.0
        %4495 = vmatprep.subr.mxu0 0.0
        %4496 = vmatpush1.msra.mxu0 0.0
        %4497 = vmatprep.subr.mxu0 0.0
        %4498 = vmatpush1.msra.mxu0 0.0
        %4499 = vmatprep.subr.mxu0 0.0
        %4500 = vmatpush1.msra.mxu0 0.0
        %4501 = vmatprep.subr.mxu0 0.0
        %4502 = vmatpush1.msra.mxu0 0.0
        %4503 = vmatprep.subr.mxu0 0.0
        %4504 = vmatpush1.msra.mxu0 0.0
        %4505 = vmatprep.subr.mxu0 0.0
        %4506 = vmatpush1.msra.mxu0 0.0
        %4507 = vmatprep.subr.mxu0 0.0
        %4508 = vmatpush1.msra.mxu0 0.0
        %4509 = vmatprep.subr.mxu0 0.0
        %4510 = vmatpush1.msra.mxu0 0.0
        %4511 = vmatprep.subr.mxu0 0.0
        %4512 = vmatpush1.msra.mxu0 0.0
        %4513 = vmatprep.subr.mxu0 0.0
        %4514 = vmatpush1.msra.mxu0 0.0
        %4515 = vmatprep.subr.mxu0 0.0
        %4516 = vmatpush1.msra.mxu0 0.0
        %4517 = vmatprep.subr.mxu0 0.0
        %4518 = vmatpush1.msra.mxu0 0.0
        %4519 = vmatprep.subr.mxu0 0.0
        %4520 = vmatpush1.msra.mxu0 0.0
        %4521 = vmatprep.subr.mxu0 0.0
        %4522 = vmatpush1.msra.mxu0 0.0
        %4523 = vmatprep.subr.mxu0 0.0
        %4524 = vmatpush1.msra.mxu0 0.0
        %4525 = vmatprep.subr.mxu0 0.0
        %4526 = vmatpush1.msra.mxu0 0.0
        %4527 = vmatprep.subr.mxu0 0.0
        %4528 = vmatpush1.msra.mxu0 0.0
        %4529 = vmatprep.subr.mxu0 0.0
        %4530 = vmatpush1.msra.mxu0 0.0
        %4531 = vmatprep.subr.mxu0 0.0
        %4532 = vmatpush1.msra.mxu0 0.0
        %4533 = vmatprep.subr.mxu0 0.0
        %4534 = vmatpush1.msra.mxu0 0.0
        %4535 = vmatprep.subr.mxu0 0.0
        %4536 = vmatpush1.msra.mxu0 0.0
        %4537 = vmatprep.subr.mxu0 0.0
        %4538 = vmatpush1.msra.mxu0 0.0
        %4539 = vmatprep.subr.mxu0 0.0
        %4540 = vmatpush1.msra.mxu0 0.0
        %4541 = vmatprep.subr.mxu0 0.0
        %4542 = vmatpush1.msra.mxu0 0.0
        %4543 = vmatprep.subr.mxu0 0.0
        %4544 = vmatpush1.msra.mxu0 0.0
        %4545 = vmatprep.subr.mxu0 0.0
        %4546 = vmatpush1.msra.mxu0 0.0
        %4547 = vmatprep.subr.mxu0 0.0
        %4548 = vmatpush1.msra.mxu0 0.0
        %4549 = vmatprep.mubr.f32.mxu0 0.0
        %4550 = vmatmul.mubr.f32.gmra.mrb[0].mxu0 %v4403
        %v4551 = vpop.f32.mrb[0].mxu0
        %v4552 = vadd.f32 %v4475, %v4551
        %v4553 = vpop.f32.mrb[0].mxu0
        %v4554 = vadd.f32 %v4477, %v4553
        %4555 = vmatprep.mubr.f32.mxu0 0.0
        %4556 = vmatmul.mubr.f32.gmra.mrb[0].mxu0 %v4406
        %v4557 = vpop.f32.mrb[0].mxu0
        %v4558 = vadd.f32 %v4481, %v4557
        %v4559 = vpop.f32.mrb[0].mxu0
        %v4560 = vadd.f32 %v4483, %v4559
        %4561 = vdwg.mxu0
        %v4562 = vadd.f32 %v4552, 1.0
        %v4563 = vadd.f32 %v4554, 1.0
        %v4566 = vcombine.low %v4562, %v4563
        %v4568 = vmul.f32 %v2143, %v4566
        %v4571 = vcombine.low %v4558, %v4560
        %v4573 = vadd.f32 %v4568, %v4571
        %v4574 = vld [vmem:[%s15] sm:$0xff]
        %v4576 = vcombine.high %v4573, %v4573
        %vm4577 = vcmask 31744
        %v4579 = vsel %vm4577, %v4574, 0
        %v4581 = vsel %vm2104, %v4573, 0
        %v4583 = vsel %vm2104, %v4576, 0
        %4585 = vmatprep.subr.mxu0 %v4583
        %4586 = vmatpush1.msra.mxu0 %v4581
        %4587 = vmatprep.subr.mxu0 0.0
        %4588 = vmatpush1.msra.mxu0 0.0
        %4589 = vmatprep.subr.mxu0 0.0
        %4590 = vmatpush1.msra.mxu0 0.0
        %4591 = vmatprep.subr.mxu0 0.0
        %4592 = vmatpush1.msra.mxu0 0.0
        %4593 = vmatprep.subr.mxu0 0.0
        %4594 = vmatpush1.msra.mxu0 0.0
        %4595 = vmatprep.subr.mxu0 0.0
        %4596 = vmatpush1.msra.mxu0 0.0
        %4597 = vmatprep.subr.mxu0 0.0
        %4598 = vmatpush1.msra.mxu0 0.0
        %4599 = vmatprep.subr.mxu0 0.0
        %4600 = vmatpush1.msra.mxu0 0.0
        %4601 = vmatprep.subr.mxu0 0.0
        %4602 = vmatpush1.msra.mxu0 0.0
        %4603 = vmatprep.subr.mxu0 0.0
        %4604 = vmatpush1.msra.mxu0 0.0
        %4605 = vmatprep.subr.mxu0 0.0
        %4606 = vmatpush1.msra.mxu0 0.0
        %4607 = vmatprep.subr.mxu0 0.0
        %4608 = vmatpush1.msra.mxu0 0.0
        %4609 = vmatprep.subr.mxu0 0.0
        %4610 = vmatpush1.msra.mxu0 0.0
        %4611 = vmatprep.subr.mxu0 0.0
        %4612 = vmatpush1.msra.mxu0 0.0
        %4613 = vmatprep.subr.mxu0 0.0
        %4614 = vmatpush1.msra.mxu0 0.0
        %4615 = vmatprep.subr.mxu0 0.0
        %4616 = vmatpush1.msra.mxu0 0.0
        %4617 = vmatprep.subr.mxu0 0.0
        %4618 = vmatpush1.msra.mxu0 0.0
        %4619 = vmatprep.subr.mxu0 0.0
        %4620 = vmatpush1.msra.mxu0 0.0
        %4621 = vmatprep.subr.mxu0 0.0
        %4622 = vmatpush1.msra.mxu0 0.0
        %4623 = vmatprep.subr.mxu0 0.0
        %4624 = vmatpush1.msra.mxu0 0.0
        %4625 = vmatprep.subr.mxu0 0.0
        %4626 = vmatpush1.msra.mxu0 0.0
        %4627 = vmatprep.subr.mxu0 0.0
        %4628 = vmatpush1.msra.mxu0 0.0
        %4629 = vmatprep.subr.mxu0 0.0
        %4630 = vmatpush1.msra.mxu0 0.0
        %4631 = vmatprep.subr.mxu0 0.0
        %4632 = vmatpush1.msra.mxu0 0.0
        %4633 = vmatprep.subr.mxu0 0.0
        %4634 = vmatpush1.msra.mxu0 0.0
        %4635 = vmatprep.subr.mxu0 0.0
        %4636 = vmatpush1.msra.mxu0 0.0
        %4637 = vmatprep.subr.mxu0 0.0
        %4638 = vmatpush1.msra.mxu0 0.0
        %4639 = vmatprep.subr.mxu0 0.0
        %4640 = vmatpush1.msra.mxu0 0.0
        %4641 = vmatprep.subr.mxu0 0.0
        %4642 = vmatpush1.msra.mxu0 0.0
        %4643 = vmatprep.subr.mxu0 0.0
        %4644 = vmatpush1.msra.mxu0 0.0
        %4645 = vmatprep.subr.mxu0 0.0
        %4646 = vmatpush1.msra.mxu0 0.0
        %4647 = vmatprep.subr.mxu0 0.0
        %4648 = vmatpush1.msra.mxu0 0.0
        %4649 = vmatprep.mubr.f32.mxu0 0.0
        %4650 = vmatmul.mubr.f32.gmra.mrb[0].mxu0 %v4579
        %v4651 = vpop.f32.mrb[0].mxu0
        %v4652 = vadd.f32 %v3636, %v4651
        %v4653 = vpop.f32.mrb[0].mxu0
        %v4654 = vadd.f32 %v3638, %v4653
        %4655 = vdwg.mxu0
        %4656 = vst [vmem:[%s529] sm:$0xff] %v4652
        %4657 = vst [vmem:[%s529 + $0x8] sm:$0xff] %v4654
        %s4658 = sand.u32 %s384, 1
        %s4659 = scalar_lea.sflag [#allocation5], %s4658
        %s4660 = sand.u32 %s384, 1
        %s4661 = smul.addr %s4660, 16
        %s4662 = scalar_lea.vmem [#allocation4], %s4661
        // Predicated region
        $region85: #{tpu_custom_call.1} parent=83 // pred_check
          %p4663 = pneg %p394
        $region86: #{tpu_custom_call.1} parent=83 // pred_check_branch
          %4665 = sbr.rel (%p4663) target = $region88
        $region87: #{tpu_custom_call.1} parent=83 // pred_region
          %s4667 = ssub.s32 256, 256
          %4668 = vsyncadd %s4659, %s4667
          %s4669 = smul.addr %s30, 2
          %s4670 = smul.addr %s4669, 128
          %s4671 = scalar_lea.hbm %s16, %s4670
          %s4673 = sshll.u32 %s4662, 4
          %s4674 = int_to_ptr.vmem [resolvable:$true] %s4673
          %4676 = dma.vmem_to_hbm [thread:$0]  %s4674, 256, %s4671, %s4659
        $region88: #{tpu_custom_call.1} parent=83 // pred_fallthru
          _
      $region84: #{tpu_custom_call.1} parent=5 // pred_fallthru
        _
      %p4677 = scmp.le.s32.totalorder 2, %s25
      // Predicated region
      $region89: #{tpu_custom_call.1} parent=5 // pred_check
        %p4678 = pneg %p4677
      $region90: #{tpu_custom_call.1} parent=5 // pred_check_branch
        %4680 = sbr.rel (%p4678) target = $region92
      $region91: #{tpu_custom_call.1} parent=5 // pred_region
        %s4681 = ssub.s32 %s25, 2
        // Predicated region
        $region93: #{tpu_custom_call.1} parent=91 // pred_check
          %p4682 = pneg %p400
        $region94: #{tpu_custom_call.1} parent=91 // pred_check_branch
          %4684 = sbr.rel (%p4682) target = $region96
        $region95: #{tpu_custom_call.1} parent=91 // pred_region
          %s4685 = sand.u32 %s385, 1
          %s4686 = scalar_lea.sflag [#allocation5], %s4685
          %s4687 = sand.u32 %s385, 1
          %s4688 = smul.addr %s4687, 16
          %s4689 = scalar_lea.vmem [#allocation4], %s4688
          %4690 = dma.done %s4686, 256
        $region96: #{tpu_custom_call.1} parent=91 // pred_fallthru
          _
      $region92: #{tpu_custom_call.1} parent=5 // pred_fallthru
        _
    $region6: #{tpu_custom_call.1} parent=1 // loop_footer
      %s29 = sadd.s32 1, %s25
    $region7: #{tpu_custom_call.1} parent=1 // loop_footer_branch
      %24 = sbr.rel target = $region3
    $region8: #{tpu_custom_call.1} parent=1 // loop_exit
      _
    %4691 = vsyncpa [#allocation5], 1
    %s4692 = scalar_lea.sflag [#allocation5], 1
    %4693 = vsyncpa %s4692, 1

</llo_original>
